<compile_context>
chip_gen: v7x
topology: tpu7x:2x2x1
jax: 0.10.0
libtpu: 0.0.40
codegen_flags: <defaults>
</compile_context>

<pallas_src>
import functools

import jax
import jax.numpy as jnp
from jax.experimental import pallas as pl
from jax.experimental.pallas import tpu as pltpu


def he_init_scale(factor, gain=2.0 ** 0.5):
    return gain * factor ** (-0.5)


def _eq_conv2d_kernel(x_ref, w_ref, b_ref, o_ref, *, ksize, inv_scale):
    # x_ref: (1, Hp, Wp, Cin)  padded input image (NHWC, one batch element)
    # w_ref: (K, K, Cin, Cout) conv weights (HWIO), resident across the grid
    # b_ref: (1, Cout)         bias, resident across the grid
    # o_ref: (1, Ho, Wo, Cout) output image
    _, ho, wo, cout = o_ref.shape
    cin = x_ref.shape[3]

    x = x_ref[0]                                    # (Hp, Wp, Cin)
    acc = jnp.zeros((ho * wo, cout), dtype=jnp.float32)
    for kh in range(ksize):                         # statically unrolled taps
        for kw in range(ksize):
            patch = x[kh:kh + ho, kw:kw + wo, :]    # (Ho, Wo, Cin) shifted window
            acc = acc + jnp.dot(
                patch.reshape(ho * wo, cin),        # (Ho*Wo, Cin)
                w_ref[kh, kw],                      # (Cin, Cout)
                preferred_element_type=jnp.float32,
            )
    out = acc * inv_scale + b_ref[...]              # equalized-lr scale + bias
    o_ref[...] = out.reshape(1, ho, wo, cout).astype(o_ref.dtype)


def equalized_conv2d(x, weight, bias, *, gain=2.0 ** 0.5, kernel_size=3,
                     padding=1):
    """x: (N, Cin, H, W); weight: (Cout, Cin, K, K) OIHW; bias: (Cout,)."""
    n, cin, h, w = x.shape
    cout = weight.shape[0]
    k = kernel_size
    he_scaler = he_init_scale(cin * k * k, gain)
    inv_scale = float(1.0 / he_scaler)

    # TODO(synk): stride > 1 and non-'zeros' padding modes are not implemented
    # (module defaults are stride=1, padding_mode='zeros').
    # TODO(synk): for very large spatial sizes, tile H with halo blocks
    # (pl.Element) so one image's padded tile need not fit VMEM; unnecessary here.

    # Wrapper-side layout plumbing: NCHW -> NHWC, spatial zero-pad, OIHW -> HWIO.
    x_nhwc = jnp.transpose(x, (0, 2, 3, 1))
    x_pad = jnp.pad(
        x_nhwc, ((0, 0), (padding, padding), (padding, padding), (0, 0)))
    hp, wp = h + 2 * padding, w + 2 * padding
    ho, wo = hp - k + 1, wp - k + 1
    w_hwio = jnp.transpose(weight, (2, 3, 1, 0))
    b2 = bias.reshape(1, cout)

    kernel = functools.partial(_eq_conv2d_kernel, ksize=k, inv_scale=inv_scale)

    out_nhwc = pl.pallas_call(
        kernel,
        out_shape=jax.ShapeDtypeStruct((n, ho, wo, cout), x.dtype),
        grid=(n,),
        in_specs=[
            pl.BlockSpec((1, hp, wp, cin), lambda i: (i, 0, 0, 0)),   # one padded image
            pl.BlockSpec((k, k, cin, cout), lambda i: (0, 0, 0, 0)),  # weights (resident)
            pl.BlockSpec((1, cout), lambda i: (0, 0)),                # bias (resident)
        ],
        out_specs=pl.BlockSpec((1, ho, wo, cout), lambda i: (i, 0, 0, 0)),
        compiler_params=pltpu.CompilerParams(
            dimension_semantics=("parallel",),   # batch axis -> megacore / 2 TCs
            vmem_limit_bytes=48 << 20,           # above v5e/v6e defaults, fits v7x 64MiB
        ),
    )(x_pad, w_hwio, b2)

    # Back to the module's NCHW layout.
    return jnp.transpose(out_nhwc, (0, 3, 1, 2))


if __name__ == "__main__":
    key = jax.random.PRNGKey(0)
    k_x, k_w, k_b = jax.random.split(key, 3)

    N, CIN, COUT, H, W = 2, 4, 4, 16, 16
    GAIN = 2.0 ** 0.5

    x = jax.random.normal(k_x, (N, CIN, H, W), dtype=jnp.float32)
    weight = jax.random.normal(k_w, (COUT, CIN, 3, 3), dtype=jnp.float32)
    # Module __init__ zero-initializes the bias; use nonzero values so the
    # bias-add path is actually exercised.
    bias = jax.random.normal(k_b, (COUT,), dtype=jnp.float32)

    out = equalized_conv2d(x, weight, bias, gain=GAIN)
    out = jax.block_until_ready(out)

    # Pure-JAX reference of the PyTorch forward.
    he_scaler = he_init_scale(CIN * 3 * 3, GAIN)
    ref = jax.lax.conv_general_dilated(
        x / he_scaler, weight, window_strides=(1, 1),
        padding=((1, 1), (1, 1)),
        dimension_numbers=("NCHW", "OIHW", "NCHW"),
        precision=jax.lax.Precision.HIGHEST,
    ) + bias.reshape(1, COUT, 1, 1)

    assert out.shape == (N, COUT, H, W)
    assert jnp.allclose(out, ref, atol=1e-3, rtol=1e-3), "mismatch vs reference"
    print("KERNEL_OK")
</pallas_src>

<mosaic_0001>
module attributes {stable_mosaic.version = 11 : i64} {
  func.func @_eq_conv2d_kernel(%arg0: i32, %arg1: memref<1x18x18x4xf32, #tpu.memory_space<vmem>>, %arg2: memref<3x3x4x4xf32, #tpu.memory_space<vmem>>, %arg3: memref<1x4xf32, #tpu.memory_space<vmem>>, %arg4: memref<1x16x16x4xf32, #tpu.memory_space<vmem>>) attributes {dimension_semantics = [#tpu.dimension_semantics<parallel>], iteration_bounds = array<i64: 2>, scalar_prefetch = 0 : i64, scratch_operands = 0 : i64, tpu.core_type = #tpu.core_type<tc>, window_params = [{transform_indices = @transform_0, window_bounds = array<i64: 1, 18, 18, 4>}, {pipeline_mode = #tpu.pipeline_mode<synchronous>, transform_indices = @transform_1, window_bounds = array<i64: 3, 3, 4, 4>}, {pipeline_mode = #tpu.pipeline_mode<synchronous>, transform_indices = @transform_2, window_bounds = array<i64: 1, 4>}, {transform_indices = @transform_3, window_bounds = array<i64: 1, 16, 16, 4>}]} {
    %c0 = arith.constant 0 : index
    %c0_0 = arith.constant 0 : index
    %c0_1 = arith.constant 0 : index
    %c0_2 = arith.constant 0 : index
    %0 = vector.load %arg1[%c0, %c0_0, %c0_1, %c0_2] : memref<1x18x18x4xf32, #tpu.memory_space<vmem>>, vector<1x18x18x4xf32>
    %1 = vector.shape_cast %0 : vector<1x18x18x4xf32> to vector<18x18x4xf32>
    %cst = arith.constant 0.000000e+00 : f32
    %2 = vector.broadcast %cst : f32 to vector<256x4xf32>
    %3 = vector.extract_strided_slice %1 {offsets = [0, 0, 0], sizes = [16, 16, 4], strides = [1, 1, 1]} : vector<18x18x4xf32> to vector<16x16x4xf32>
    %4 = vector.shape_cast %3 : vector<16x16x4xf32> to vector<256x4xf32>
    %c0_3 = arith.constant 0 : index
    %c0_4 = arith.constant 0 : index
    %c0_5 = arith.constant 0 : index
    %c0_6 = arith.constant 0 : index
    %5 = vector.load %arg2[%c0_3, %c0_4, %c0_5, %c0_6] : memref<3x3x4x4xf32, #tpu.memory_space<vmem>>, vector<1x1x4x4xf32>
    %6 = vector.shape_cast %5 : vector<1x1x4x4xf32> to vector<4x4xf32>
    %cst_7 = arith.constant dense<0.000000e+00> : vector<256x4xf32>
    %7 = tpu.matmul %4, %6, %cst_7 {dimension_numbers = #tpu.dot_dimension_numbers<[1], [0], [0], [1], [0, 0, 1, 1], [], []>} : vector<256x4xf32>, vector<4x4xf32>, vector<256x4xf32> -> vector<256x4xf32>
    %8 = arith.addf %2, %7 : vector<256x4xf32>
    %9 = vector.extract_strided_slice %1 {offsets = [0, 1, 0], sizes = [16, 16, 4], strides = [1, 1, 1]} : vector<18x18x4xf32> to vector<16x16x4xf32>
    %10 = vector.shape_cast %9 : vector<16x16x4xf32> to vector<256x4xf32>
    %c0_8 = arith.constant 0 : index
    %c1 = arith.constant 1 : index
    %c0_9 = arith.constant 0 : index
    %c0_10 = arith.constant 0 : index
    %11 = vector.load %arg2[%c0_8, %c1, %c0_9, %c0_10] : memref<3x3x4x4xf32, #tpu.memory_space<vmem>>, vector<1x1x4x4xf32>
    %12 = vector.shape_cast %11 : vector<1x1x4x4xf32> to vector<4x4xf32>
    %cst_11 = arith.constant dense<0.000000e+00> : vector<256x4xf32>
    %13 = tpu.matmul %10, %12, %cst_11 {dimension_numbers = #tpu.dot_dimension_numbers<[1], [0], [0], [1], [0, 0, 1, 1], [], []>} : vector<256x4xf32>, vector<4x4xf32>, vector<256x4xf32> -> vector<256x4xf32>
    %14 = arith.addf %8, %13 : vector<256x4xf32>
    %15 = vector.extract_strided_slice %1 {offsets = [0, 2, 0], sizes = [16, 16, 4], strides = [1, 1, 1]} : vector<18x18x4xf32> to vector<16x16x4xf32>
    %16 = vector.shape_cast %15 : vector<16x16x4xf32> to vector<256x4xf32>
    %c0_12 = arith.constant 0 : index
    %c2 = arith.constant 2 : index
    %c0_13 = arith.constant 0 : index
    %c0_14 = arith.constant 0 : index
    %17 = vector.load %arg2[%c0_12, %c2, %c0_13, %c0_14] : memref<3x3x4x4xf32, #tpu.memory_space<vmem>>, vector<1x1x4x4xf32>
    %18 = vector.shape_cast %17 : vector<1x1x4x4xf32> to vector<4x4xf32>
    %cst_15 = arith.constant dense<0.000000e+00> : vector<256x4xf32>
    %19 = tpu.matmul %16, %18, %cst_15 {dimension_numbers = #tpu.dot_dimension_numbers<[1], [0], [0], [1], [0, 0, 1, 1], [], []>} : vector<256x4xf32>, vector<4x4xf32>, vector<256x4xf32> -> vector<256x4xf32>
    %20 = arith.addf %14, %19 : vector<256x4xf32>
    %21 = vector.extract_strided_slice %1 {offsets = [1, 0, 0], sizes = [16, 16, 4], strides = [1, 1, 1]} : vector<18x18x4xf32> to vector<16x16x4xf32>
    %22 = vector.shape_cast %21 : vector<16x16x4xf32> to vector<256x4xf32>
    %c1_16 = arith.constant 1 : index
    %c0_17 = arith.constant 0 : index
    %c0_18 = arith.constant 0 : index
    %c0_19 = arith.constant 0 : index
    %23 = vector.load %arg2[%c1_16, %c0_17, %c0_18, %c0_19] : memref<3x3x4x4xf32, #tpu.memory_space<vmem>>, vector<1x1x4x4xf32>
    %24 = vector.shape_cast %23 : vector<1x1x4x4xf32> to vector<4x4xf32>
    %cst_20 = arith.constant dense<0.000000e+00> : vector<256x4xf32>
    %25 = tpu.matmul %22, %24, %cst_20 {dimension_numbers = #tpu.dot_dimension_numbers<[1], [0], [0], [1], [0, 0, 1, 1], [], []>} : vector<256x4xf32>, vector<4x4xf32>, vector<256x4xf32> -> vector<256x4xf32>
    %26 = arith.addf %20, %25 : vector<256x4xf32>
    %27 = vector.extract_strided_slice %1 {offsets = [1, 1, 0], sizes = [16, 16, 4], strides = [1, 1, 1]} : vector<18x18x4xf32> to vector<16x16x4xf32>
    %28 = vector.shape_cast %27 : vector<16x16x4xf32> to vector<256x4xf32>
    %c1_21 = arith.constant 1 : index
    %c1_22 = arith.constant 1 : index
    %c0_23 = arith.constant 0 : index
    %c0_24 = arith.constant 0 : index
    %29 = vector.load %arg2[%c1_21, %c1_22, %c0_23, %c0_24] : memref<3x3x4x4xf32, #tpu.memory_space<vmem>>, vector<1x1x4x4xf32>
    %30 = vector.shape_cast %29 : vector<1x1x4x4xf32> to vector<4x4xf32>
    %cst_25 = arith.constant dense<0.000000e+00> : vector<256x4xf32>
    %31 = tpu.matmul %28, %30, %cst_25 {dimension_numbers = #tpu.dot_dimension_numbers<[1], [0], [0], [1], [0, 0, 1, 1], [], []>} : vector<256x4xf32>, vector<4x4xf32>, vector<256x4xf32> -> vector<256x4xf32>
    %32 = arith.addf %26, %31 : vector<256x4xf32>
    %33 = vector.extract_strided_slice %1 {offsets = [1, 2, 0], sizes = [16, 16, 4], strides = [1, 1, 1]} : vector<18x18x4xf32> to vector<16x16x4xf32>
    %34 = vector.shape_cast %33 : vector<16x16x4xf32> to vector<256x4xf32>
    %c1_26 = arith.constant 1 : index
    %c2_27 = arith.constant 2 : index
    %c0_28 = arith.constant 0 : index
    %c0_29 = arith.constant 0 : index
    %35 = vector.load %arg2[%c1_26, %c2_27, %c0_28, %c0_29] : memref<3x3x4x4xf32, #tpu.memory_space<vmem>>, vector<1x1x4x4xf32>
    %36 = vector.shape_cast %35 : vector<1x1x4x4xf32> to vector<4x4xf32>
    %cst_30 = arith.constant dense<0.000000e+00> : vector<256x4xf32>
    %37 = tpu.matmul %34, %36, %cst_30 {dimension_numbers = #tpu.dot_dimension_numbers<[1], [0], [0], [1], [0, 0, 1, 1], [], []>} : vector<256x4xf32>, vector<4x4xf32>, vector<256x4xf32> -> vector<256x4xf32>
    %38 = arith.addf %32, %37 : vector<256x4xf32>
    %39 = vector.extract_strided_slice %1 {offsets = [2, 0, 0], sizes = [16, 16, 4], strides = [1, 1, 1]} : vector<18x18x4xf32> to vector<16x16x4xf32>
    %40 = vector.shape_cast %39 : vector<16x16x4xf32> to vector<256x4xf32>
    %c2_31 = arith.constant 2 : index
    %c0_32 = arith.constant 0 : index
    %c0_33 = arith.constant 0 : index
    %c0_34 = arith.constant 0 : index
    %41 = vector.load %arg2[%c2_31, %c0_32, %c0_33, %c0_34] : memref<3x3x4x4xf32, #tpu.memory_space<vmem>>, vector<1x1x4x4xf32>
    %42 = vector.shape_cast %41 : vector<1x1x4x4xf32> to vector<4x4xf32>
    %cst_35 = arith.constant dense<0.000000e+00> : vector<256x4xf32>
    %43 = tpu.matmul %40, %42, %cst_35 {dimension_numbers = #tpu.dot_dimension_numbers<[1], [0], [0], [1], [0, 0, 1, 1], [], []>} : vector<256x4xf32>, vector<4x4xf32>, vector<256x4xf32> -> vector<256x4xf32>
    %44 = arith.addf %38, %43 : vector<256x4xf32>
    %45 = vector.extract_strided_slice %1 {offsets = [2, 1, 0], sizes = [16, 16, 4], strides = [1, 1, 1]} : vector<18x18x4xf32> to vector<16x16x4xf32>
    %46 = vector.shape_cast %45 : vector<16x16x4xf32> to vector<256x4xf32>
    %c2_36 = arith.constant 2 : index
    %c1_37 = arith.constant 1 : index
    %c0_38 = arith.constant 0 : index
    %c0_39 = arith.constant 0 : index
    %47 = vector.load %arg2[%c2_36, %c1_37, %c0_38, %c0_39] : memref<3x3x4x4xf32, #tpu.memory_space<vmem>>, vector<1x1x4x4xf32>
    %48 = vector.shape_cast %47 : vector<1x1x4x4xf32> to vector<4x4xf32>
    %cst_40 = arith.constant dense<0.000000e+00> : vector<256x4xf32>
    %49 = tpu.matmul %46, %48, %cst_40 {dimension_numbers = #tpu.dot_dimension_numbers<[1], [0], [0], [1], [0, 0, 1, 1], [], []>} : vector<256x4xf32>, vector<4x4xf32>, vector<256x4xf32> -> vector<256x4xf32>
    %50 = arith.addf %44, %49 : vector<256x4xf32>
    %51 = vector.extract_strided_slice %1 {offsets = [2, 2, 0], sizes = [16, 16, 4], strides = [1, 1, 1]} : vector<18x18x4xf32> to vector<16x16x4xf32>
    %52 = vector.shape_cast %51 : vector<16x16x4xf32> to vector<256x4xf32>
    %c2_41 = arith.constant 2 : index
    %c2_42 = arith.constant 2 : index
    %c0_43 = arith.constant 0 : index
    %c0_44 = arith.constant 0 : index
    %53 = vector.load %arg2[%c2_41, %c2_42, %c0_43, %c0_44] : memref<3x3x4x4xf32, #tpu.memory_space<vmem>>, vector<1x1x4x4xf32>
    %54 = vector.shape_cast %53 : vector<1x1x4x4xf32> to vector<4x4xf32>
    %cst_45 = arith.constant dense<0.000000e+00> : vector<256x4xf32>
    %55 = tpu.matmul %52, %54, %cst_45 {dimension_numbers = #tpu.dot_dimension_numbers<[1], [0], [0], [1], [0, 0, 1, 1], [], []>} : vector<256x4xf32>, vector<4x4xf32>, vector<256x4xf32> -> vector<256x4xf32>
    %56 = arith.addf %50, %55 : vector<256x4xf32>
    %cst_46 = arith.constant 4.2426405 : f32
    %57 = vector.broadcast %cst_46 : f32 to vector<256x4xf32>
    %58 = arith.mulf %56, %57 : vector<256x4xf32>
    %c0_47 = arith.constant 0 : index
    %c0_48 = arith.constant 0 : index
    %59 = vector.load %arg3[%c0_47, %c0_48] : memref<1x4xf32, #tpu.memory_space<vmem>>, vector<1x4xf32>
    %60 = vector.broadcast %59 : vector<1x4xf32> to vector<256x4xf32>
    %61 = arith.addf %58, %60 : vector<256x4xf32>
    %62 = vector.shape_cast %61 : vector<256x4xf32> to vector<1x16x16x4xf32>
    %c0_49 = arith.constant 0 : index
    %c0_50 = arith.constant 0 : index
    %c0_51 = arith.constant 0 : index
    %c0_52 = arith.constant 0 : index
    %63 = vector.load %arg4[%c0_49, %c0_50, %c0_51, %c0_52] : memref<1x16x16x4xf32, #tpu.memory_space<vmem>>, vector<1x16x16x4xf32>
    tpu.vector_store %arg4[%c0_49, %c0_50, %c0_51, %c0_52], %62 {strides = array<i32>} : memref<1x16x16x4xf32, #tpu.memory_space<vmem>>, vector<1x16x16x4xf32>,
    return
  }
  func.func @transform_0(%arg0: i32) -> (i32, i32, i32, i32) {
    %c0_i32 = arith.constant 0 : i32
    %c0_i32_0 = arith.constant 0 : i32
    %c0_i32_1 = arith.constant 0 : i32
    %c0_i32_2 = arith.constant 0 : i32
    return %arg0, %c0_i32, %c0_i32_0, %c0_i32_1 : i32, i32, i32, i32
  }
  func.func @transform_1(%arg0: i32) -> (i32, i32, i32, i32) {
    %c0_i32 = arith.constant 0 : i32
    %c0_i32_0 = arith.constant 0 : i32
    %c0_i32_1 = arith.constant 0 : i32
    %c0_i32_2 = arith.constant 0 : i32
    %c0_i32_3 = arith.constant 0 : i32
    return %c0_i32, %c0_i32_0, %c0_i32_1, %c0_i32_2 : i32, i32, i32, i32
  }
  func.func @transform_2(%arg0: i32) -> (i32, i32) {
    %c0_i32 = arith.constant 0 : i32
    %c0_i32_0 = arith.constant 0 : i32
    %c0_i32_1 = arith.constant 0 : i32
    return %c0_i32, %c0_i32_0 : i32, i32
  }
  func.func @transform_3(%arg0: i32) -> (i32, i32, i32, i32) {
    %c0_i32 = arith.constant 0 : i32
    %c0_i32_0 = arith.constant 0 : i32
    %c0_i32_1 = arith.constant 0 : i32
    %c0_i32_2 = arith.constant 0 : i32
    return %arg0, %c0_i32, %c0_i32_0, %c0_i32_1 : i32, i32, i32, i32
  }
}

</mosaic_0001>

<llo_original>
// kernel: tpu_custom_call.1
$region0: #{tpu_custom_call.1}
  #allocation0 [shape = 'u32[]', space=smem, size = 0x4, offset = 0x4, fixed_abs, tag = 'smem constant byte address 0x4 - core index']
  #allocation1 [shape = 'u32[144,128]{1,0:T(1,128)}', space=vmem, size = 0x12000, scoped, tag = 'internal scratch']
  %s0 = inlined_call_operand.vmem [shape: f32[2,18,18,4], index: 0, kind: input, shape index: {}]
  %s1 = inlined_call_operand.vmem [shape: f32[3,3,4,4], index: 1, kind: input, shape index: {}]
  %s2 = inlined_call_operand.vmem [shape: f32[1,4], index: 2, kind: input, shape index: {}]
  %s3 = inlined_call_operand.vmem [shape: f32[2,16,16,4], index: 3, kind: output, shape index: {}]
  %s4 = sld [smem:[#allocation0]]
  $region45: #{tpu_custom_call.1} parent=0
    _
  %s6 = ssub.s32 1, %s4
  %s7 = scalar_select 0, %s6, %s4
  loop: start=0, step=1, limit=4
  $region2: #{tpu_custom_call.1} parent=0 // loop_pre_header
    _
  $region3: #{tpu_custom_call.1} parent=0 // loop_header
    %s9 = sphi 0, %s13
    %p10 = scmp.ge.s32.totalorder %s9, 4
    %s19 = sphi 0, %s21
    %s22 = sphi 0, %s19
    %s23 = sphi 0, %s22
    %s39 = sphi 0, %s23
    %s43 = sphi 0, %s43
    %s45 = sphi 0, %s43
    %s46 = sphi 0, %s45
    %s60 = sphi 0, %s46
    %s64 = sphi 0, %s64
    %s66 = sphi 0, %s64
    %s67 = sphi 0, %s66
    %s81 = sphi 0, %s67
    %s87 = sphi 0, %s89
    %s90 = sphi 0, %s87
    %s91 = sphi 0, %s90
    %s107 = sphi 0, %s91
  $region4: #{tpu_custom_call.1} parent=0 // loop_header_branch
    %12 = sbr.rel (%p10) target = $region8
  $region5: #{tpu_custom_call.1} parent=0 // loop_body
    %s14 = ssub.s32 %s9, 1
    %s15 = ssub.s32 %s9, 2
    %s16 = sadd.s32 %s9, 1
    %s17 = ssub.s32 %s9, %s16
    %p18 = scmp.eq.s32.totalorder %s17, 0
    %s20 = sadd.s32 %s19, 1
    %s21 = scalar_select %p18, %s19, %s20
    %p24 = pneg %p18
    %p25 = scmp.eq.s32.totalorder %s9, 1
    %p26 = por %p24, %p25
    %p27 = scmp.ne.s32.totalorder %s19, %s22
    %p28 = scmp.eq.s32.totalorder %s9, 0
    %p29 = por %p27, %p28
    %p30 = scmp.ne.s32.totalorder %s19, %s22
    %p31 = scmp.eq.s32.totalorder %s14, 1
    %p32 = por %p30, %p31
    %p33 = scmp.ne.s32.totalorder %s22, %s23
    %p34 = scmp.eq.s32.totalorder %s14, 0
    %p35 = por %p33, %p34
    %p36 = scmp.ne.s32.totalorder %s22, %s23
    %p37 = scmp.eq.s32.totalorder %s15, 1
    %p38 = por %p36, %p37
    %p40 = scmp.ne.s32.totalorder %s23, %s39
    %p41 = scmp.eq.s32.totalorder %s15, 0
    %p42 = por %p40, %p41
    %s44 = sadd.s32 %s43, 1
    %p47 = scmp.eq.s32.totalorder %s9, 1
    %p48 = scmp.ne.s32.totalorder %s43, %s45
    %p49 = scmp.eq.s32.totalorder %s9, 0
    %p50 = por %p48, %p49
    %p51 = scmp.ne.s32.totalorder %s43, %s45
    %p52 = scmp.eq.s32.totalorder %s14, 1
    %p53 = por %p51, %p52
    %p54 = scmp.ne.s32.totalorder %s45, %s46
    %p55 = scmp.eq.s32.totalorder %s14, 0
    %p56 = por %p54, %p55
    %p57 = scmp.ne.s32.totalorder %s45, %s46
    %p58 = scmp.eq.s32.totalorder %s15, 1
    %p59 = por %p57, %p58
    %p61 = scmp.ne.s32.totalorder %s46, %s60
    %p62 = scmp.eq.s32.totalorder %s15, 0
    %p63 = por %p61, %p62
    %s65 = sadd.s32 %s64, 1
    %p68 = scmp.eq.s32.totalorder %s9, 1
    %p69 = scmp.ne.s32.totalorder %s64, %s66
    %p70 = scmp.eq.s32.totalorder %s9, 0
    %p71 = por %p69, %p70
    %p72 = scmp.ne.s32.totalorder %s64, %s66
    %p73 = scmp.eq.s32.totalorder %s14, 1
    %p74 = por %p72, %p73
    %p75 = scmp.ne.s32.totalorder %s66, %s67
    %p76 = scmp.eq.s32.totalorder %s14, 0
    %p77 = por %p75, %p76
    %p78 = scmp.ne.s32.totalorder %s66, %s67
    %p79 = scmp.eq.s32.totalorder %s15, 1
    %p80 = por %p78, %p79
    %p82 = scmp.ne.s32.totalorder %s67, %s81
    %p83 = scmp.eq.s32.totalorder %s15, 0
    %p84 = por %p82, %p83
    %s85 = ssub.s32 %s9, %s16
    %p86 = scmp.eq.s32.totalorder %s85, 0
    %s88 = sadd.s32 %s87, 1
    %s89 = scalar_select %p86, %s87, %s88
    %p92 = pneg %p86
    %p93 = scmp.eq.s32.totalorder %s9, 1
    %p94 = por %p92, %p93
    %p95 = scmp.ne.s32.totalorder %s87, %s90
    %p96 = scmp.eq.s32.totalorder %s9, 0
    %p97 = por %p95, %p96
    %p98 = scmp.ne.s32.totalorder %s87, %s90
    %p99 = scmp.eq.s32.totalorder %s14, 1
    %p100 = por %p98, %p99
    %p101 = scmp.ne.s32.totalorder %s90, %s91
    %p102 = scmp.eq.s32.totalorder %s14, 0
    %p103 = por %p101, %p102
    %p104 = scmp.ne.s32.totalorder %s90, %s91
    %p105 = scmp.eq.s32.totalorder %s15, 1
    %p106 = por %p104, %p105
    %p108 = scmp.ne.s32.totalorder %s91, %s107
    %p109 = scmp.eq.s32.totalorder %s15, 0
    %p110 = por %p108, %p109
    %p111 = scmp.le.s32.totalorder 1, %s9
    %p112 = scmp.lt.s32.totalorder %s9, 3
    %p113 = pnand %p111, %p112
    %p114 = pneg %p113
    // Predicated region
    $region9: #{tpu_custom_call.1} parent=5 // pred_check
      _
    $region10: #{tpu_custom_call.1} parent=5 // pred_check_branch
      %116 = sbr.rel (%p113) target = $region12
    $region11: #{tpu_custom_call.1} parent=5 // pred_region
      %s117 = ssub.s32 %s9, 1
      // Predicated region
      $region13: #{tpu_custom_call.1} parent=11 // pred_check
        %p118 = pneg %p56
      $region14: #{tpu_custom_call.1} parent=11 // pred_check_branch
        %120 = sbr.rel (%p118) target = $region16
      $region15: #{tpu_custom_call.1} parent=11 // pred_region
        _
      $region16: #{tpu_custom_call.1} parent=11 // pred_fallthru
        _
      // Predicated region
      $region17: #{tpu_custom_call.1} parent=11 // pred_check
        %p121 = pneg %p77
      $region18: #{tpu_custom_call.1} parent=11 // pred_check_branch
        %123 = sbr.rel (%p121) target = $region20
      $region19: #{tpu_custom_call.1} parent=11 // pred_region
        _
      $region20: #{tpu_custom_call.1} parent=11 // pred_fallthru
        _
    $region12: #{tpu_custom_call.1} parent=5 // pred_fallthru
      _
    %p124 = scmp.lt.s32.totalorder %s9, 2
    // Predicated region
    $region21: #{tpu_custom_call.1} parent=5 // pred_check
      %p125 = pneg %p124
    $region22: #{tpu_custom_call.1} parent=5 // pred_check_branch
      %127 = sbr.rel (%p125) target = $region24
    $region23: #{tpu_custom_call.1} parent=5 // pred_region
      // Predicated region
      $region25: #{tpu_custom_call.1} parent=23 // pred_check
        %p128 = pneg %p29
      $region26: #{tpu_custom_call.1} parent=23 // pred_check_branch
        %130 = sbr.rel (%p128) target = $region28
      $region27: #{tpu_custom_call.1} parent=23 // pred_region
        %p131 = scmp.lt.s32.totalorder %s9, 1
        %s132 = scalar_select %p131, %s9, 1
        %s133 = smul.addr %s132, 54
        %s134 = smul.addr %s133, 8
        %s135 = scalar_lea.vmem %s0, %s134
      $region28: #{tpu_custom_call.1} parent=23 // pred_fallthru
        _
    $region24: #{tpu_custom_call.1} parent=5 // pred_fallthru
      _
    %p136 = scmp.le.s32.totalorder 1, %s9
    %p137 = scmp.lt.s32.totalorder %s9, 3
    %p138 = pnand %p136, %p137
    %p139 = pneg %p138
    // Predicated region
    $region29: #{tpu_custom_call.1} parent=5 // pred_check
      _
    $region30: #{tpu_custom_call.1} parent=5 // pred_check_branch
      %141 = sbr.rel (%p138) target = $region32
    $region31: #{tpu_custom_call.1} parent=5 // pred_region
      %s142 = ssub.s32 %s9, 1
      %p143 = scmp.lt.s32.totalorder %s14, 1
      %s144 = scalar_select %p143, %s14, 1
      %s145 = smul.addr %s144, 54
      %s146 = smul.addr %s145, 8
      %s147 = scalar_lea.vmem %s0, %s146
      %p148 = pneg %p35
      %p149 = pneg %p32
      %p150 = pneg %p56
      %p151 = pneg %p53
      %p152 = pneg %p77
      %p153 = pneg %p74
      %p154 = pneg %p103
      %p155 = pneg %p100
      %p156 = scmp.lt.s32.totalorder %s14, 1
      %s157 = scalar_select %p156, %s14, 1
      %s158 = smul.addr %s157, 32
      %s159 = smul.addr %s158, 8
      %s160 = scalar_lea.vmem %s3, %s159
      %p161 = scmp.lt.s32.totalorder %s14, 1
      %s162 = scalar_select %p161, %s14, 1
      %s163 = smul.addr %s162, 54
      %s164 = smul.addr %s163, 8
      %s165 = scalar_lea.vmem %s0, %s164
      %p166 = scmp.lt.s32.totalorder %s14, 1
      %s167 = scalar_select %p166, %s14, 1
      %s168 = smul.addr %s167, 32
      %s169 = smul.addr %s168, 8
      %s170 = scalar_lea.vmem %s3, %s169
      %v171 = vld [vmem:[%s165] sm:$0xff]
      %v172 = vld [vmem:[%s165 + $0x8] sm:$0xff]
      %v173 = vld [vmem:[%s165 + $0x10] sm:$0x3]
      %v174 = vld [vmem:[%s165 + $0x18] sm:$0xff]
      %v175 = vld [vmem:[%s165 + $0x20] sm:$0xff]
      %v176 = vld [vmem:[%s165 + $0x28] sm:$0x3]
      %v177 = vld [vmem:[%s165 + $0x30] sm:$0xff]
      %v178 = vld [vmem:[%s165 + $0x38] sm:$0xff]
      %v179 = vld [vmem:[%s165 + $0x40] sm:$0x3]
      %v180 = vld [vmem:[%s165 + $0x48] sm:$0xff]
      %v181 = vld [vmem:[%s165 + $0x50] sm:$0xff]
      %v182 = vld [vmem:[%s165 + $0x58] sm:$0x3]
      %v183 = vld [vmem:[%s165 + $0x60] sm:$0xff]
      %v184 = vld [vmem:[%s165 + $0x68] sm:$0xff]
      %v185 = vld [vmem:[%s165 + $0x70] sm:$0x3]
      %v186 = vld [vmem:[%s165 + $0x78] sm:$0xff]
      %v187 = vld [vmem:[%s165 + $0x80] sm:$0xff]
      %v188 = vld [vmem:[%s165 + $0x88] sm:$0x3]
      %v189 = vld [vmem:[%s165 + $0x90] sm:$0xff]
      %v190 = vld [vmem:[%s165 + $0x98] sm:$0xff]
      %v191 = vld [vmem:[%s165 + $0xa0] sm:$0x3]
      %v192 = vld [vmem:[%s165 + $0xa8] sm:$0xff]
      %v193 = vld [vmem:[%s165 + $0xb0] sm:$0xff]
      %v194 = vld [vmem:[%s165 + $0xb8] sm:$0x3]
      %v195 = vld [vmem:[%s165 + $0xc0] sm:$0xff]
      %v196 = vld [vmem:[%s165 + $0xc8] sm:$0xff]
      %v197 = vld [vmem:[%s165 + $0xd0] sm:$0x3]
      %v198 = vld [vmem:[%s165 + $0xd8] sm:$0xff]
      %v199 = vld [vmem:[%s165 + $0xe0] sm:$0xff]
      %v200 = vld [vmem:[%s165 + $0xe8] sm:$0x3]
      %v201 = vld [vmem:[%s165 + $0xf0] sm:$0xff]
      %v202 = vld [vmem:[%s165 + $0xf8] sm:$0xff]
      %v203 = vld [vmem:[%s165 + $0x100] sm:$0x3]
      %v204 = vld [vmem:[%s165 + $0x108] sm:$0xff]
      %v205 = vld [vmem:[%s165 + $0x110] sm:$0xff]
      %v206 = vld [vmem:[%s165 + $0x118] sm:$0x3]
      %v207 = vld [vmem:[%s165 + $0x120] sm:$0xff]
      %v208 = vld [vmem:[%s165 + $0x128] sm:$0xff]
      %v209 = vld [vmem:[%s165 + $0x130] sm:$0x3]
      %v210 = vld [vmem:[%s165 + $0x138] sm:$0xff]
      %v211 = vld [vmem:[%s165 + $0x140] sm:$0xff]
      %v212 = vld [vmem:[%s165 + $0x148] sm:$0x3]
      %v213 = vld [vmem:[%s165 + $0x150] sm:$0xff]
      %v214 = vld [vmem:[%s165 + $0x158] sm:$0xff]
      %v215 = vld [vmem:[%s165 + $0x160] sm:$0x3]
      %v216 = vld [vmem:[%s165 + $0x168] sm:$0xff]
      %v217 = vld [vmem:[%s165 + $0x170] sm:$0xff]
      %v218 = vld [vmem:[%s165 + $0x178] sm:$0x3]
      %v219 = vld [vmem:[%s165 + $0x180] sm:$0xff]
      %v220 = vld [vmem:[%s165 + $0x188] sm:$0xff]
      %v221 = vld [vmem:[%s165 + $0x190] sm:$0x3]
      %v222 = vld [vmem:[%s165 + $0x198] sm:$0xff]
      %v223 = vld [vmem:[%s165 + $0x1a0] sm:$0xff]
      %v224 = vld [vmem:[%s165 + $0x1a8] sm:$0x3]
      %v225 = vld [vmem:[%s1] sm:$0xf]
      %vm274 = vcmask 1046528
      %v275 = vrot.slane %v171, 1
      %v276 = vrot.slane %v172, 1
      %v277 = vsel %vm274, %v275, %v276
      %v278 = vrot.slane %v173, 1
      %v279 = vsel %vm274, %v276, %v278
      %v280 = vrot.slane %v174, 1
      %v281 = vrot.slane %v175, 1
      %v282 = vsel %vm274, %v280, %v281
      %v283 = vrot.slane %v176, 1
      %v284 = vsel %vm274, %v281, %v283
      %v285 = vrot.slane %v177, 1
      %v286 = vrot.slane %v178, 1
      %v287 = vsel %vm274, %v285, %v286
      %v288 = vrot.slane %v179, 1
      %v289 = vsel %vm274, %v286, %v288
      %v290 = vrot.slane %v180, 1
      %v291 = vrot.slane %v181, 1
      %v292 = vsel %vm274, %v290, %v291
      %v293 = vrot.slane %v182, 1
      %v294 = vsel %vm274, %v291, %v293
      %v295 = vrot.slane %v183, 1
      %v296 = vrot.slane %v184, 1
      %v297 = vsel %vm274, %v295, %v296
      %v298 = vrot.slane %v185, 1
      %v299 = vsel %vm274, %v296, %v298
      %v300 = vrot.slane %v186, 1
      %v301 = vrot.slane %v187, 1
      %v302 = vsel %vm274, %v300, %v301
      %v303 = vrot.slane %v188, 1
      %v304 = vsel %vm274, %v301, %v303
      %v305 = vrot.slane %v189, 1
      %v306 = vrot.slane %v190, 1
      %v307 = vsel %vm274, %v305, %v306
      %v308 = vrot.slane %v191, 1
      %v309 = vsel %vm274, %v306, %v308
      %v310 = vrot.slane %v192, 1
      %v311 = vrot.slane %v193, 1
      %v312 = vsel %vm274, %v310, %v311
      %v313 = vrot.slane %v194, 1
      %v314 = vsel %vm274, %v311, %v313
      %v315 = vrot.slane %v195, 1
      %v316 = vrot.slane %v196, 1
      %v317 = vsel %vm274, %v315, %v316
      %v318 = vrot.slane %v197, 1
      %v319 = vsel %vm274, %v316, %v318
      %v320 = vrot.slane %v198, 1
      %v321 = vrot.slane %v199, 1
      %v322 = vsel %vm274, %v320, %v321
      %v323 = vrot.slane %v200, 1
      %v324 = vsel %vm274, %v321, %v323
      %v325 = vrot.slane %v201, 1
      %v326 = vrot.slane %v202, 1
      %v327 = vsel %vm274, %v325, %v326
      %v328 = vrot.slane %v203, 1
      %v329 = vsel %vm274, %v326, %v328
      %v330 = vrot.slane %v204, 1
      %v331 = vrot.slane %v205, 1
      %v332 = vsel %vm274, %v330, %v331
      %v333 = vrot.slane %v206, 1
      %v334 = vsel %vm274, %v331, %v333
      %v335 = vrot.slane %v207, 1
      %v336 = vrot.slane %v208, 1
      %v337 = vsel %vm274, %v335, %v336
      %v338 = vrot.slane %v209, 1
      %v339 = vsel %vm274, %v336, %v338
      %v340 = vrot.slane %v210, 1
      %v341 = vrot.slane %v211, 1
      %v342 = vsel %vm274, %v340, %v341
      %v343 = vrot.slane %v212, 1
      %v344 = vsel %vm274, %v341, %v343
      %v345 = vrot.slane %v213, 1
      %v346 = vrot.slane %v214, 1
      %v347 = vsel %vm274, %v345, %v346
      %v348 = vrot.slane %v215, 1
      %v349 = vsel %vm274, %v346, %v348
      %v350 = vrot.slane %v216, 1
      %v351 = vrot.slane %v217, 1
      %v352 = vsel %vm274, %v350, %v351
      %v353 = vrot.slane %v218, 1
      %v354 = vsel %vm274, %v351, %v353
      %s355 = scalar_lea.vmem %s1, 4
      %v356 = vld [vmem:[%s355] sm:$0xf]
      %vm357 = vcmask 31744
      %v358 = vsel %vm357, %v277, 0
      %v360 = vsel %vm357, %v279, 0
      %v362 = vsel %vm357, %v282, 0
      %v364 = vsel %vm357, %v284, 0
      %v366 = vsel %vm357, %v287, 0
      %v368 = vsel %vm357, %v289, 0
      %v370 = vsel %vm357, %v292, 0
      %v372 = vsel %vm357, %v294, 0
      %v374 = vsel %vm357, %v297, 0
      %v376 = vsel %vm357, %v299, 0
      %v378 = vsel %vm357, %v302, 0
      %v380 = vsel %vm357, %v304, 0
      %v382 = vsel %vm357, %v307, 0
      %v384 = vsel %vm357, %v309, 0
      %v386 = vsel %vm357, %v312, 0
      %v388 = vsel %vm357, %v314, 0
      %v390 = vsel %vm357, %v317, 0
      %v392 = vsel %vm357, %v319, 0
      %v394 = vsel %vm357, %v322, 0
      %v396 = vsel %vm357, %v324, 0
      %v398 = vsel %vm357, %v327, 0
      %v400 = vsel %vm357, %v329, 0
      %v402 = vsel %vm357, %v332, 0
      %v404 = vsel %vm357, %v334, 0
      %v406 = vsel %vm357, %v337, 0
      %v408 = vsel %vm357, %v339, 0
      %v410 = vsel %vm357, %v342, 0
      %v412 = vsel %vm357, %v344, 0
      %v414 = vsel %vm357, %v347, 0
      %v416 = vsel %vm357, %v349, 0
      %v418 = vsel %vm357, %v352, 0
      %v420 = vsel %vm357, %v354, 0
      %vm422 = vcmask 1043456
      %v424 = vsel %vm422, %v356, 0
      %426 = vmatprep.subr.mxu0 0.0
      %427 = vmatpush1.msra.mxu0 %v424
      %428 = vmatprep.subr.mxu0 0.0
      %429 = vmatpush1.msra.mxu0 0.0
      %430 = vmatprep.subr.mxu0 0.0
      %431 = vmatpush1.msra.mxu0 0.0
      %432 = vmatprep.subr.mxu0 0.0
      %433 = vmatpush1.msra.mxu0 0.0
      %434 = vmatprep.subr.mxu0 0.0
      %435 = vmatpush1.msra.mxu0 0.0
      %436 = vmatprep.subr.mxu0 0.0
      %437 = vmatpush1.msra.mxu0 0.0
      %438 = vmatprep.subr.mxu0 0.0
      %439 = vmatpush1.msra.mxu0 0.0
      %440 = vmatprep.subr.mxu0 0.0
      %441 = vmatpush1.msra.mxu0 0.0
      %442 = vmatprep.subr.mxu0 0.0
      %443 = vmatpush1.msra.mxu0 0.0
      %444 = vmatprep.subr.mxu0 0.0
      %445 = vmatpush1.msra.mxu0 0.0
      %446 = vmatprep.subr.mxu0 0.0
      %447 = vmatpush1.msra.mxu0 0.0
      %448 = vmatprep.subr.mxu0 0.0
      %449 = vmatpush1.msra.mxu0 0.0
      %450 = vmatprep.subr.mxu0 0.0
      %451 = vmatpush1.msra.mxu0 0.0
      %452 = vmatprep.subr.mxu0 0.0
      %453 = vmatpush1.msra.mxu0 0.0
      %454 = vmatprep.subr.mxu0 0.0
      %455 = vmatpush1.msra.mxu0 0.0
      %456 = vmatprep.subr.mxu0 0.0
      %457 = vmatpush1.msra.mxu0 0.0
      %458 = vmatprep.subr.mxu0 0.0
      %459 = vmatpush1.msra.mxu0 0.0
      %460 = vmatprep.subr.mxu0 0.0
      %461 = vmatpush1.msra.mxu0 0.0
      %462 = vmatprep.subr.mxu0 0.0
      %463 = vmatpush1.msra.mxu0 0.0
      %464 = vmatprep.subr.mxu0 0.0
      %465 = vmatpush1.msra.mxu0 0.0
      %466 = vmatprep.subr.mxu0 0.0
      %467 = vmatpush1.msra.mxu0 0.0
      %468 = vmatprep.subr.mxu0 0.0
      %469 = vmatpush1.msra.mxu0 0.0
      %470 = vmatprep.subr.mxu0 0.0
      %471 = vmatpush1.msra.mxu0 0.0
      %472 = vmatprep.subr.mxu0 0.0
      %473 = vmatpush1.msra.mxu0 0.0
      %474 = vmatprep.subr.mxu0 0.0
      %475 = vmatpush1.msra.mxu0 0.0
      %476 = vmatprep.subr.mxu0 0.0
      %477 = vmatpush1.msra.mxu0 0.0
      %478 = vmatprep.subr.mxu0 0.0
      %479 = vmatpush1.msra.mxu0 0.0
      %480 = vmatprep.subr.mxu0 0.0
      %481 = vmatpush1.msra.mxu0 0.0
      %482 = vmatprep.subr.mxu0 0.0
      %483 = vmatpush1.msra.mxu0 0.0
      %484 = vmatprep.subr.mxu0 0.0
      %485 = vmatpush1.msra.mxu0 0.0
      %486 = vmatprep.subr.mxu0 0.0
      %487 = vmatpush1.msra.mxu0 0.0
      %488 = vmatprep.subr.mxu0 0.0
      %489 = vmatpush1.msra.mxu0 0.0
      %490 = vmatprep.mubr.f32.mxu0 0.0
      %491 = vmatmul.mubr.f32.gmra.mrb[0].mxu0 %v358
      %v492 = vpop.f32.mrb[0].mxu0
      %v493 = vadd.f32 0.0, %v492
      %v494 = vpop.f32.mrb[0].mxu0
      %495 = vmatprep.mubr.f32.mxu0 0.0
      %496 = vmatmul.mubr.f32.gmra.mrb[0].mxu0 %v360
      %v497 = vpop.f32.mrb[0].mxu0
      %v498 = vadd.f32 0.0, %v497
      %v499 = vpop.f32.mrb[0].mxu0
      %500 = vmatprep.mubr.f32.mxu0 0.0
      %501 = vmatmul.mubr.f32.gmra.mrb[0].mxu0 %v362
      %v502 = vpop.f32.mrb[0].mxu0
      %v503 = vadd.f32 0.0, %v502
      %v504 = vpop.f32.mrb[0].mxu0
      %505 = vmatprep.mubr.f32.mxu0 0.0
      %506 = vmatmul.mubr.f32.gmra.mrb[0].mxu0 %v364
      %v507 = vpop.f32.mrb[0].mxu0
      %v508 = vadd.f32 0.0, %v507
      %v509 = vpop.f32.mrb[0].mxu0
      %510 = vmatprep.mubr.f32.mxu0 0.0
      %511 = vmatmul.mubr.f32.gmra.mrb[0].mxu0 %v366
      %v512 = vpop.f32.mrb[0].mxu0
      %v513 = vadd.f32 0.0, %v512
      %v514 = vpop.f32.mrb[0].mxu0
      %515 = vmatprep.mubr.f32.mxu0 0.0
      %516 = vmatmul.mubr.f32.gmra.mrb[0].mxu0 %v368
      %v517 = vpop.f32.mrb[0].mxu0
      %v518 = vadd.f32 0.0, %v517
      %v519 = vpop.f32.mrb[0].mxu0
      %520 = vmatprep.mubr.f32.mxu0 0.0
      %521 = vmatmul.mubr.f32.gmra.mrb[0].mxu0 %v370
      %v522 = vpop.f32.mrb[0].mxu0
      %v523 = vadd.f32 0.0, %v522
      %v524 = vpop.f32.mrb[0].mxu0
      %525 = vmatprep.mubr.f32.mxu0 0.0
      %526 = vmatmul.mubr.f32.gmra.mrb[0].mxu0 %v372
      %v527 = vpop.f32.mrb[0].mxu0
      %v528 = vadd.f32 0.0, %v527
      %v529 = vpop.f32.mrb[0].mxu0
      %530 = vmatprep.mubr.f32.mxu0 0.0
      %531 = vmatmul.mubr.f32.gmra.mrb[0].mxu0 %v374
      %v532 = vpop.f32.mrb[0].mxu0
      %v533 = vadd.f32 0.0, %v532
      %v534 = vpop.f32.mrb[0].mxu0
      %535 = vmatprep.mubr.f32.mxu0 0.0
      %536 = vmatmul.mubr.f32.gmra.mrb[0].mxu0 %v376
      %v537 = vpop.f32.mrb[0].mxu0
      %v538 = vadd.f32 0.0, %v537
      %v539 = vpop.f32.mrb[0].mxu0
      %540 = vmatprep.mubr.f32.mxu0 0.0
      %541 = vmatmul.mubr.f32.gmra.mrb[0].mxu0 %v378
      %v542 = vpop.f32.mrb[0].mxu0
      %v543 = vadd.f32 0.0, %v542
      %v544 = vpop.f32.mrb[0].mxu0
      %545 = vmatprep.mubr.f32.mxu0 0.0
      %546 = vmatmul.mubr.f32.gmra.mrb[0].mxu0 %v380
      %v547 = vpop.f32.mrb[0].mxu0
      %v548 = vadd.f32 0.0, %v547
      %v549 = vpop.f32.mrb[0].mxu0
      %550 = vmatprep.mubr.f32.mxu0 0.0
      %551 = vmatmul.mubr.f32.gmra.mrb[0].mxu0 %v382
      %v552 = vpop.f32.mrb[0].mxu0
      %v553 = vadd.f32 0.0, %v552
      %v554 = vpop.f32.mrb[0].mxu0
      %555 = vmatprep.mubr.f32.mxu0 0.0
      %556 = vmatmul.mubr.f32.gmra.mrb[0].mxu0 %v384
      %v557 = vpop.f32.mrb[0].mxu0
      %v558 = vadd.f32 0.0, %v557
      %v559 = vpop.f32.mrb[0].mxu0
      %560 = vmatprep.mubr.f32.mxu0 0.0
      %561 = vmatmul.mubr.f32.gmra.mrb[0].mxu0 %v386
      %v562 = vpop.f32.mrb[0].mxu0
      %v563 = vadd.f32 0.0, %v562
      %v564 = vpop.f32.mrb[0].mxu0
      %565 = vmatprep.mubr.f32.mxu0 0.0
      %566 = vmatmul.mubr.f32.gmra.mrb[0].mxu0 %v388
      %v567 = vpop.f32.mrb[0].mxu0
      %v568 = vadd.f32 0.0, %v567
      %v569 = vpop.f32.mrb[0].mxu0
      %570 = vmatprep.mubr.f32.mxu0 0.0
      %571 = vmatmul.mubr.f32.gmra.mrb[0].mxu0 %v390
      %v572 = vpop.f32.mrb[0].mxu0
      %v573 = vadd.f32 0.0, %v572
      %v574 = vpop.f32.mrb[0].mxu0
      %575 = vmatprep.mubr.f32.mxu0 0.0
      %576 = vmatmul.mubr.f32.gmra.mrb[0].mxu0 %v392
      %v577 = vpop.f32.mrb[0].mxu0
      %v578 = vadd.f32 0.0, %v577
      %v579 = vpop.f32.mrb[0].mxu0
      %580 = vmatprep.mubr.f32.mxu0 0.0
      %581 = vmatmul.mubr.f32.gmra.mrb[0].mxu0 %v394
      %v582 = vpop.f32.mrb[0].mxu0
      %v583 = vadd.f32 0.0, %v582
      %v584 = vpop.f32.mrb[0].mxu0
      %585 = vmatprep.mubr.f32.mxu0 0.0
      %586 = vmatmul.mubr.f32.gmra.mrb[0].mxu0 %v396
      %v587 = vpop.f32.mrb[0].mxu0
      %v588 = vadd.f32 0.0, %v587
      %v589 = vpop.f32.mrb[0].mxu0
      %590 = vmatprep.mubr.f32.mxu0 0.0
      %591 = vmatmul.mubr.f32.gmra.mrb[0].mxu0 %v398
      %v592 = vpop.f32.mrb[0].mxu0
      %v593 = vadd.f32 0.0, %v592
      %v594 = vpop.f32.mrb[0].mxu0
      %595 = vmatprep.mubr.f32.mxu0 0.0
      %596 = vmatmul.mubr.f32.gmra.mrb[0].mxu0 %v400
      %v597 = vpop.f32.mrb[0].mxu0
      %v598 = vadd.f32 0.0, %v597
      %v599 = vpop.f32.mrb[0].mxu0
      %600 = vmatprep.mubr.f32.mxu0 0.0
      %601 = vmatmul.mubr.f32.gmra.mrb[0].mxu0 %v402
      %v602 = vpop.f32.mrb[0].mxu0
      %v603 = vadd.f32 0.0, %v602
      %v604 = vpop.f32.mrb[0].mxu0
      %605 = vmatprep.mubr.f32.mxu0 0.0
      %606 = vmatmul.mubr.f32.gmra.mrb[0].mxu0 %v404
      %v607 = vpop.f32.mrb[0].mxu0
      %v608 = vadd.f32 0.0, %v607
      %v609 = vpop.f32.mrb[0].mxu0
      %610 = vmatprep.mubr.f32.mxu0 0.0
      %611 = vmatmul.mubr.f32.gmra.mrb[0].mxu0 %v406
      %v612 = vpop.f32.mrb[0].mxu0
      %v613 = vadd.f32 0.0, %v612
      %v614 = vpop.f32.mrb[0].mxu0
      %615 = vmatprep.mubr.f32.mxu0 0.0
      %616 = vmatmul.mubr.f32.gmra.mrb[0].mxu0 %v408
      %v617 = vpop.f32.mrb[0].mxu0
      %v618 = vadd.f32 0.0, %v617
      %v619 = vpop.f32.mrb[0].mxu0
      %620 = vmatprep.mubr.f32.mxu0 0.0
      %621 = vmatmul.mubr.f32.gmra.mrb[0].mxu0 %v410
      %v622 = vpop.f32.mrb[0].mxu0
      %v623 = vadd.f32 0.0, %v622
      %v624 = vpop.f32.mrb[0].mxu0
      %625 = vmatprep.mubr.f32.mxu0 0.0
      %626 = vmatmul.mubr.f32.gmra.mrb[0].mxu0 %v412
      %v627 = vpop.f32.mrb[0].mxu0
      %v628 = vadd.f32 0.0, %v627
      %v629 = vpop.f32.mrb[0].mxu0
      %630 = vmatprep.mubr.f32.mxu0 0.0
      %631 = vmatmul.mubr.f32.gmra.mrb[0].mxu0 %v414
      %v632 = vpop.f32.mrb[0].mxu0
      %v633 = vadd.f32 0.0, %v632
      %v634 = vpop.f32.mrb[0].mxu0
      %635 = vmatprep.mubr.f32.mxu0 0.0
      %636 = vmatmul.mubr.f32.gmra.mrb[0].mxu0 %v416
      %v637 = vpop.f32.mrb[0].mxu0
      %v638 = vadd.f32 0.0, %v637
      %v639 = vpop.f32.mrb[0].mxu0
      %640 = vmatprep.mubr.f32.mxu0 0.0
      %641 = vmatmul.mubr.f32.gmra.mrb[0].mxu0 %v418
      %v642 = vpop.f32.mrb[0].mxu0
      %v643 = vadd.f32 0.0, %v642
      %v644 = vpop.f32.mrb[0].mxu0
      %645 = vmatprep.mubr.f32.mxu0 0.0
      %646 = vmatmul.mubr.f32.gmra.mrb[0].mxu0 %v420
      %v647 = vpop.f32.mrb[0].mxu0
      %v648 = vadd.f32 0.0, %v647
      %v649 = vpop.f32.mrb[0].mxu0
      %650 = vdwg.mxu0
      %v651 = vsel %vm357, %v171, 0
      %v653 = vsel %vm357, %v172, 0
      %v655 = vsel %vm357, %v174, 0
      %v657 = vsel %vm357, %v175, 0
      %v659 = vsel %vm357, %v177, 0
      %v661 = vsel %vm357, %v178, 0
      %v663 = vsel %vm357, %v180, 0
      %v665 = vsel %vm357, %v181, 0
      %v667 = vsel %vm357, %v183, 0
      %v669 = vsel %vm357, %v184, 0
      %v671 = vsel %vm357, %v186, 0
      %v673 = vsel %vm357, %v187, 0
      %v675 = vsel %vm357, %v189, 0
      %v677 = vsel %vm357, %v190, 0
      %v679 = vsel %vm357, %v192, 0
      %v681 = vsel %vm357, %v193, 0
      %v683 = vsel %vm357, %v195, 0
      %v685 = vsel %vm357, %v196, 0
      %v687 = vsel %vm357, %v198, 0
      %v689 = vsel %vm357, %v199, 0
      %v691 = vsel %vm357, %v201, 0
      %v693 = vsel %vm357, %v202, 0
      %v695 = vsel %vm357, %v204, 0
      %v697 = vsel %vm357, %v205, 0
      %v699 = vsel %vm357, %v207, 0
      %v701 = vsel %vm357, %v208, 0
      %v703 = vsel %vm357, %v210, 0
      %v705 = vsel %vm357, %v211, 0
      %v707 = vsel %vm357, %v213, 0
      %v709 = vsel %vm357, %v214, 0
      %v711 = vsel %vm357, %v216, 0
      %v713 = vsel %vm357, %v217, 0
      %v716 = vsel %vm422, %v225, 0
      %718 = vmatprep.subr.mxu0 0.0
      %719 = vmatpush1.msra.mxu0 %v716
      %720 = vmatprep.subr.mxu0 0.0
      %721 = vmatpush1.msra.mxu0 0.0
      %722 = vmatprep.subr.mxu0 0.0
      %723 = vmatpush1.msra.mxu0 0.0
      %724 = vmatprep.subr.mxu0 0.0
      %725 = vmatpush1.msra.mxu0 0.0
      %726 = vmatprep.subr.mxu0 0.0
      %727 = vmatpush1.msra.mxu0 0.0
      %728 = vmatprep.subr.mxu0 0.0
      %729 = vmatpush1.msra.mxu0 0.0
      %730 = vmatprep.subr.mxu0 0.0
      %731 = vmatpush1.msra.mxu0 0.0
      %732 = vmatprep.subr.mxu0 0.0
      %733 = vmatpush1.msra.mxu0 0.0
      %734 = vmatprep.subr.mxu0 0.0
      %735 = vmatpush1.msra.mxu0 0.0
      %736 = vmatprep.subr.mxu0 0.0
      %737 = vmatpush1.msra.mxu0 0.0
      %738 = vmatprep.subr.mxu0 0.0
      %739 = vmatpush1.msra.mxu0 0.0
      %740 = vmatprep.subr.mxu0 0.0
      %741 = vmatpush1.msra.mxu0 0.0
      %742 = vmatprep.subr.mxu0 0.0
      %743 = vmatpush1.msra.mxu0 0.0
      %744 = vmatprep.subr.mxu0 0.0
      %745 = vmatpush1.msra.mxu0 0.0
      %746 = vmatprep.subr.mxu0 0.0
      %747 = vmatpush1.msra.mxu0 0.0
      %748 = vmatprep.subr.mxu0 0.0
      %749 = vmatpush1.msra.mxu0 0.0
      %750 = vmatprep.subr.mxu0 0.0
      %751 = vmatpush1.msra.mxu0 0.0
      %752 = vmatprep.subr.mxu0 0.0
      %753 = vmatpush1.msra.mxu0 0.0
      %754 = vmatprep.subr.mxu0 0.0
      %755 = vmatpush1.msra.mxu0 0.0
      %756 = vmatprep.subr.mxu0 0.0
      %757 = vmatpush1.msra.mxu0 0.0
      %758 = vmatprep.subr.mxu0 0.0
      %759 = vmatpush1.msra.mxu0 0.0
      %760 = vmatprep.subr.mxu0 0.0
      %761 = vmatpush1.msra.mxu0 0.0
      %762 = vmatprep.subr.mxu0 0.0
      %763 = vmatpush1.msra.mxu0 0.0
      %764 = vmatprep.subr.mxu0 0.0
      %765 = vmatpush1.msra.mxu0 0.0
      %766 = vmatprep.subr.mxu0 0.0
      %767 = vmatpush1.msra.mxu0 0.0
      %768 = vmatprep.subr.mxu0 0.0
      %769 = vmatpush1.msra.mxu0 0.0
      %770 = vmatprep.subr.mxu0 0.0
      %771 = vmatpush1.msra.mxu0 0.0
      %772 = vmatprep.subr.mxu0 0.0
      %773 = vmatpush1.msra.mxu0 0.0
      %774 = vmatprep.subr.mxu0 0.0
      %775 = vmatpush1.msra.mxu0 0.0
      %776 = vmatprep.subr.mxu0 0.0
      %777 = vmatpush1.msra.mxu0 0.0
      %778 = vmatprep.subr.mxu0 0.0
      %779 = vmatpush1.msra.mxu0 0.0
      %780 = vmatprep.subr.mxu0 0.0
      %781 = vmatpush1.msra.mxu0 0.0
      %782 = vmatprep.mubr.f32.mxu0 0.0
      %783 = vmatmul.mubr.f32.gmra.mrb[0].mxu0 %v651
      %v784 = vpop.f32.mrb[0].mxu0
      %v785 = vadd.f32 %v493, %v784
      %v786 = vpop.f32.mrb[0].mxu0
      %787 = vmatprep.mubr.f32.mxu0 0.0
      %788 = vmatmul.mubr.f32.gmra.mrb[0].mxu0 %v653
      %v789 = vpop.f32.mrb[0].mxu0
      %v790 = vadd.f32 %v498, %v789
      %v791 = vpop.f32.mrb[0].mxu0
      %792 = vmatprep.mubr.f32.mxu0 0.0
      %793 = vmatmul.mubr.f32.gmra.mrb[0].mxu0 %v655
      %v794 = vpop.f32.mrb[0].mxu0
      %v795 = vadd.f32 %v503, %v794
      %v796 = vpop.f32.mrb[0].mxu0
      %797 = vmatprep.mubr.f32.mxu0 0.0
      %798 = vmatmul.mubr.f32.gmra.mrb[0].mxu0 %v657
      %v799 = vpop.f32.mrb[0].mxu0
      %v800 = vadd.f32 %v508, %v799
      %v801 = vpop.f32.mrb[0].mxu0
      %802 = vmatprep.mubr.f32.mxu0 0.0
      %803 = vmatmul.mubr.f32.gmra.mrb[0].mxu0 %v659
      %v804 = vpop.f32.mrb[0].mxu0
      %v805 = vadd.f32 %v513, %v804
      %v806 = vpop.f32.mrb[0].mxu0
      %807 = vmatprep.mubr.f32.mxu0 0.0
      %808 = vmatmul.mubr.f32.gmra.mrb[0].mxu0 %v661
      %v809 = vpop.f32.mrb[0].mxu0
      %v810 = vadd.f32 %v518, %v809
      %v811 = vpop.f32.mrb[0].mxu0
      %812 = vmatprep.mubr.f32.mxu0 0.0
      %813 = vmatmul.mubr.f32.gmra.mrb[0].mxu0 %v663
      %v814 = vpop.f32.mrb[0].mxu0
      %v815 = vadd.f32 %v523, %v814
      %v816 = vpop.f32.mrb[0].mxu0
      %817 = vmatprep.mubr.f32.mxu0 0.0
      %818 = vmatmul.mubr.f32.gmra.mrb[0].mxu0 %v665
      %v819 = vpop.f32.mrb[0].mxu0
      %v820 = vadd.f32 %v528, %v819
      %v821 = vpop.f32.mrb[0].mxu0
      %822 = vmatprep.mubr.f32.mxu0 0.0
      %823 = vmatmul.mubr.f32.gmra.mrb[0].mxu0 %v667
      %v824 = vpop.f32.mrb[0].mxu0
      %v825 = vadd.f32 %v533, %v824
      %v826 = vpop.f32.mrb[0].mxu0
      %827 = vmatprep.mubr.f32.mxu0 0.0
      %828 = vmatmul.mubr.f32.gmra.mrb[0].mxu0 %v669
      %v829 = vpop.f32.mrb[0].mxu0
      %v830 = vadd.f32 %v538, %v829
      %v831 = vpop.f32.mrb[0].mxu0
      %832 = vmatprep.mubr.f32.mxu0 0.0
      %833 = vmatmul.mubr.f32.gmra.mrb[0].mxu0 %v671
      %v834 = vpop.f32.mrb[0].mxu0
      %v835 = vadd.f32 %v543, %v834
      %v836 = vpop.f32.mrb[0].mxu0
      %837 = vmatprep.mubr.f32.mxu0 0.0
      %838 = vmatmul.mubr.f32.gmra.mrb[0].mxu0 %v673
      %v839 = vpop.f32.mrb[0].mxu0
      %v840 = vadd.f32 %v548, %v839
      %v841 = vpop.f32.mrb[0].mxu0
      %842 = vmatprep.mubr.f32.mxu0 0.0
      %843 = vmatmul.mubr.f32.gmra.mrb[0].mxu0 %v675
      %v844 = vpop.f32.mrb[0].mxu0
      %v845 = vadd.f32 %v553, %v844
      %v846 = vpop.f32.mrb[0].mxu0
      %847 = vmatprep.mubr.f32.mxu0 0.0
      %848 = vmatmul.mubr.f32.gmra.mrb[0].mxu0 %v677
      %v849 = vpop.f32.mrb[0].mxu0
      %v850 = vadd.f32 %v558, %v849
      %v851 = vpop.f32.mrb[0].mxu0
      %852 = vmatprep.mubr.f32.mxu0 0.0
      %853 = vmatmul.mubr.f32.gmra.mrb[0].mxu0 %v679
      %v854 = vpop.f32.mrb[0].mxu0
      %v855 = vadd.f32 %v563, %v854
      %v856 = vpop.f32.mrb[0].mxu0
      %857 = vmatprep.mubr.f32.mxu0 0.0
      %858 = vmatmul.mubr.f32.gmra.mrb[0].mxu0 %v681
      %v859 = vpop.f32.mrb[0].mxu0
      %v860 = vadd.f32 %v568, %v859
      %v861 = vpop.f32.mrb[0].mxu0
      %862 = vmatprep.mubr.f32.mxu0 0.0
      %863 = vmatmul.mubr.f32.gmra.mrb[0].mxu0 %v683
      %v864 = vpop.f32.mrb[0].mxu0
      %v865 = vadd.f32 %v573, %v864
      %v866 = vpop.f32.mrb[0].mxu0
      %867 = vmatprep.mubr.f32.mxu0 0.0
      %868 = vmatmul.mubr.f32.gmra.mrb[0].mxu0 %v685
      %v869 = vpop.f32.mrb[0].mxu0
      %v870 = vadd.f32 %v578, %v869
      %v871 = vpop.f32.mrb[0].mxu0
      %872 = vmatprep.mubr.f32.mxu0 0.0
      %873 = vmatmul.mubr.f32.gmra.mrb[0].mxu0 %v687
      %v874 = vpop.f32.mrb[0].mxu0
      %v875 = vadd.f32 %v583, %v874
      %v876 = vpop.f32.mrb[0].mxu0
      %877 = vmatprep.mubr.f32.mxu0 0.0
      %878 = vmatmul.mubr.f32.gmra.mrb[0].mxu0 %v689
      %v879 = vpop.f32.mrb[0].mxu0
      %v880 = vadd.f32 %v588, %v879
      %v881 = vpop.f32.mrb[0].mxu0
      %882 = vmatprep.mubr.f32.mxu0 0.0
      %883 = vmatmul.mubr.f32.gmra.mrb[0].mxu0 %v691
      %v884 = vpop.f32.mrb[0].mxu0
      %v885 = vadd.f32 %v593, %v884
      %v886 = vpop.f32.mrb[0].mxu0
      %887 = vmatprep.mubr.f32.mxu0 0.0
      %888 = vmatmul.mubr.f32.gmra.mrb[0].mxu0 %v693
      %v889 = vpop.f32.mrb[0].mxu0
      %v890 = vadd.f32 %v598, %v889
      %v891 = vpop.f32.mrb[0].mxu0
      %892 = vmatprep.mubr.f32.mxu0 0.0
      %893 = vmatmul.mubr.f32.gmra.mrb[0].mxu0 %v695
      %v894 = vpop.f32.mrb[0].mxu0
      %v895 = vadd.f32 %v603, %v894
      %v896 = vpop.f32.mrb[0].mxu0
      %897 = vmatprep.mubr.f32.mxu0 0.0
      %898 = vmatmul.mubr.f32.gmra.mrb[0].mxu0 %v697
      %v899 = vpop.f32.mrb[0].mxu0
      %v900 = vadd.f32 %v608, %v899
      %v901 = vpop.f32.mrb[0].mxu0
      %902 = vmatprep.mubr.f32.mxu0 0.0
      %903 = vmatmul.mubr.f32.gmra.mrb[0].mxu0 %v699
      %v904 = vpop.f32.mrb[0].mxu0
      %v905 = vadd.f32 %v613, %v904
      %v906 = vpop.f32.mrb[0].mxu0
      %907 = vmatprep.mubr.f32.mxu0 0.0
      %908 = vmatmul.mubr.f32.gmra.mrb[0].mxu0 %v701
      %v909 = vpop.f32.mrb[0].mxu0
      %v910 = vadd.f32 %v618, %v909
      %v911 = vpop.f32.mrb[0].mxu0
      %912 = vmatprep.mubr.f32.mxu0 0.0
      %913 = vmatmul.mubr.f32.gmra.mrb[0].mxu0 %v703
      %v914 = vpop.f32.mrb[0].mxu0
      %v915 = vadd.f32 %v623, %v914
      %v916 = vpop.f32.mrb[0].mxu0
      %917 = vmatprep.mubr.f32.mxu0 0.0
      %918 = vmatmul.mubr.f32.gmra.mrb[0].mxu0 %v705
      %v919 = vpop.f32.mrb[0].mxu0
      %v920 = vadd.f32 %v628, %v919
      %v921 = vpop.f32.mrb[0].mxu0
      %922 = vmatprep.mubr.f32.mxu0 0.0
      %923 = vmatmul.mubr.f32.gmra.mrb[0].mxu0 %v707
      %v924 = vpop.f32.mrb[0].mxu0
      %v925 = vadd.f32 %v633, %v924
      %v926 = vpop.f32.mrb[0].mxu0
      %927 = vmatprep.mubr.f32.mxu0 0.0
      %928 = vmatmul.mubr.f32.gmra.mrb[0].mxu0 %v709
      %v929 = vpop.f32.mrb[0].mxu0
      %v930 = vadd.f32 %v638, %v929
      %v931 = vpop.f32.mrb[0].mxu0
      %932 = vmatprep.mubr.f32.mxu0 0.0
      %933 = vmatmul.mubr.f32.gmra.mrb[0].mxu0 %v711
      %v934 = vpop.f32.mrb[0].mxu0
      %v935 = vadd.f32 %v643, %v934
      %v936 = vpop.f32.mrb[0].mxu0
      %937 = vmatprep.mubr.f32.mxu0 0.0
      %938 = vmatmul.mubr.f32.gmra.mrb[0].mxu0 %v713
      %v939 = vpop.f32.mrb[0].mxu0
      %v940 = vadd.f32 %v648, %v939
      %v941 = vpop.f32.mrb[0].mxu0
      %942 = vdwg.mxu0
      %vm943 = vcmask 1045504
      %v944 = vrot.slane %v171, 2
      %v945 = vrot.slane %v172, 2
      %v946 = vsel %vm943, %v944, %v945
      %v947 = vrot.slane %v173, 2
      %v948 = vsel %vm943, %v945, %v947
      %v949 = vrot.slane %v174, 2
      %v950 = vrot.slane %v175, 2
      %v951 = vsel %vm943, %v949, %v950
      %v952 = vrot.slane %v176, 2
      %v953 = vsel %vm943, %v950, %v952
      %v954 = vrot.slane %v177, 2
      %v955 = vrot.slane %v178, 2
      %v956 = vsel %vm943, %v954, %v955
      %v957 = vrot.slane %v179, 2
      %v958 = vsel %vm943, %v955, %v957
      %v959 = vrot.slane %v180, 2
      %v960 = vrot.slane %v181, 2
      %v961 = vsel %vm943, %v959, %v960
      %v962 = vrot.slane %v182, 2
      %v963 = vsel %vm943, %v960, %v962
      %v964 = vrot.slane %v183, 2
      %v965 = vrot.slane %v184, 2
      %v966 = vsel %vm943, %v964, %v965
      %v967 = vrot.slane %v185, 2
      %v968 = vsel %vm943, %v965, %v967
      %v969 = vrot.slane %v186, 2
      %v970 = vrot.slane %v187, 2
      %v971 = vsel %vm943, %v969, %v970
      %v972 = vrot.slane %v188, 2
      %v973 = vsel %vm943, %v970, %v972
      %v974 = vrot.slane %v189, 2
      %v975 = vrot.slane %v190, 2
      %v976 = vsel %vm943, %v974, %v975
      %v977 = vrot.slane %v191, 2
      %v978 = vsel %vm943, %v975, %v977
      %v979 = vrot.slane %v192, 2
      %v980 = vrot.slane %v193, 2
      %v981 = vsel %vm943, %v979, %v980
      %v982 = vrot.slane %v194, 2
      %v983 = vsel %vm943, %v980, %v982
      %v984 = vrot.slane %v195, 2
      %v985 = vrot.slane %v196, 2
      %v986 = vsel %vm943, %v984, %v985
      %v987 = vrot.slane %v197, 2
      %v988 = vsel %vm943, %v985, %v987
      %v989 = vrot.slane %v198, 2
      %v990 = vrot.slane %v199, 2
      %v991 = vsel %vm943, %v989, %v990
      %v992 = vrot.slane %v200, 2
      %v993 = vsel %vm943, %v990, %v992
      %v994 = vrot.slane %v201, 2
      %v995 = vrot.slane %v202, 2
      %v996 = vsel %vm943, %v994, %v995
      %v997 = vrot.slane %v203, 2
      %v998 = vsel %vm943, %v995, %v997
      %v999 = vrot.slane %v204, 2
      %v1000 = vrot.slane %v205, 2
      %v1001 = vsel %vm943, %v999, %v1000
      %v1002 = vrot.slane %v206, 2
      %v1003 = vsel %vm943, %v1000, %v1002
      %v1004 = vrot.slane %v207, 2
      %v1005 = vrot.slane %v208, 2
      %v1006 = vsel %vm943, %v1004, %v1005
      %v1007 = vrot.slane %v209, 2
      %v1008 = vsel %vm943, %v1005, %v1007
      %v1009 = vrot.slane %v210, 2
      %v1010 = vrot.slane %v211, 2
      %v1011 = vsel %vm943, %v1009, %v1010
      %v1012 = vrot.slane %v212, 2
      %v1013 = vsel %vm943, %v1010, %v1012
      %v1014 = vrot.slane %v213, 2
      %v1015 = vrot.slane %v214, 2
      %v1016 = vsel %vm943, %v1014, %v1015
      %v1017 = vrot.slane %v215, 2
      %v1018 = vsel %vm943, %v1015, %v1017
      %v1019 = vrot.slane %v216, 2
      %v1020 = vrot.slane %v217, 2
      %v1021 = vsel %vm943, %v1019, %v1020
      %v1022 = vrot.slane %v218, 2
      %v1023 = vsel %vm943, %v1020, %v1022
      %s1024 = scalar_lea.vmem %s1, 8
      %v1025 = vld [vmem:[%s1024] sm:$0xf]
      %v1026 = vsel %vm357, %v946, 0
      %v1028 = vsel %vm357, %v948, 0
      %v1030 = vsel %vm357, %v951, 0
      %v1032 = vsel %vm357, %v953, 0
      %v1034 = vsel %vm357, %v956, 0
      %v1036 = vsel %vm357, %v958, 0
      %v1038 = vsel %vm357, %v961, 0
      %v1040 = vsel %vm357, %v963, 0
      %v1042 = vsel %vm357, %v966, 0
      %v1044 = vsel %vm357, %v968, 0
      %v1046 = vsel %vm357, %v971, 0
      %v1048 = vsel %vm357, %v973, 0
      %v1050 = vsel %vm357, %v976, 0
      %v1052 = vsel %vm357, %v978, 0
      %v1054 = vsel %vm357, %v981, 0
      %v1056 = vsel %vm357, %v983, 0
      %v1058 = vsel %vm357, %v986, 0
      %v1060 = vsel %vm357, %v988, 0
      %v1062 = vsel %vm357, %v991, 0
      %v1064 = vsel %vm357, %v993, 0
      %v1066 = vsel %vm357, %v996, 0
      %v1068 = vsel %vm357, %v998, 0
      %v1070 = vsel %vm357, %v1001, 0
      %v1072 = vsel %vm357, %v1003, 0
      %v1074 = vsel %vm357, %v1006, 0
      %v1076 = vsel %vm357, %v1008, 0
      %v1078 = vsel %vm357, %v1011, 0
      %v1080 = vsel %vm357, %v1013, 0
      %v1082 = vsel %vm357, %v1016, 0
      %v1084 = vsel %vm357, %v1018, 0
      %v1086 = vsel %vm357, %v1021, 0
      %v1088 = vsel %vm357, %v1023, 0
      %v1091 = vsel %vm422, %v1025, 0
      %1093 = vmatprep.subr.mxu0 0.0
      %1094 = vmatpush1.msra.mxu0 %v1091
      %1095 = vmatprep.subr.mxu0 0.0
      %1096 = vmatpush1.msra.mxu0 0.0
      %1097 = vmatprep.subr.mxu0 0.0
      %1098 = vmatpush1.msra.mxu0 0.0
      %1099 = vmatprep.subr.mxu0 0.0
      %1100 = vmatpush1.msra.mxu0 0.0
      %1101 = vmatprep.subr.mxu0 0.0
      %1102 = vmatpush1.msra.mxu0 0.0
      %1103 = vmatprep.subr.mxu0 0.0
      %1104 = vmatpush1.msra.mxu0 0.0
      %1105 = vmatprep.subr.mxu0 0.0
      %1106 = vmatpush1.msra.mxu0 0.0
      %1107 = vmatprep.subr.mxu0 0.0
      %1108 = vmatpush1.msra.mxu0 0.0
      %1109 = vmatprep.subr.mxu0 0.0
      %1110 = vmatpush1.msra.mxu0 0.0
      %1111 = vmatprep.subr.mxu0 0.0
      %1112 = vmatpush1.msra.mxu0 0.0
      %1113 = vmatprep.subr.mxu0 0.0
      %1114 = vmatpush1.msra.mxu0 0.0
      %1115 = vmatprep.subr.mxu0 0.0
      %1116 = vmatpush1.msra.mxu0 0.0
      %1117 = vmatprep.subr.mxu0 0.0
      %1118 = vmatpush1.msra.mxu0 0.0
      %1119 = vmatprep.subr.mxu0 0.0
      %1120 = vmatpush1.msra.mxu0 0.0
      %1121 = vmatprep.subr.mxu0 0.0
      %1122 = vmatpush1.msra.mxu0 0.0
      %1123 = vmatprep.subr.mxu0 0.0
      %1124 = vmatpush1.msra.mxu0 0.0
      %1125 = vmatprep.subr.mxu0 0.0
      %1126 = vmatpush1.msra.mxu0 0.0
      %1127 = vmatprep.subr.mxu0 0.0
      %1128 = vmatpush1.msra.mxu0 0.0
      %1129 = vmatprep.subr.mxu0 0.0
      %1130 = vmatpush1.msra.mxu0 0.0
      %1131 = vmatprep.subr.mxu0 0.0
      %1132 = vmatpush1.msra.mxu0 0.0
      %1133 = vmatprep.subr.mxu0 0.0
      %1134 = vmatpush1.msra.mxu0 0.0
      %1135 = vmatprep.subr.mxu0 0.0
      %1136 = vmatpush1.msra.mxu0 0.0
      %1137 = vmatprep.subr.mxu0 0.0
      %1138 = vmatpush1.msra.mxu0 0.0
      %1139 = vmatprep.subr.mxu0 0.0
      %1140 = vmatpush1.msra.mxu0 0.0
      %1141 = vmatprep.subr.mxu0 0.0
      %1142 = vmatpush1.msra.mxu0 0.0
      %1143 = vmatprep.subr.mxu0 0.0
      %1144 = vmatpush1.msra.mxu0 0.0
      %1145 = vmatprep.subr.mxu0 0.0
      %1146 = vmatpush1.msra.mxu0 0.0
      %1147 = vmatprep.subr.mxu0 0.0
      %1148 = vmatpush1.msra.mxu0 0.0
      %1149 = vmatprep.subr.mxu0 0.0
      %1150 = vmatpush1.msra.mxu0 0.0
      %1151 = vmatprep.subr.mxu0 0.0
      %1152 = vmatpush1.msra.mxu0 0.0
      %1153 = vmatprep.subr.mxu0 0.0
      %1154 = vmatpush1.msra.mxu0 0.0
      %1155 = vmatprep.subr.mxu0 0.0
      %1156 = vmatpush1.msra.mxu0 0.0
      %1157 = vmatprep.mubr.f32.mxu0 0.0
      %1158 = vmatmul.mubr.f32.gmra.mrb[0].mxu0 %v1026
      %v1159 = vpop.f32.mrb[0].mxu0
      %v1160 = vadd.f32 0.0, %v1159
      %v1161 = vpop.f32.mrb[0].mxu0
      %1162 = vmatprep.mubr.f32.mxu0 0.0
      %1163 = vmatmul.mubr.f32.gmra.mrb[0].mxu0 %v1028
      %v1164 = vpop.f32.mrb[0].mxu0
      %v1165 = vadd.f32 0.0, %v1164
      %v1166 = vpop.f32.mrb[0].mxu0
      %1167 = vmatprep.mubr.f32.mxu0 0.0
      %1168 = vmatmul.mubr.f32.gmra.mrb[0].mxu0 %v1030
      %v1169 = vpop.f32.mrb[0].mxu0
      %v1170 = vadd.f32 0.0, %v1169
      %v1171 = vpop.f32.mrb[0].mxu0
      %1172 = vmatprep.mubr.f32.mxu0 0.0
      %1173 = vmatmul.mubr.f32.gmra.mrb[0].mxu0 %v1032
      %v1174 = vpop.f32.mrb[0].mxu0
      %v1175 = vadd.f32 0.0, %v1174
      %v1176 = vpop.f32.mrb[0].mxu0
      %1177 = vmatprep.mubr.f32.mxu0 0.0
      %1178 = vmatmul.mubr.f32.gmra.mrb[0].mxu0 %v1034
      %v1179 = vpop.f32.mrb[0].mxu0
      %v1180 = vadd.f32 0.0, %v1179
      %v1181 = vpop.f32.mrb[0].mxu0
      %1182 = vmatprep.mubr.f32.mxu0 0.0
      %1183 = vmatmul.mubr.f32.gmra.mrb[0].mxu0 %v1036
      %v1184 = vpop.f32.mrb[0].mxu0
      %v1185 = vadd.f32 0.0, %v1184
      %v1186 = vpop.f32.mrb[0].mxu0
      %1187 = vmatprep.mubr.f32.mxu0 0.0
      %1188 = vmatmul.mubr.f32.gmra.mrb[0].mxu0 %v1038
      %v1189 = vpop.f32.mrb[0].mxu0
      %v1190 = vadd.f32 0.0, %v1189
      %v1191 = vpop.f32.mrb[0].mxu0
      %1192 = vmatprep.mubr.f32.mxu0 0.0
      %1193 = vmatmul.mubr.f32.gmra.mrb[0].mxu0 %v1040
      %v1194 = vpop.f32.mrb[0].mxu0
      %v1195 = vadd.f32 0.0, %v1194
      %v1196 = vpop.f32.mrb[0].mxu0
      %1197 = vmatprep.mubr.f32.mxu0 0.0
      %1198 = vmatmul.mubr.f32.gmra.mrb[0].mxu0 %v1042
      %v1199 = vpop.f32.mrb[0].mxu0
      %v1200 = vadd.f32 0.0, %v1199
      %v1201 = vpop.f32.mrb[0].mxu0
      %1202 = vmatprep.mubr.f32.mxu0 0.0
      %1203 = vmatmul.mubr.f32.gmra.mrb[0].mxu0 %v1044
      %v1204 = vpop.f32.mrb[0].mxu0
      %v1205 = vadd.f32 0.0, %v1204
      %v1206 = vpop.f32.mrb[0].mxu0
      %1207 = vmatprep.mubr.f32.mxu0 0.0
      %1208 = vmatmul.mubr.f32.gmra.mrb[0].mxu0 %v1046
      %v1209 = vpop.f32.mrb[0].mxu0
      %v1210 = vadd.f32 0.0, %v1209
      %v1211 = vpop.f32.mrb[0].mxu0
      %1212 = vmatprep.mubr.f32.mxu0 0.0
      %1213 = vmatmul.mubr.f32.gmra.mrb[0].mxu0 %v1048
      %v1214 = vpop.f32.mrb[0].mxu0
      %v1215 = vadd.f32 0.0, %v1214
      %v1216 = vpop.f32.mrb[0].mxu0
      %1217 = vmatprep.mubr.f32.mxu0 0.0
      %1218 = vmatmul.mubr.f32.gmra.mrb[0].mxu0 %v1050
      %v1219 = vpop.f32.mrb[0].mxu0
      %v1220 = vadd.f32 0.0, %v1219
      %v1221 = vpop.f32.mrb[0].mxu0
      %1222 = vmatprep.mubr.f32.mxu0 0.0
      %1223 = vmatmul.mubr.f32.gmra.mrb[0].mxu0 %v1052
      %v1224 = vpop.f32.mrb[0].mxu0
      %v1225 = vadd.f32 0.0, %v1224
      %v1226 = vpop.f32.mrb[0].mxu0
      %1227 = vmatprep.mubr.f32.mxu0 0.0
      %1228 = vmatmul.mubr.f32.gmra.mrb[0].mxu0 %v1054
      %v1229 = vpop.f32.mrb[0].mxu0
      %v1230 = vadd.f32 0.0, %v1229
      %v1231 = vpop.f32.mrb[0].mxu0
      %1232 = vmatprep.mubr.f32.mxu0 0.0
      %1233 = vmatmul.mubr.f32.gmra.mrb[0].mxu0 %v1056
      %v1234 = vpop.f32.mrb[0].mxu0
      %v1235 = vadd.f32 0.0, %v1234
      %v1236 = vpop.f32.mrb[0].mxu0
      %1237 = vmatprep.mubr.f32.mxu0 0.0
      %1238 = vmatmul.mubr.f32.gmra.mrb[0].mxu0 %v1058
      %v1239 = vpop.f32.mrb[0].mxu0
      %v1240 = vadd.f32 0.0, %v1239
      %v1241 = vpop.f32.mrb[0].mxu0
      %1242 = vmatprep.mubr.f32.mxu0 0.0
      %1243 = vmatmul.mubr.f32.gmra.mrb[0].mxu0 %v1060
      %v1244 = vpop.f32.mrb[0].mxu0
      %v1245 = vadd.f32 0.0, %v1244
      %v1246 = vpop.f32.mrb[0].mxu0
      %1247 = vmatprep.mubr.f32.mxu0 0.0
      %1248 = vmatmul.mubr.f32.gmra.mrb[0].mxu0 %v1062
      %v1249 = vpop.f32.mrb[0].mxu0
      %v1250 = vadd.f32 0.0, %v1249
      %v1251 = vpop.f32.mrb[0].mxu0
      %1252 = vmatprep.mubr.f32.mxu0 0.0
      %1253 = vmatmul.mubr.f32.gmra.mrb[0].mxu0 %v1064
      %v1254 = vpop.f32.mrb[0].mxu0
      %v1255 = vadd.f32 0.0, %v1254
      %v1256 = vpop.f32.mrb[0].mxu0
      %1257 = vmatprep.mubr.f32.mxu0 0.0
      %1258 = vmatmul.mubr.f32.gmra.mrb[0].mxu0 %v1066
      %v1259 = vpop.f32.mrb[0].mxu0
      %v1260 = vadd.f32 0.0, %v1259
      %v1261 = vpop.f32.mrb[0].mxu0
      %1262 = vmatprep.mubr.f32.mxu0 0.0
      %1263 = vmatmul.mubr.f32.gmra.mrb[0].mxu0 %v1068
      %v1264 = vpop.f32.mrb[0].mxu0
      %v1265 = vadd.f32 0.0, %v1264
      %v1266 = vpop.f32.mrb[0].mxu0
      %1267 = vmatprep.mubr.f32.mxu0 0.0
      %1268 = vmatmul.mubr.f32.gmra.mrb[0].mxu0 %v1070
      %v1269 = vpop.f32.mrb[0].mxu0
      %v1270 = vadd.f32 0.0, %v1269
      %v1271 = vpop.f32.mrb[0].mxu0
      %1272 = vmatprep.mubr.f32.mxu0 0.0
      %1273 = vmatmul.mubr.f32.gmra.mrb[0].mxu0 %v1072
      %v1274 = vpop.f32.mrb[0].mxu0
      %v1275 = vadd.f32 0.0, %v1274
      %v1276 = vpop.f32.mrb[0].mxu0
      %1277 = vmatprep.mubr.f32.mxu0 0.0
      %1278 = vmatmul.mubr.f32.gmra.mrb[0].mxu0 %v1074
      %v1279 = vpop.f32.mrb[0].mxu0
      %v1280 = vadd.f32 0.0, %v1279
      %v1281 = vpop.f32.mrb[0].mxu0
      %1282 = vmatprep.mubr.f32.mxu0 0.0
      %1283 = vmatmul.mubr.f32.gmra.mrb[0].mxu0 %v1076
      %v1284 = vpop.f32.mrb[0].mxu0
      %v1285 = vadd.f32 0.0, %v1284
      %v1286 = vpop.f32.mrb[0].mxu0
      %1287 = vmatprep.mubr.f32.mxu0 0.0
      %1288 = vmatmul.mubr.f32.gmra.mrb[0].mxu0 %v1078
      %v1289 = vpop.f32.mrb[0].mxu0
      %v1290 = vadd.f32 0.0, %v1289
      %v1291 = vpop.f32.mrb[0].mxu0
      %1292 = vmatprep.mubr.f32.mxu0 0.0
      %1293 = vmatmul.mubr.f32.gmra.mrb[0].mxu0 %v1080
      %v1294 = vpop.f32.mrb[0].mxu0
      %v1295 = vadd.f32 0.0, %v1294
      %v1296 = vpop.f32.mrb[0].mxu0
      %1297 = vmatprep.mubr.f32.mxu0 0.0
      %1298 = vmatmul.mubr.f32.gmra.mrb[0].mxu0 %v1082
      %v1299 = vpop.f32.mrb[0].mxu0
      %v1300 = vadd.f32 0.0, %v1299
      %v1301 = vpop.f32.mrb[0].mxu0
      %1302 = vmatprep.mubr.f32.mxu0 0.0
      %1303 = vmatmul.mubr.f32.gmra.mrb[0].mxu0 %v1084
      %v1304 = vpop.f32.mrb[0].mxu0
      %v1305 = vadd.f32 0.0, %v1304
      %v1306 = vpop.f32.mrb[0].mxu0
      %1307 = vmatprep.mubr.f32.mxu0 0.0
      %1308 = vmatmul.mubr.f32.gmra.mrb[0].mxu0 %v1086
      %v1309 = vpop.f32.mrb[0].mxu0
      %v1310 = vadd.f32 0.0, %v1309
      %v1311 = vpop.f32.mrb[0].mxu0
      %1312 = vmatprep.mubr.f32.mxu0 0.0
      %1313 = vmatmul.mubr.f32.gmra.mrb[0].mxu0 %v1088
      %v1314 = vpop.f32.mrb[0].mxu0
      %v1315 = vadd.f32 0.0, %v1314
      %v1316 = vpop.f32.mrb[0].mxu0
      %1317 = vdwg.mxu0
      %v1318 = vadd.f32 %v785, %v1160
      %v1319 = vadd.f32 %v790, %v1165
      %v1320 = vadd.f32 %v795, %v1170
      %v1321 = vadd.f32 %v800, %v1175
      %v1322 = vadd.f32 %v805, %v1180
      %v1323 = vadd.f32 %v810, %v1185
      %v1324 = vadd.f32 %v815, %v1190
      %v1325 = vadd.f32 %v820, %v1195
      %v1326 = vadd.f32 %v825, %v1200
      %v1327 = vadd.f32 %v830, %v1205
      %v1328 = vadd.f32 %v835, %v1210
      %v1329 = vadd.f32 %v840, %v1215
      %v1330 = vadd.f32 %v845, %v1220
      %v1331 = vadd.f32 %v850, %v1225
      %v1332 = vadd.f32 %v855, %v1230
      %v1333 = vadd.f32 %v860, %v1235
      %v1334 = vadd.f32 %v865, %v1240
      %v1335 = vadd.f32 %v870, %v1245
      %v1336 = vadd.f32 %v875, %v1250
      %v1337 = vadd.f32 %v880, %v1255
      %v1338 = vadd.f32 %v885, %v1260
      %v1339 = vadd.f32 %v890, %v1265
      %v1340 = vadd.f32 %v895, %v1270
      %v1341 = vadd.f32 %v900, %v1275
      %v1342 = vadd.f32 %v905, %v1280
      %v1343 = vadd.f32 %v910, %v1285
      %v1344 = vadd.f32 %v915, %v1290
      %v1345 = vadd.f32 %v920, %v1295
      %v1346 = vadd.f32 %v925, %v1300
      %v1347 = vadd.f32 %v930, %v1305
      %v1348 = vadd.f32 %v935, %v1310
      %v1349 = vadd.f32 %v940, %v1315
      %s1350 = scalar_lea.vmem %s1, 12
      %v1351 = vld [vmem:[%s1350] sm:$0xf]
      %v1353 = vsel %vm357, %v219, 0
      %v1356 = vsel %vm357, %v220, 0
      %v1359 = vsel %vm422, %v1351, 0
      %1361 = vmatprep.subr.mxu0 0.0
      %1362 = vmatpush1.msra.mxu0 %v1359
      %1363 = vmatprep.subr.mxu0 0.0
      %1364 = vmatpush1.msra.mxu0 0.0
      %1365 = vmatprep.subr.mxu0 0.0
      %1366 = vmatpush1.msra.mxu0 0.0
      %1367 = vmatprep.subr.mxu0 0.0
      %1368 = vmatpush1.msra.mxu0 0.0
      %1369 = vmatprep.subr.mxu0 0.0
      %1370 = vmatpush1.msra.mxu0 0.0
      %1371 = vmatprep.subr.mxu0 0.0
      %1372 = vmatpush1.msra.mxu0 0.0
      %1373 = vmatprep.subr.mxu0 0.0
      %1374 = vmatpush1.msra.mxu0 0.0
      %1375 = vmatprep.subr.mxu0 0.0
      %1376 = vmatpush1.msra.mxu0 0.0
      %1377 = vmatprep.subr.mxu0 0.0
      %1378 = vmatpush1.msra.mxu0 0.0
      %1379 = vmatprep.subr.mxu0 0.0
      %1380 = vmatpush1.msra.mxu0 0.0
      %1381 = vmatprep.subr.mxu0 0.0
      %1382 = vmatpush1.msra.mxu0 0.0
      %1383 = vmatprep.subr.mxu0 0.0
      %1384 = vmatpush1.msra.mxu0 0.0
      %1385 = vmatprep.subr.mxu0 0.0
      %1386 = vmatpush1.msra.mxu0 0.0
      %1387 = vmatprep.subr.mxu0 0.0
      %1388 = vmatpush1.msra.mxu0 0.0
      %1389 = vmatprep.subr.mxu0 0.0
      %1390 = vmatpush1.msra.mxu0 0.0
      %1391 = vmatprep.subr.mxu0 0.0
      %1392 = vmatpush1.msra.mxu0 0.0
      %1393 = vmatprep.subr.mxu0 0.0
      %1394 = vmatpush1.msra.mxu0 0.0
      %1395 = vmatprep.subr.mxu0 0.0
      %1396 = vmatpush1.msra.mxu0 0.0
      %1397 = vmatprep.subr.mxu0 0.0
      %1398 = vmatpush1.msra.mxu0 0.0
      %1399 = vmatprep.subr.mxu0 0.0
      %1400 = vmatpush1.msra.mxu0 0.0
      %1401 = vmatprep.subr.mxu0 0.0
      %1402 = vmatpush1.msra.mxu0 0.0
      %1403 = vmatprep.subr.mxu0 0.0
      %1404 = vmatpush1.msra.mxu0 0.0
      %1405 = vmatprep.subr.mxu0 0.0
      %1406 = vmatpush1.msra.mxu0 0.0
      %1407 = vmatprep.subr.mxu0 0.0
      %1408 = vmatpush1.msra.mxu0 0.0
      %1409 = vmatprep.subr.mxu0 0.0
      %1410 = vmatpush1.msra.mxu0 0.0
      %1411 = vmatprep.subr.mxu0 0.0
      %1412 = vmatpush1.msra.mxu0 0.0
      %1413 = vmatprep.subr.mxu0 0.0
      %1414 = vmatpush1.msra.mxu0 0.0
      %1415 = vmatprep.subr.mxu0 0.0
      %1416 = vmatpush1.msra.mxu0 0.0
      %1417 = vmatprep.subr.mxu0 0.0
      %1418 = vmatpush1.msra.mxu0 0.0
      %1419 = vmatprep.subr.mxu0 0.0
      %1420 = vmatpush1.msra.mxu0 0.0
      %1421 = vmatprep.subr.mxu0 0.0
      %1422 = vmatpush1.msra.mxu0 0.0
      %1423 = vmatprep.subr.mxu0 0.0
      %1424 = vmatpush1.msra.mxu0 0.0
      %1425 = vmatprep.mubr.f32.mxu0 0.0
      %1426 = vmatmul.mubr.f32.gmra.mrb[0].mxu0 %v655
      %v1427 = vpop.f32.mrb[0].mxu0
      %v1428 = vadd.f32 0.0, %v1427
      %v1429 = vpop.f32.mrb[0].mxu0
      %1430 = vmatprep.mubr.f32.mxu0 0.0
      %1431 = vmatmul.mubr.f32.gmra.mrb[0].mxu0 %v657
      %v1432 = vpop.f32.mrb[0].mxu0
      %v1433 = vadd.f32 0.0, %v1432
      %v1434 = vpop.f32.mrb[0].mxu0
      %1435 = vmatprep.mubr.f32.mxu0 0.0
      %1436 = vmatmul.mubr.f32.gmra.mrb[0].mxu0 %v659
      %v1437 = vpop.f32.mrb[0].mxu0
      %v1438 = vadd.f32 0.0, %v1437
      %v1439 = vpop.f32.mrb[0].mxu0
      %1440 = vmatprep.mubr.f32.mxu0 0.0
      %1441 = vmatmul.mubr.f32.gmra.mrb[0].mxu0 %v661
      %v1442 = vpop.f32.mrb[0].mxu0
      %v1443 = vadd.f32 0.0, %v1442
      %v1444 = vpop.f32.mrb[0].mxu0
      %1445 = vmatprep.mubr.f32.mxu0 0.0
      %1446 = vmatmul.mubr.f32.gmra.mrb[0].mxu0 %v663
      %v1447 = vpop.f32.mrb[0].mxu0
      %v1448 = vadd.f32 0.0, %v1447
      %v1449 = vpop.f32.mrb[0].mxu0
      %1450 = vmatprep.mubr.f32.mxu0 0.0
      %1451 = vmatmul.mubr.f32.gmra.mrb[0].mxu0 %v665
      %v1452 = vpop.f32.mrb[0].mxu0
      %v1453 = vadd.f32 0.0, %v1452
      %v1454 = vpop.f32.mrb[0].mxu0
      %1455 = vmatprep.mubr.f32.mxu0 0.0
      %1456 = vmatmul.mubr.f32.gmra.mrb[0].mxu0 %v667
      %v1457 = vpop.f32.mrb[0].mxu0
      %v1458 = vadd.f32 0.0, %v1457
      %v1459 = vpop.f32.mrb[0].mxu0
      %1460 = vmatprep.mubr.f32.mxu0 0.0
      %1461 = vmatmul.mubr.f32.gmra.mrb[0].mxu0 %v669
      %v1462 = vpop.f32.mrb[0].mxu0
      %v1463 = vadd.f32 0.0, %v1462
      %v1464 = vpop.f32.mrb[0].mxu0
      %1465 = vmatprep.mubr.f32.mxu0 0.0
      %1466 = vmatmul.mubr.f32.gmra.mrb[0].mxu0 %v671
      %v1467 = vpop.f32.mrb[0].mxu0
      %v1468 = vadd.f32 0.0, %v1467
      %v1469 = vpop.f32.mrb[0].mxu0
      %1470 = vmatprep.mubr.f32.mxu0 0.0
      %1471 = vmatmul.mubr.f32.gmra.mrb[0].mxu0 %v673
      %v1472 = vpop.f32.mrb[0].mxu0
      %v1473 = vadd.f32 0.0, %v1472
      %v1474 = vpop.f32.mrb[0].mxu0
      %1475 = vmatprep.mubr.f32.mxu0 0.0
      %1476 = vmatmul.mubr.f32.gmra.mrb[0].mxu0 %v675
      %v1477 = vpop.f32.mrb[0].mxu0
      %v1478 = vadd.f32 0.0, %v1477
      %v1479 = vpop.f32.mrb[0].mxu0
      %1480 = vmatprep.mubr.f32.mxu0 0.0
      %1481 = vmatmul.mubr.f32.gmra.mrb[0].mxu0 %v677
      %v1482 = vpop.f32.mrb[0].mxu0
      %v1483 = vadd.f32 0.0, %v1482
      %v1484 = vpop.f32.mrb[0].mxu0
      %1485 = vmatprep.mubr.f32.mxu0 0.0
      %1486 = vmatmul.mubr.f32.gmra.mrb[0].mxu0 %v679
      %v1487 = vpop.f32.mrb[0].mxu0
      %v1488 = vadd.f32 0.0, %v1487
      %v1489 = vpop.f32.mrb[0].mxu0
      %1490 = vmatprep.mubr.f32.mxu0 0.0
      %1491 = vmatmul.mubr.f32.gmra.mrb[0].mxu0 %v681
      %v1492 = vpop.f32.mrb[0].mxu0
      %v1493 = vadd.f32 0.0, %v1492
      %v1494 = vpop.f32.mrb[0].mxu0
      %1495 = vmatprep.mubr.f32.mxu0 0.0
      %1496 = vmatmul.mubr.f32.gmra.mrb[0].mxu0 %v683
      %v1497 = vpop.f32.mrb[0].mxu0
      %v1498 = vadd.f32 0.0, %v1497
      %v1499 = vpop.f32.mrb[0].mxu0
      %1500 = vmatprep.mubr.f32.mxu0 0.0
      %1501 = vmatmul.mubr.f32.gmra.mrb[0].mxu0 %v685
      %v1502 = vpop.f32.mrb[0].mxu0
      %v1503 = vadd.f32 0.0, %v1502
      %v1504 = vpop.f32.mrb[0].mxu0
      %1505 = vmatprep.mubr.f32.mxu0 0.0
      %1506 = vmatmul.mubr.f32.gmra.mrb[0].mxu0 %v687
      %v1507 = vpop.f32.mrb[0].mxu0
      %v1508 = vadd.f32 0.0, %v1507
      %v1509 = vpop.f32.mrb[0].mxu0
      %1510 = vmatprep.mubr.f32.mxu0 0.0
      %1511 = vmatmul.mubr.f32.gmra.mrb[0].mxu0 %v689
      %v1512 = vpop.f32.mrb[0].mxu0
      %v1513 = vadd.f32 0.0, %v1512
      %v1514 = vpop.f32.mrb[0].mxu0
      %1515 = vmatprep.mubr.f32.mxu0 0.0
      %1516 = vmatmul.mubr.f32.gmra.mrb[0].mxu0 %v691
      %v1517 = vpop.f32.mrb[0].mxu0
      %v1518 = vadd.f32 0.0, %v1517
      %v1519 = vpop.f32.mrb[0].mxu0
      %1520 = vmatprep.mubr.f32.mxu0 0.0
      %1521 = vmatmul.mubr.f32.gmra.mrb[0].mxu0 %v693
      %v1522 = vpop.f32.mrb[0].mxu0
      %v1523 = vadd.f32 0.0, %v1522
      %v1524 = vpop.f32.mrb[0].mxu0
      %1525 = vmatprep.mubr.f32.mxu0 0.0
      %1526 = vmatmul.mubr.f32.gmra.mrb[0].mxu0 %v695
      %v1527 = vpop.f32.mrb[0].mxu0
      %v1528 = vadd.f32 0.0, %v1527
      %v1529 = vpop.f32.mrb[0].mxu0
      %1530 = vmatprep.mubr.f32.mxu0 0.0
      %1531 = vmatmul.mubr.f32.gmra.mrb[0].mxu0 %v697
      %v1532 = vpop.f32.mrb[0].mxu0
      %v1533 = vadd.f32 0.0, %v1532
      %v1534 = vpop.f32.mrb[0].mxu0
      %1535 = vmatprep.mubr.f32.mxu0 0.0
      %1536 = vmatmul.mubr.f32.gmra.mrb[0].mxu0 %v699
      %v1537 = vpop.f32.mrb[0].mxu0
      %v1538 = vadd.f32 0.0, %v1537
      %v1539 = vpop.f32.mrb[0].mxu0
      %1540 = vmatprep.mubr.f32.mxu0 0.0
      %1541 = vmatmul.mubr.f32.gmra.mrb[0].mxu0 %v701
      %v1542 = vpop.f32.mrb[0].mxu0
      %v1543 = vadd.f32 0.0, %v1542
      %v1544 = vpop.f32.mrb[0].mxu0
      %1545 = vmatprep.mubr.f32.mxu0 0.0
      %1546 = vmatmul.mubr.f32.gmra.mrb[0].mxu0 %v703
      %v1547 = vpop.f32.mrb[0].mxu0
      %v1548 = vadd.f32 0.0, %v1547
      %v1549 = vpop.f32.mrb[0].mxu0
      %1550 = vmatprep.mubr.f32.mxu0 0.0
      %1551 = vmatmul.mubr.f32.gmra.mrb[0].mxu0 %v705
      %v1552 = vpop.f32.mrb[0].mxu0
      %v1553 = vadd.f32 0.0, %v1552
      %v1554 = vpop.f32.mrb[0].mxu0
      %1555 = vmatprep.mubr.f32.mxu0 0.0
      %1556 = vmatmul.mubr.f32.gmra.mrb[0].mxu0 %v707
      %v1557 = vpop.f32.mrb[0].mxu0
      %v1558 = vadd.f32 0.0, %v1557
      %v1559 = vpop.f32.mrb[0].mxu0
      %1560 = vmatprep.mubr.f32.mxu0 0.0
      %1561 = vmatmul.mubr.f32.gmra.mrb[0].mxu0 %v709
      %v1562 = vpop.f32.mrb[0].mxu0
      %v1563 = vadd.f32 0.0, %v1562
      %v1564 = vpop.f32.mrb[0].mxu0
      %1565 = vmatprep.mubr.f32.mxu0 0.0
      %1566 = vmatmul.mubr.f32.gmra.mrb[0].mxu0 %v711
      %v1567 = vpop.f32.mrb[0].mxu0
      %v1568 = vadd.f32 0.0, %v1567
      %v1569 = vpop.f32.mrb[0].mxu0
      %1570 = vmatprep.mubr.f32.mxu0 0.0
      %1571 = vmatmul.mubr.f32.gmra.mrb[0].mxu0 %v713
      %v1572 = vpop.f32.mrb[0].mxu0
      %v1573 = vadd.f32 0.0, %v1572
      %v1574 = vpop.f32.mrb[0].mxu0
      %1575 = vmatprep.mubr.f32.mxu0 0.0
      %1576 = vmatmul.mubr.f32.gmra.mrb[0].mxu0 %v1353
      %v1577 = vpop.f32.mrb[0].mxu0
      %v1578 = vadd.f32 0.0, %v1577
      %v1579 = vpop.f32.mrb[0].mxu0
      %1580 = vmatprep.mubr.f32.mxu0 0.0
      %1581 = vmatmul.mubr.f32.gmra.mrb[0].mxu0 %v1356
      %v1582 = vpop.f32.mrb[0].mxu0
      %v1583 = vadd.f32 0.0, %v1582
      %v1584 = vpop.f32.mrb[0].mxu0
      %1585 = vdwg.mxu0
      %v1586 = vadd.f32 %v1318, %v1428
      %v1587 = vadd.f32 %v1319, %v1433
      %v1588 = vadd.f32 %v1320, %v1438
      %v1589 = vadd.f32 %v1321, %v1443
      %v1590 = vadd.f32 %v1322, %v1448
      %v1591 = vadd.f32 %v1323, %v1453
      %v1592 = vadd.f32 %v1324, %v1458
      %v1593 = vadd.f32 %v1325, %v1463
      %v1594 = vadd.f32 %v1326, %v1468
      %v1595 = vadd.f32 %v1327, %v1473
      %v1596 = vadd.f32 %v1328, %v1478
      %v1597 = vadd.f32 %v1329, %v1483
      %v1598 = vadd.f32 %v1330, %v1488
      %v1599 = vadd.f32 %v1331, %v1493
      %v1600 = vadd.f32 %v1332, %v1498
      %v1601 = vadd.f32 %v1333, %v1503
      %v1602 = vadd.f32 %v1334, %v1508
      %v1603 = vadd.f32 %v1335, %v1513
      %v1604 = vadd.f32 %v1336, %v1518
      %v1605 = vadd.f32 %v1337, %v1523
      %v1606 = vadd.f32 %v1338, %v1528
      %v1607 = vadd.f32 %v1339, %v1533
      %v1608 = vadd.f32 %v1340, %v1538
      %v1609 = vadd.f32 %v1341, %v1543
      %v1610 = vadd.f32 %v1342, %v1548
      %v1611 = vadd.f32 %v1343, %v1553
      %v1612 = vadd.f32 %v1344, %v1558
      %v1613 = vadd.f32 %v1345, %v1563
      %v1614 = vadd.f32 %v1346, %v1568
      %v1615 = vadd.f32 %v1347, %v1573
      %v1616 = vadd.f32 %v1348, %v1578
      %v1617 = vadd.f32 %v1349, %v1583
      %v1619 = vrot.slane %v219, 1
      %v1620 = vrot.slane %v220, 1
      %v1621 = vsel %vm274, %v1619, %v1620
      %v1622 = vrot.slane %v221, 1
      %v1623 = vsel %vm274, %v1620, %v1622
      %s1624 = scalar_lea.vmem %s1, 16
      %v1625 = vld [vmem:[%s1624] sm:$0xf]
      %v1626 = vsel %vm357, %v1621, 0
      %v1628 = vsel %vm357, %v1623, 0
      %v1631 = vsel %vm422, %v1625, 0
      %1633 = vmatprep.subr.mxu0 0.0
      %1634 = vmatpush1.msra.mxu0 %v1631
      %1635 = vmatprep.subr.mxu0 0.0
      %1636 = vmatpush1.msra.mxu0 0.0
      %1637 = vmatprep.subr.mxu0 0.0
      %1638 = vmatpush1.msra.mxu0 0.0
      %1639 = vmatprep.subr.mxu0 0.0
      %1640 = vmatpush1.msra.mxu0 0.0
      %1641 = vmatprep.subr.mxu0 0.0
      %1642 = vmatpush1.msra.mxu0 0.0
      %1643 = vmatprep.subr.mxu0 0.0
      %1644 = vmatpush1.msra.mxu0 0.0
      %1645 = vmatprep.subr.mxu0 0.0
      %1646 = vmatpush1.msra.mxu0 0.0
      %1647 = vmatprep.subr.mxu0 0.0
      %1648 = vmatpush1.msra.mxu0 0.0
      %1649 = vmatprep.subr.mxu0 0.0
      %1650 = vmatpush1.msra.mxu0 0.0
      %1651 = vmatprep.subr.mxu0 0.0
      %1652 = vmatpush1.msra.mxu0 0.0
      %1653 = vmatprep.subr.mxu0 0.0
      %1654 = vmatpush1.msra.mxu0 0.0
      %1655 = vmatprep.subr.mxu0 0.0
      %1656 = vmatpush1.msra.mxu0 0.0
      %1657 = vmatprep.subr.mxu0 0.0
      %1658 = vmatpush1.msra.mxu0 0.0
      %1659 = vmatprep.subr.mxu0 0.0
      %1660 = vmatpush1.msra.mxu0 0.0
      %1661 = vmatprep.subr.mxu0 0.0
      %1662 = vmatpush1.msra.mxu0 0.0
      %1663 = vmatprep.subr.mxu0 0.0
      %1664 = vmatpush1.msra.mxu0 0.0
      %1665 = vmatprep.subr.mxu0 0.0
      %1666 = vmatpush1.msra.mxu0 0.0
      %1667 = vmatprep.subr.mxu0 0.0
      %1668 = vmatpush1.msra.mxu0 0.0
      %1669 = vmatprep.subr.mxu0 0.0
      %1670 = vmatpush1.msra.mxu0 0.0
      %1671 = vmatprep.subr.mxu0 0.0
      %1672 = vmatpush1.msra.mxu0 0.0
      %1673 = vmatprep.subr.mxu0 0.0
      %1674 = vmatpush1.msra.mxu0 0.0
      %1675 = vmatprep.subr.mxu0 0.0
      %1676 = vmatpush1.msra.mxu0 0.0
      %1677 = vmatprep.subr.mxu0 0.0
      %1678 = vmatpush1.msra.mxu0 0.0
      %1679 = vmatprep.subr.mxu0 0.0
      %1680 = vmatpush1.msra.mxu0 0.0
      %1681 = vmatprep.subr.mxu0 0.0
      %1682 = vmatpush1.msra.mxu0 0.0
      %1683 = vmatprep.subr.mxu0 0.0
      %1684 = vmatpush1.msra.mxu0 0.0
      %1685 = vmatprep.subr.mxu0 0.0
      %1686 = vmatpush1.msra.mxu0 0.0
      %1687 = vmatprep.subr.mxu0 0.0
      %1688 = vmatpush1.msra.mxu0 0.0
      %1689 = vmatprep.subr.mxu0 0.0
      %1690 = vmatpush1.msra.mxu0 0.0
      %1691 = vmatprep.subr.mxu0 0.0
      %1692 = vmatpush1.msra.mxu0 0.0
      %1693 = vmatprep.subr.mxu0 0.0
      %1694 = vmatpush1.msra.mxu0 0.0
      %1695 = vmatprep.subr.mxu0 0.0
      %1696 = vmatpush1.msra.mxu0 0.0
      %1697 = vmatprep.mubr.f32.mxu0 0.0
      %1698 = vmatmul.mubr.f32.gmra.mrb[0].mxu0 %v362
      %v1699 = vpop.f32.mrb[0].mxu0
      %v1700 = vadd.f32 0.0, %v1699
      %v1701 = vpop.f32.mrb[0].mxu0
      %1702 = vmatprep.mubr.f32.mxu0 0.0
      %1703 = vmatmul.mubr.f32.gmra.mrb[0].mxu0 %v364
      %v1704 = vpop.f32.mrb[0].mxu0
      %v1705 = vadd.f32 0.0, %v1704
      %v1706 = vpop.f32.mrb[0].mxu0
      %1707 = vmatprep.mubr.f32.mxu0 0.0
      %1708 = vmatmul.mubr.f32.gmra.mrb[0].mxu0 %v366
      %v1709 = vpop.f32.mrb[0].mxu0
      %v1710 = vadd.f32 0.0, %v1709
      %v1711 = vpop.f32.mrb[0].mxu0
      %1712 = vmatprep.mubr.f32.mxu0 0.0
      %1713 = vmatmul.mubr.f32.gmra.mrb[0].mxu0 %v368
      %v1714 = vpop.f32.mrb[0].mxu0
      %v1715 = vadd.f32 0.0, %v1714
      %v1716 = vpop.f32.mrb[0].mxu0
      %1717 = vmatprep.mubr.f32.mxu0 0.0
      %1718 = vmatmul.mubr.f32.gmra.mrb[0].mxu0 %v370
      %v1719 = vpop.f32.mrb[0].mxu0
      %v1720 = vadd.f32 0.0, %v1719
      %v1721 = vpop.f32.mrb[0].mxu0
      %1722 = vmatprep.mubr.f32.mxu0 0.0
      %1723 = vmatmul.mubr.f32.gmra.mrb[0].mxu0 %v372
      %v1724 = vpop.f32.mrb[0].mxu0
      %v1725 = vadd.f32 0.0, %v1724
      %v1726 = vpop.f32.mrb[0].mxu0
      %1727 = vmatprep.mubr.f32.mxu0 0.0
      %1728 = vmatmul.mubr.f32.gmra.mrb[0].mxu0 %v374
      %v1729 = vpop.f32.mrb[0].mxu0
      %v1730 = vadd.f32 0.0, %v1729
      %v1731 = vpop.f32.mrb[0].mxu0
      %1732 = vmatprep.mubr.f32.mxu0 0.0
      %1733 = vmatmul.mubr.f32.gmra.mrb[0].mxu0 %v376
      %v1734 = vpop.f32.mrb[0].mxu0
      %v1735 = vadd.f32 0.0, %v1734
      %v1736 = vpop.f32.mrb[0].mxu0
      %1737 = vmatprep.mubr.f32.mxu0 0.0
      %1738 = vmatmul.mubr.f32.gmra.mrb[0].mxu0 %v378
      %v1739 = vpop.f32.mrb[0].mxu0
      %v1740 = vadd.f32 0.0, %v1739
      %v1741 = vpop.f32.mrb[0].mxu0
      %1742 = vmatprep.mubr.f32.mxu0 0.0
      %1743 = vmatmul.mubr.f32.gmra.mrb[0].mxu0 %v380
      %v1744 = vpop.f32.mrb[0].mxu0
      %v1745 = vadd.f32 0.0, %v1744
      %v1746 = vpop.f32.mrb[0].mxu0
      %1747 = vmatprep.mubr.f32.mxu0 0.0
      %1748 = vmatmul.mubr.f32.gmra.mrb[0].mxu0 %v382
      %v1749 = vpop.f32.mrb[0].mxu0
      %v1750 = vadd.f32 0.0, %v1749
      %v1751 = vpop.f32.mrb[0].mxu0
      %1752 = vmatprep.mubr.f32.mxu0 0.0
      %1753 = vmatmul.mubr.f32.gmra.mrb[0].mxu0 %v384
      %v1754 = vpop.f32.mrb[0].mxu0
      %v1755 = vadd.f32 0.0, %v1754
      %v1756 = vpop.f32.mrb[0].mxu0
      %1757 = vmatprep.mubr.f32.mxu0 0.0
      %1758 = vmatmul.mubr.f32.gmra.mrb[0].mxu0 %v386
      %v1759 = vpop.f32.mrb[0].mxu0
      %v1760 = vadd.f32 0.0, %v1759
      %v1761 = vpop.f32.mrb[0].mxu0
      %1762 = vmatprep.mubr.f32.mxu0 0.0
      %1763 = vmatmul.mubr.f32.gmra.mrb[0].mxu0 %v388
      %v1764 = vpop.f32.mrb[0].mxu0
      %v1765 = vadd.f32 0.0, %v1764
      %v1766 = vpop.f32.mrb[0].mxu0
      %1767 = vmatprep.mubr.f32.mxu0 0.0
      %1768 = vmatmul.mubr.f32.gmra.mrb[0].mxu0 %v390
      %v1769 = vpop.f32.mrb[0].mxu0
      %v1770 = vadd.f32 0.0, %v1769
      %v1771 = vpop.f32.mrb[0].mxu0
      %1772 = vmatprep.mubr.f32.mxu0 0.0
      %1773 = vmatmul.mubr.f32.gmra.mrb[0].mxu0 %v392
      %v1774 = vpop.f32.mrb[0].mxu0
      %v1775 = vadd.f32 0.0, %v1774
      %v1776 = vpop.f32.mrb[0].mxu0
      %1777 = vmatprep.mubr.f32.mxu0 0.0
      %1778 = vmatmul.mubr.f32.gmra.mrb[0].mxu0 %v394
      %v1779 = vpop.f32.mrb[0].mxu0
      %v1780 = vadd.f32 0.0, %v1779
      %v1781 = vpop.f32.mrb[0].mxu0
      %1782 = vmatprep.mubr.f32.mxu0 0.0
      %1783 = vmatmul.mubr.f32.gmra.mrb[0].mxu0 %v396
      %v1784 = vpop.f32.mrb[0].mxu0
      %v1785 = vadd.f32 0.0, %v1784
      %v1786 = vpop.f32.mrb[0].mxu0
      %1787 = vmatprep.mubr.f32.mxu0 0.0
      %1788 = vmatmul.mubr.f32.gmra.mrb[0].mxu0 %v398
      %v1789 = vpop.f32.mrb[0].mxu0
      %v1790 = vadd.f32 0.0, %v1789
      %v1791 = vpop.f32.mrb[0].mxu0
      %1792 = vmatprep.mubr.f32.mxu0 0.0
      %1793 = vmatmul.mubr.f32.gmra.mrb[0].mxu0 %v400
      %v1794 = vpop.f32.mrb[0].mxu0
      %v1795 = vadd.f32 0.0, %v1794
      %v1796 = vpop.f32.mrb[0].mxu0
      %1797 = vmatprep.mubr.f32.mxu0 0.0
      %1798 = vmatmul.mubr.f32.gmra.mrb[0].mxu0 %v402
      %v1799 = vpop.f32.mrb[0].mxu0
      %v1800 = vadd.f32 0.0, %v1799
      %v1801 = vpop.f32.mrb[0].mxu0
      %1802 = vmatprep.mubr.f32.mxu0 0.0
      %1803 = vmatmul.mubr.f32.gmra.mrb[0].mxu0 %v404
      %v1804 = vpop.f32.mrb[0].mxu0
      %v1805 = vadd.f32 0.0, %v1804
      %v1806 = vpop.f32.mrb[0].mxu0
      %1807 = vmatprep.mubr.f32.mxu0 0.0
      %1808 = vmatmul.mubr.f32.gmra.mrb[0].mxu0 %v406
      %v1809 = vpop.f32.mrb[0].mxu0
      %v1810 = vadd.f32 0.0, %v1809
      %v1811 = vpop.f32.mrb[0].mxu0
      %1812 = vmatprep.mubr.f32.mxu0 0.0
      %1813 = vmatmul.mubr.f32.gmra.mrb[0].mxu0 %v408
      %v1814 = vpop.f32.mrb[0].mxu0
      %v1815 = vadd.f32 0.0, %v1814
      %v1816 = vpop.f32.mrb[0].mxu0
      %1817 = vmatprep.mubr.f32.mxu0 0.0
      %1818 = vmatmul.mubr.f32.gmra.mrb[0].mxu0 %v410
      %v1819 = vpop.f32.mrb[0].mxu0
      %v1820 = vadd.f32 0.0, %v1819
      %v1821 = vpop.f32.mrb[0].mxu0
      %1822 = vmatprep.mubr.f32.mxu0 0.0
      %1823 = vmatmul.mubr.f32.gmra.mrb[0].mxu0 %v412
      %v1824 = vpop.f32.mrb[0].mxu0
      %v1825 = vadd.f32 0.0, %v1824
      %v1826 = vpop.f32.mrb[0].mxu0
      %1827 = vmatprep.mubr.f32.mxu0 0.0
      %1828 = vmatmul.mubr.f32.gmra.mrb[0].mxu0 %v414
      %v1829 = vpop.f32.mrb[0].mxu0
      %v1830 = vadd.f32 0.0, %v1829
      %v1831 = vpop.f32.mrb[0].mxu0
      %1832 = vmatprep.mubr.f32.mxu0 0.0
      %1833 = vmatmul.mubr.f32.gmra.mrb[0].mxu0 %v416
      %v1834 = vpop.f32.mrb[0].mxu0
      %v1835 = vadd.f32 0.0, %v1834
      %v1836 = vpop.f32.mrb[0].mxu0
      %1837 = vmatprep.mubr.f32.mxu0 0.0
      %1838 = vmatmul.mubr.f32.gmra.mrb[0].mxu0 %v418
      %v1839 = vpop.f32.mrb[0].mxu0
      %v1840 = vadd.f32 0.0, %v1839
      %v1841 = vpop.f32.mrb[0].mxu0
      %1842 = vmatprep.mubr.f32.mxu0 0.0
      %1843 = vmatmul.mubr.f32.gmra.mrb[0].mxu0 %v420
      %v1844 = vpop.f32.mrb[0].mxu0
      %v1845 = vadd.f32 0.0, %v1844
      %v1846 = vpop.f32.mrb[0].mxu0
      %1847 = vmatprep.mubr.f32.mxu0 0.0
      %1848 = vmatmul.mubr.f32.gmra.mrb[0].mxu0 %v1626
      %v1849 = vpop.f32.mrb[0].mxu0
      %v1850 = vadd.f32 0.0, %v1849
      %v1851 = vpop.f32.mrb[0].mxu0
      %1852 = vmatprep.mubr.f32.mxu0 0.0
      %1853 = vmatmul.mubr.f32.gmra.mrb[0].mxu0 %v1628
      %v1854 = vpop.f32.mrb[0].mxu0
      %v1855 = vadd.f32 0.0, %v1854
      %v1856 = vpop.f32.mrb[0].mxu0
      %1857 = vdwg.mxu0
      %v1858 = vadd.f32 %v1586, %v1700
      %v1859 = vadd.f32 %v1587, %v1705
      %v1860 = vadd.f32 %v1588, %v1710
      %v1861 = vadd.f32 %v1589, %v1715
      %v1862 = vadd.f32 %v1590, %v1720
      %v1863 = vadd.f32 %v1591, %v1725
      %v1864 = vadd.f32 %v1592, %v1730
      %v1865 = vadd.f32 %v1593, %v1735
      %v1866 = vadd.f32 %v1594, %v1740
      %v1867 = vadd.f32 %v1595, %v1745
      %v1868 = vadd.f32 %v1596, %v1750
      %v1869 = vadd.f32 %v1597, %v1755
      %v1870 = vadd.f32 %v1598, %v1760
      %v1871 = vadd.f32 %v1599, %v1765
      %v1872 = vadd.f32 %v1600, %v1770
      %v1873 = vadd.f32 %v1601, %v1775
      %v1874 = vadd.f32 %v1602, %v1780
      %v1875 = vadd.f32 %v1603, %v1785
      %v1876 = vadd.f32 %v1604, %v1790
      %v1877 = vadd.f32 %v1605, %v1795
      %v1878 = vadd.f32 %v1606, %v1800
      %v1879 = vadd.f32 %v1607, %v1805
      %v1880 = vadd.f32 %v1608, %v1810
      %v1881 = vadd.f32 %v1609, %v1815
      %v1882 = vadd.f32 %v1610, %v1820
      %v1883 = vadd.f32 %v1611, %v1825
      %v1884 = vadd.f32 %v1612, %v1830
      %v1885 = vadd.f32 %v1613, %v1835
      %v1886 = vadd.f32 %v1614, %v1840
      %v1887 = vadd.f32 %v1615, %v1845
      %v1888 = vadd.f32 %v1616, %v1850
      %v1889 = vadd.f32 %v1617, %v1855
      %v1890 = vrot.slane %v219, 2
      %v1891 = vrot.slane %v220, 2
      %v1892 = vsel %vm943, %v1890, %v1891
      %v1893 = vrot.slane %v221, 2
      %v1894 = vsel %vm943, %v1891, %v1893
      %s1895 = scalar_lea.vmem %s1, 20
      %v1896 = vld [vmem:[%s1895] sm:$0xf]
      %v1897 = vsel %vm357, %v1892, 0
      %v1899 = vsel %vm357, %v1894, 0
      %v1902 = vsel %vm422, %v1896, 0
      %1904 = vmatprep.subr.mxu0 0.0
      %1905 = vmatpush1.msra.mxu0 %v1902
      %1906 = vmatprep.subr.mxu0 0.0
      %1907 = vmatpush1.msra.mxu0 0.0
      %1908 = vmatprep.subr.mxu0 0.0
      %1909 = vmatpush1.msra.mxu0 0.0
      %1910 = vmatprep.subr.mxu0 0.0
      %1911 = vmatpush1.msra.mxu0 0.0
      %1912 = vmatprep.subr.mxu0 0.0
      %1913 = vmatpush1.msra.mxu0 0.0
      %1914 = vmatprep.subr.mxu0 0.0
      %1915 = vmatpush1.msra.mxu0 0.0
      %1916 = vmatprep.subr.mxu0 0.0
      %1917 = vmatpush1.msra.mxu0 0.0
      %1918 = vmatprep.subr.mxu0 0.0
      %1919 = vmatpush1.msra.mxu0 0.0
      %1920 = vmatprep.subr.mxu0 0.0
      %1921 = vmatpush1.msra.mxu0 0.0
      %1922 = vmatprep.subr.mxu0 0.0
      %1923 = vmatpush1.msra.mxu0 0.0
      %1924 = vmatprep.subr.mxu0 0.0
      %1925 = vmatpush1.msra.mxu0 0.0
      %1926 = vmatprep.subr.mxu0 0.0
      %1927 = vmatpush1.msra.mxu0 0.0
      %1928 = vmatprep.subr.mxu0 0.0
      %1929 = vmatpush1.msra.mxu0 0.0
      %1930 = vmatprep.subr.mxu0 0.0
      %1931 = vmatpush1.msra.mxu0 0.0
      %1932 = vmatprep.subr.mxu0 0.0
      %1933 = vmatpush1.msra.mxu0 0.0
      %1934 = vmatprep.subr.mxu0 0.0
      %1935 = vmatpush1.msra.mxu0 0.0
      %1936 = vmatprep.subr.mxu0 0.0
      %1937 = vmatpush1.msra.mxu0 0.0
      %1938 = vmatprep.subr.mxu0 0.0
      %1939 = vmatpush1.msra.mxu0 0.0
      %1940 = vmatprep.subr.mxu0 0.0
      %1941 = vmatpush1.msra.mxu0 0.0
      %1942 = vmatprep.subr.mxu0 0.0
      %1943 = vmatpush1.msra.mxu0 0.0
      %1944 = vmatprep.subr.mxu0 0.0
      %1945 = vmatpush1.msra.mxu0 0.0
      %1946 = vmatprep.subr.mxu0 0.0
      %1947 = vmatpush1.msra.mxu0 0.0
      %1948 = vmatprep.subr.mxu0 0.0
      %1949 = vmatpush1.msra.mxu0 0.0
      %1950 = vmatprep.subr.mxu0 0.0
      %1951 = vmatpush1.msra.mxu0 0.0
      %1952 = vmatprep.subr.mxu0 0.0
      %1953 = vmatpush1.msra.mxu0 0.0
      %1954 = vmatprep.subr.mxu0 0.0
      %1955 = vmatpush1.msra.mxu0 0.0
      %1956 = vmatprep.subr.mxu0 0.0
      %1957 = vmatpush1.msra.mxu0 0.0
      %1958 = vmatprep.subr.mxu0 0.0
      %1959 = vmatpush1.msra.mxu0 0.0
      %1960 = vmatprep.subr.mxu0 0.0
      %1961 = vmatpush1.msra.mxu0 0.0
      %1962 = vmatprep.subr.mxu0 0.0
      %1963 = vmatpush1.msra.mxu0 0.0
      %1964 = vmatprep.subr.mxu0 0.0
      %1965 = vmatpush1.msra.mxu0 0.0
      %1966 = vmatprep.subr.mxu0 0.0
      %1967 = vmatpush1.msra.mxu0 0.0
      %1968 = vmatprep.mubr.f32.mxu0 0.0
      %1969 = vmatmul.mubr.f32.gmra.mrb[0].mxu0 %v1030
      %v1970 = vpop.f32.mrb[0].mxu0
      %v1971 = vadd.f32 0.0, %v1970
      %v1972 = vpop.f32.mrb[0].mxu0
      %1973 = vmatprep.mubr.f32.mxu0 0.0
      %1974 = vmatmul.mubr.f32.gmra.mrb[0].mxu0 %v1032
      %v1975 = vpop.f32.mrb[0].mxu0
      %v1976 = vadd.f32 0.0, %v1975
      %v1977 = vpop.f32.mrb[0].mxu0
      %1978 = vmatprep.mubr.f32.mxu0 0.0
      %1979 = vmatmul.mubr.f32.gmra.mrb[0].mxu0 %v1034
      %v1980 = vpop.f32.mrb[0].mxu0
      %v1981 = vadd.f32 0.0, %v1980
      %v1982 = vpop.f32.mrb[0].mxu0
      %1983 = vmatprep.mubr.f32.mxu0 0.0
      %1984 = vmatmul.mubr.f32.gmra.mrb[0].mxu0 %v1036
      %v1985 = vpop.f32.mrb[0].mxu0
      %v1986 = vadd.f32 0.0, %v1985
      %v1987 = vpop.f32.mrb[0].mxu0
      %1988 = vmatprep.mubr.f32.mxu0 0.0
      %1989 = vmatmul.mubr.f32.gmra.mrb[0].mxu0 %v1038
      %v1990 = vpop.f32.mrb[0].mxu0
      %v1991 = vadd.f32 0.0, %v1990
      %v1992 = vpop.f32.mrb[0].mxu0
      %1993 = vmatprep.mubr.f32.mxu0 0.0
      %1994 = vmatmul.mubr.f32.gmra.mrb[0].mxu0 %v1040
      %v1995 = vpop.f32.mrb[0].mxu0
      %v1996 = vadd.f32 0.0, %v1995
      %v1997 = vpop.f32.mrb[0].mxu0
      %1998 = vmatprep.mubr.f32.mxu0 0.0
      %1999 = vmatmul.mubr.f32.gmra.mrb[0].mxu0 %v1042
      %v2000 = vpop.f32.mrb[0].mxu0
      %v2001 = vadd.f32 0.0, %v2000
      %v2002 = vpop.f32.mrb[0].mxu0
      %2003 = vmatprep.mubr.f32.mxu0 0.0
      %2004 = vmatmul.mubr.f32.gmra.mrb[0].mxu0 %v1044
      %v2005 = vpop.f32.mrb[0].mxu0
      %v2006 = vadd.f32 0.0, %v2005
      %v2007 = vpop.f32.mrb[0].mxu0
      %2008 = vmatprep.mubr.f32.mxu0 0.0
      %2009 = vmatmul.mubr.f32.gmra.mrb[0].mxu0 %v1046
      %v2010 = vpop.f32.mrb[0].mxu0
      %v2011 = vadd.f32 0.0, %v2010
      %v2012 = vpop.f32.mrb[0].mxu0
      %2013 = vmatprep.mubr.f32.mxu0 0.0
      %2014 = vmatmul.mubr.f32.gmra.mrb[0].mxu0 %v1048
      %v2015 = vpop.f32.mrb[0].mxu0
      %v2016 = vadd.f32 0.0, %v2015
      %v2017 = vpop.f32.mrb[0].mxu0
      %2018 = vmatprep.mubr.f32.mxu0 0.0
      %2019 = vmatmul.mubr.f32.gmra.mrb[0].mxu0 %v1050
      %v2020 = vpop.f32.mrb[0].mxu0
      %v2021 = vadd.f32 0.0, %v2020
      %v2022 = vpop.f32.mrb[0].mxu0
      %2023 = vmatprep.mubr.f32.mxu0 0.0
      %2024 = vmatmul.mubr.f32.gmra.mrb[0].mxu0 %v1052
      %v2025 = vpop.f32.mrb[0].mxu0
      %v2026 = vadd.f32 0.0, %v2025
      %v2027 = vpop.f32.mrb[0].mxu0
      %2028 = vmatprep.mubr.f32.mxu0 0.0
      %2029 = vmatmul.mubr.f32.gmra.mrb[0].mxu0 %v1054
      %v2030 = vpop.f32.mrb[0].mxu0
      %v2031 = vadd.f32 0.0, %v2030
      %v2032 = vpop.f32.mrb[0].mxu0
      %2033 = vmatprep.mubr.f32.mxu0 0.0
      %2034 = vmatmul.mubr.f32.gmra.mrb[0].mxu0 %v1056
      %v2035 = vpop.f32.mrb[0].mxu0
      %v2036 = vadd.f32 0.0, %v2035
      %v2037 = vpop.f32.mrb[0].mxu0
      %2038 = vmatprep.mubr.f32.mxu0 0.0
      %2039 = vmatmul.mubr.f32.gmra.mrb[0].mxu0 %v1058
      %v2040 = vpop.f32.mrb[0].mxu0
      %v2041 = vadd.f32 0.0, %v2040
      %v2042 = vpop.f32.mrb[0].mxu0
      %2043 = vmatprep.mubr.f32.mxu0 0.0
      %2044 = vmatmul.mubr.f32.gmra.mrb[0].mxu0 %v1060
      %v2045 = vpop.f32.mrb[0].mxu0
      %v2046 = vadd.f32 0.0, %v2045
      %v2047 = vpop.f32.mrb[0].mxu0
      %2048 = vmatprep.mubr.f32.mxu0 0.0
      %2049 = vmatmul.mubr.f32.gmra.mrb[0].mxu0 %v1062
      %v2050 = vpop.f32.mrb[0].mxu0
      %v2051 = vadd.f32 0.0, %v2050
      %v2052 = vpop.f32.mrb[0].mxu0
      %2053 = vmatprep.mubr.f32.mxu0 0.0
      %2054 = vmatmul.mubr.f32.gmra.mrb[0].mxu0 %v1064
      %v2055 = vpop.f32.mrb[0].mxu0
      %v2056 = vadd.f32 0.0, %v2055
      %v2057 = vpop.f32.mrb[0].mxu0
      %2058 = vmatprep.mubr.f32.mxu0 0.0
      %2059 = vmatmul.mubr.f32.gmra.mrb[0].mxu0 %v1066
      %v2060 = vpop.f32.mrb[0].mxu0
      %v2061 = vadd.f32 0.0, %v2060
      %v2062 = vpop.f32.mrb[0].mxu0
      %2063 = vmatprep.mubr.f32.mxu0 0.0
      %2064 = vmatmul.mubr.f32.gmra.mrb[0].mxu0 %v1068
      %v2065 = vpop.f32.mrb[0].mxu0
      %v2066 = vadd.f32 0.0, %v2065
      %v2067 = vpop.f32.mrb[0].mxu0
      %2068 = vmatprep.mubr.f32.mxu0 0.0
      %2069 = vmatmul.mubr.f32.gmra.mrb[0].mxu0 %v1070
      %v2070 = vpop.f32.mrb[0].mxu0
      %v2071 = vadd.f32 0.0, %v2070
      %v2072 = vpop.f32.mrb[0].mxu0
      %2073 = vmatprep.mubr.f32.mxu0 0.0
      %2074 = vmatmul.mubr.f32.gmra.mrb[0].mxu0 %v1072
      %v2075 = vpop.f32.mrb[0].mxu0
      %v2076 = vadd.f32 0.0, %v2075
      %v2077 = vpop.f32.mrb[0].mxu0
      %2078 = vmatprep.mubr.f32.mxu0 0.0
      %2079 = vmatmul.mubr.f32.gmra.mrb[0].mxu0 %v1074
      %v2080 = vpop.f32.mrb[0].mxu0
      %v2081 = vadd.f32 0.0, %v2080
      %v2082 = vpop.f32.mrb[0].mxu0
      %2083 = vmatprep.mubr.f32.mxu0 0.0
      %2084 = vmatmul.mubr.f32.gmra.mrb[0].mxu0 %v1076
      %v2085 = vpop.f32.mrb[0].mxu0
      %v2086 = vadd.f32 0.0, %v2085
      %v2087 = vpop.f32.mrb[0].mxu0
      %2088 = vmatprep.mubr.f32.mxu0 0.0
      %2089 = vmatmul.mubr.f32.gmra.mrb[0].mxu0 %v1078
      %v2090 = vpop.f32.mrb[0].mxu0
      %v2091 = vadd.f32 0.0, %v2090
      %v2092 = vpop.f32.mrb[0].mxu0
      %2093 = vmatprep.mubr.f32.mxu0 0.0
      %2094 = vmatmul.mubr.f32.gmra.mrb[0].mxu0 %v1080
      %v2095 = vpop.f32.mrb[0].mxu0
      %v2096 = vadd.f32 0.0, %v2095
      %v2097 = vpop.f32.mrb[0].mxu0
      %2098 = vmatprep.mubr.f32.mxu0 0.0
      %2099 = vmatmul.mubr.f32.gmra.mrb[0].mxu0 %v1082
      %v2100 = vpop.f32.mrb[0].mxu0
      %v2101 = vadd.f32 0.0, %v2100
      %v2102 = vpop.f32.mrb[0].mxu0
      %2103 = vmatprep.mubr.f32.mxu0 0.0
      %2104 = vmatmul.mubr.f32.gmra.mrb[0].mxu0 %v1084
      %v2105 = vpop.f32.mrb[0].mxu0
      %v2106 = vadd.f32 0.0, %v2105
      %v2107 = vpop.f32.mrb[0].mxu0
      %2108 = vmatprep.mubr.f32.mxu0 0.0
      %2109 = vmatmul.mubr.f32.gmra.mrb[0].mxu0 %v1086
      %v2110 = vpop.f32.mrb[0].mxu0
      %v2111 = vadd.f32 0.0, %v2110
      %v2112 = vpop.f32.mrb[0].mxu0
      %2113 = vmatprep.mubr.f32.mxu0 0.0
      %2114 = vmatmul.mubr.f32.gmra.mrb[0].mxu0 %v1088
      %v2115 = vpop.f32.mrb[0].mxu0
      %v2116 = vadd.f32 0.0, %v2115
      %v2117 = vpop.f32.mrb[0].mxu0
      %2118 = vmatprep.mubr.f32.mxu0 0.0
      %2119 = vmatmul.mubr.f32.gmra.mrb[0].mxu0 %v1897
      %v2120 = vpop.f32.mrb[0].mxu0
      %v2121 = vadd.f32 0.0, %v2120
      %v2122 = vpop.f32.mrb[0].mxu0
      %2123 = vmatprep.mubr.f32.mxu0 0.0
      %2124 = vmatmul.mubr.f32.gmra.mrb[0].mxu0 %v1899
      %v2125 = vpop.f32.mrb[0].mxu0
      %v2126 = vadd.f32 0.0, %v2125
      %v2127 = vpop.f32.mrb[0].mxu0
      %2128 = vdwg.mxu0
      %v2129 = vadd.f32 %v1858, %v1971
      %v2130 = vadd.f32 %v1859, %v1976
      %v2131 = vadd.f32 %v1860, %v1981
      %v2132 = vadd.f32 %v1861, %v1986
      %v2133 = vadd.f32 %v1862, %v1991
      %v2134 = vadd.f32 %v1863, %v1996
      %v2135 = vadd.f32 %v1864, %v2001
      %v2136 = vadd.f32 %v1865, %v2006
      %v2137 = vadd.f32 %v1866, %v2011
      %v2138 = vadd.f32 %v1867, %v2016
      %v2139 = vadd.f32 %v1868, %v2021
      %v2140 = vadd.f32 %v1869, %v2026
      %v2141 = vadd.f32 %v1870, %v2031
      %v2142 = vadd.f32 %v1871, %v2036
      %v2143 = vadd.f32 %v1872, %v2041
      %v2144 = vadd.f32 %v1873, %v2046
      %v2145 = vadd.f32 %v1874, %v2051
      %v2146 = vadd.f32 %v1875, %v2056
      %v2147 = vadd.f32 %v1876, %v2061
      %v2148 = vadd.f32 %v1877, %v2066
      %v2149 = vadd.f32 %v1878, %v2071
      %v2150 = vadd.f32 %v1879, %v2076
      %v2151 = vadd.f32 %v1880, %v2081
      %v2152 = vadd.f32 %v1881, %v2086
      %v2153 = vadd.f32 %v1882, %v2091
      %v2154 = vadd.f32 %v1883, %v2096
      %v2155 = vadd.f32 %v1884, %v2101
      %v2156 = vadd.f32 %v1885, %v2106
      %v2157 = vadd.f32 %v1886, %v2111
      %v2158 = vadd.f32 %v1887, %v2116
      %v2159 = vadd.f32 %v1888, %v2121
      %v2160 = vadd.f32 %v1889, %v2126
      %s2161 = scalar_lea.vmem %s1, 24
      %v2162 = vld [vmem:[%s2161] sm:$0xf]
      %v2164 = vsel %vm357, %v222, 0
      %v2167 = vsel %vm357, %v223, 0
      %v2170 = vsel %vm422, %v2162, 0
      %2172 = vmatprep.subr.mxu0 0.0
      %2173 = vmatpush1.msra.mxu0 %v2170
      %2174 = vmatprep.subr.mxu0 0.0
      %2175 = vmatpush1.msra.mxu0 0.0
      %2176 = vmatprep.subr.mxu0 0.0
      %2177 = vmatpush1.msra.mxu0 0.0
      %2178 = vmatprep.subr.mxu0 0.0
      %2179 = vmatpush1.msra.mxu0 0.0
      %2180 = vmatprep.subr.mxu0 0.0
      %2181 = vmatpush1.msra.mxu0 0.0
      %2182 = vmatprep.subr.mxu0 0.0
      %2183 = vmatpush1.msra.mxu0 0.0
      %2184 = vmatprep.subr.mxu0 0.0
      %2185 = vmatpush1.msra.mxu0 0.0
      %2186 = vmatprep.subr.mxu0 0.0
      %2187 = vmatpush1.msra.mxu0 0.0
      %2188 = vmatprep.subr.mxu0 0.0
      %2189 = vmatpush1.msra.mxu0 0.0
      %2190 = vmatprep.subr.mxu0 0.0
      %2191 = vmatpush1.msra.mxu0 0.0
      %2192 = vmatprep.subr.mxu0 0.0
      %2193 = vmatpush1.msra.mxu0 0.0
      %2194 = vmatprep.subr.mxu0 0.0
      %2195 = vmatpush1.msra.mxu0 0.0
      %2196 = vmatprep.subr.mxu0 0.0
      %2197 = vmatpush1.msra.mxu0 0.0
      %2198 = vmatprep.subr.mxu0 0.0
      %2199 = vmatpush1.msra.mxu0 0.0
      %2200 = vmatprep.subr.mxu0 0.0
      %2201 = vmatpush1.msra.mxu0 0.0
      %2202 = vmatprep.subr.mxu0 0.0
      %2203 = vmatpush1.msra.mxu0 0.0
      %2204 = vmatprep.subr.mxu0 0.0
      %2205 = vmatpush1.msra.mxu0 0.0
      %2206 = vmatprep.subr.mxu0 0.0
      %2207 = vmatpush1.msra.mxu0 0.0
      %2208 = vmatprep.subr.mxu0 0.0
      %2209 = vmatpush1.msra.mxu0 0.0
      %2210 = vmatprep.subr.mxu0 0.0
      %2211 = vmatpush1.msra.mxu0 0.0
      %2212 = vmatprep.subr.mxu0 0.0
      %2213 = vmatpush1.msra.mxu0 0.0
      %2214 = vmatprep.subr.mxu0 0.0
      %2215 = vmatpush1.msra.mxu0 0.0
      %2216 = vmatprep.subr.mxu0 0.0
      %2217 = vmatpush1.msra.mxu0 0.0
      %2218 = vmatprep.subr.mxu0 0.0
      %2219 = vmatpush1.msra.mxu0 0.0
      %2220 = vmatprep.subr.mxu0 0.0
      %2221 = vmatpush1.msra.mxu0 0.0
      %2222 = vmatprep.subr.mxu0 0.0
      %2223 = vmatpush1.msra.mxu0 0.0
      %2224 = vmatprep.subr.mxu0 0.0
      %2225 = vmatpush1.msra.mxu0 0.0
      %2226 = vmatprep.subr.mxu0 0.0
      %2227 = vmatpush1.msra.mxu0 0.0
      %2228 = vmatprep.subr.mxu0 0.0
      %2229 = vmatpush1.msra.mxu0 0.0
      %2230 = vmatprep.subr.mxu0 0.0
      %2231 = vmatpush1.msra.mxu0 0.0
      %2232 = vmatprep.subr.mxu0 0.0
      %2233 = vmatpush1.msra.mxu0 0.0
      %2234 = vmatprep.subr.mxu0 0.0
      %2235 = vmatpush1.msra.mxu0 0.0
      %2236 = vmatprep.mubr.f32.mxu0 0.0
      %2237 = vmatmul.mubr.f32.gmra.mrb[0].mxu0 %v659
      %v2238 = vpop.f32.mrb[0].mxu0
      %v2239 = vadd.f32 0.0, %v2238
      %v2240 = vpop.f32.mrb[0].mxu0
      %2241 = vmatprep.mubr.f32.mxu0 0.0
      %2242 = vmatmul.mubr.f32.gmra.mrb[0].mxu0 %v661
      %v2243 = vpop.f32.mrb[0].mxu0
      %v2244 = vadd.f32 0.0, %v2243
      %v2245 = vpop.f32.mrb[0].mxu0
      %2246 = vmatprep.mubr.f32.mxu0 0.0
      %2247 = vmatmul.mubr.f32.gmra.mrb[0].mxu0 %v663
      %v2248 = vpop.f32.mrb[0].mxu0
      %v2249 = vadd.f32 0.0, %v2248
      %v2250 = vpop.f32.mrb[0].mxu0
      %2251 = vmatprep.mubr.f32.mxu0 0.0
      %2252 = vmatmul.mubr.f32.gmra.mrb[0].mxu0 %v665
      %v2253 = vpop.f32.mrb[0].mxu0
      %v2254 = vadd.f32 0.0, %v2253
      %v2255 = vpop.f32.mrb[0].mxu0
      %2256 = vmatprep.mubr.f32.mxu0 0.0
      %2257 = vmatmul.mubr.f32.gmra.mrb[0].mxu0 %v667
      %v2258 = vpop.f32.mrb[0].mxu0
      %v2259 = vadd.f32 0.0, %v2258
      %v2260 = vpop.f32.mrb[0].mxu0
      %2261 = vmatprep.mubr.f32.mxu0 0.0
      %2262 = vmatmul.mubr.f32.gmra.mrb[0].mxu0 %v669
      %v2263 = vpop.f32.mrb[0].mxu0
      %v2264 = vadd.f32 0.0, %v2263
      %v2265 = vpop.f32.mrb[0].mxu0
      %2266 = vmatprep.mubr.f32.mxu0 0.0
      %2267 = vmatmul.mubr.f32.gmra.mrb[0].mxu0 %v671
      %v2268 = vpop.f32.mrb[0].mxu0
      %v2269 = vadd.f32 0.0, %v2268
      %v2270 = vpop.f32.mrb[0].mxu0
      %2271 = vmatprep.mubr.f32.mxu0 0.0
      %2272 = vmatmul.mubr.f32.gmra.mrb[0].mxu0 %v673
      %v2273 = vpop.f32.mrb[0].mxu0
      %v2274 = vadd.f32 0.0, %v2273
      %v2275 = vpop.f32.mrb[0].mxu0
      %2276 = vmatprep.mubr.f32.mxu0 0.0
      %2277 = vmatmul.mubr.f32.gmra.mrb[0].mxu0 %v675
      %v2278 = vpop.f32.mrb[0].mxu0
      %v2279 = vadd.f32 0.0, %v2278
      %v2280 = vpop.f32.mrb[0].mxu0
      %2281 = vmatprep.mubr.f32.mxu0 0.0
      %2282 = vmatmul.mubr.f32.gmra.mrb[0].mxu0 %v677
      %v2283 = vpop.f32.mrb[0].mxu0
      %v2284 = vadd.f32 0.0, %v2283
      %v2285 = vpop.f32.mrb[0].mxu0
      %2286 = vmatprep.mubr.f32.mxu0 0.0
      %2287 = vmatmul.mubr.f32.gmra.mrb[0].mxu0 %v679
      %v2288 = vpop.f32.mrb[0].mxu0
      %v2289 = vadd.f32 0.0, %v2288
      %v2290 = vpop.f32.mrb[0].mxu0
      %2291 = vmatprep.mubr.f32.mxu0 0.0
      %2292 = vmatmul.mubr.f32.gmra.mrb[0].mxu0 %v681
      %v2293 = vpop.f32.mrb[0].mxu0
      %v2294 = vadd.f32 0.0, %v2293
      %v2295 = vpop.f32.mrb[0].mxu0
      %2296 = vmatprep.mubr.f32.mxu0 0.0
      %2297 = vmatmul.mubr.f32.gmra.mrb[0].mxu0 %v683
      %v2298 = vpop.f32.mrb[0].mxu0
      %v2299 = vadd.f32 0.0, %v2298
      %v2300 = vpop.f32.mrb[0].mxu0
      %2301 = vmatprep.mubr.f32.mxu0 0.0
      %2302 = vmatmul.mubr.f32.gmra.mrb[0].mxu0 %v685
      %v2303 = vpop.f32.mrb[0].mxu0
      %v2304 = vadd.f32 0.0, %v2303
      %v2305 = vpop.f32.mrb[0].mxu0
      %2306 = vmatprep.mubr.f32.mxu0 0.0
      %2307 = vmatmul.mubr.f32.gmra.mrb[0].mxu0 %v687
      %v2308 = vpop.f32.mrb[0].mxu0
      %v2309 = vadd.f32 0.0, %v2308
      %v2310 = vpop.f32.mrb[0].mxu0
      %2311 = vmatprep.mubr.f32.mxu0 0.0
      %2312 = vmatmul.mubr.f32.gmra.mrb[0].mxu0 %v689
      %v2313 = vpop.f32.mrb[0].mxu0
      %v2314 = vadd.f32 0.0, %v2313
      %v2315 = vpop.f32.mrb[0].mxu0
      %2316 = vmatprep.mubr.f32.mxu0 0.0
      %2317 = vmatmul.mubr.f32.gmra.mrb[0].mxu0 %v691
      %v2318 = vpop.f32.mrb[0].mxu0
      %v2319 = vadd.f32 0.0, %v2318
      %v2320 = vpop.f32.mrb[0].mxu0
      %2321 = vmatprep.mubr.f32.mxu0 0.0
      %2322 = vmatmul.mubr.f32.gmra.mrb[0].mxu0 %v693
      %v2323 = vpop.f32.mrb[0].mxu0
      %v2324 = vadd.f32 0.0, %v2323
      %v2325 = vpop.f32.mrb[0].mxu0
      %2326 = vmatprep.mubr.f32.mxu0 0.0
      %2327 = vmatmul.mubr.f32.gmra.mrb[0].mxu0 %v695
      %v2328 = vpop.f32.mrb[0].mxu0
      %v2329 = vadd.f32 0.0, %v2328
      %v2330 = vpop.f32.mrb[0].mxu0
      %2331 = vmatprep.mubr.f32.mxu0 0.0
      %2332 = vmatmul.mubr.f32.gmra.mrb[0].mxu0 %v697
      %v2333 = vpop.f32.mrb[0].mxu0
      %v2334 = vadd.f32 0.0, %v2333
      %v2335 = vpop.f32.mrb[0].mxu0
      %2336 = vmatprep.mubr.f32.mxu0 0.0
      %2337 = vmatmul.mubr.f32.gmra.mrb[0].mxu0 %v699
      %v2338 = vpop.f32.mrb[0].mxu0
      %v2339 = vadd.f32 0.0, %v2338
      %v2340 = vpop.f32.mrb[0].mxu0
      %2341 = vmatprep.mubr.f32.mxu0 0.0
      %2342 = vmatmul.mubr.f32.gmra.mrb[0].mxu0 %v701
      %v2343 = vpop.f32.mrb[0].mxu0
      %v2344 = vadd.f32 0.0, %v2343
      %v2345 = vpop.f32.mrb[0].mxu0
      %2346 = vmatprep.mubr.f32.mxu0 0.0
      %2347 = vmatmul.mubr.f32.gmra.mrb[0].mxu0 %v703
      %v2348 = vpop.f32.mrb[0].mxu0
      %v2349 = vadd.f32 0.0, %v2348
      %v2350 = vpop.f32.mrb[0].mxu0
      %2351 = vmatprep.mubr.f32.mxu0 0.0
      %2352 = vmatmul.mubr.f32.gmra.mrb[0].mxu0 %v705
      %v2353 = vpop.f32.mrb[0].mxu0
      %v2354 = vadd.f32 0.0, %v2353
      %v2355 = vpop.f32.mrb[0].mxu0
      %2356 = vmatprep.mubr.f32.mxu0 0.0
      %2357 = vmatmul.mubr.f32.gmra.mrb[0].mxu0 %v707
      %v2358 = vpop.f32.mrb[0].mxu0
      %v2359 = vadd.f32 0.0, %v2358
      %v2360 = vpop.f32.mrb[0].mxu0
      %2361 = vmatprep.mubr.f32.mxu0 0.0
      %2362 = vmatmul.mubr.f32.gmra.mrb[0].mxu0 %v709
      %v2363 = vpop.f32.mrb[0].mxu0
      %v2364 = vadd.f32 0.0, %v2363
      %v2365 = vpop.f32.mrb[0].mxu0
      %2366 = vmatprep.mubr.f32.mxu0 0.0
      %2367 = vmatmul.mubr.f32.gmra.mrb[0].mxu0 %v711
      %v2368 = vpop.f32.mrb[0].mxu0
      %v2369 = vadd.f32 0.0, %v2368
      %v2370 = vpop.f32.mrb[0].mxu0
      %2371 = vmatprep.mubr.f32.mxu0 0.0
      %2372 = vmatmul.mubr.f32.gmra.mrb[0].mxu0 %v713
      %v2373 = vpop.f32.mrb[0].mxu0
      %v2374 = vadd.f32 0.0, %v2373
      %v2375 = vpop.f32.mrb[0].mxu0
      %2376 = vmatprep.mubr.f32.mxu0 0.0
      %2377 = vmatmul.mubr.f32.gmra.mrb[0].mxu0 %v1353
      %v2378 = vpop.f32.mrb[0].mxu0
      %v2379 = vadd.f32 0.0, %v2378
      %v2380 = vpop.f32.mrb[0].mxu0
      %2381 = vmatprep.mubr.f32.mxu0 0.0
      %2382 = vmatmul.mubr.f32.gmra.mrb[0].mxu0 %v1356
      %v2383 = vpop.f32.mrb[0].mxu0
      %v2384 = vadd.f32 0.0, %v2383
      %v2385 = vpop.f32.mrb[0].mxu0
      %2386 = vmatprep.mubr.f32.mxu0 0.0
      %2387 = vmatmul.mubr.f32.gmra.mrb[0].mxu0 %v2164
      %v2388 = vpop.f32.mrb[0].mxu0
      %v2389 = vadd.f32 0.0, %v2388
      %v2390 = vpop.f32.mrb[0].mxu0
      %2391 = vmatprep.mubr.f32.mxu0 0.0
      %2392 = vmatmul.mubr.f32.gmra.mrb[0].mxu0 %v2167
      %v2393 = vpop.f32.mrb[0].mxu0
      %v2394 = vadd.f32 0.0, %v2393
      %v2395 = vpop.f32.mrb[0].mxu0
      %2396 = vdwg.mxu0
      %v2397 = vadd.f32 %v2129, %v2239
      %v2398 = vadd.f32 %v2130, %v2244
      %v2399 = vadd.f32 %v2131, %v2249
      %v2400 = vadd.f32 %v2132, %v2254
      %v2401 = vadd.f32 %v2133, %v2259
      %v2402 = vadd.f32 %v2134, %v2264
      %v2403 = vadd.f32 %v2135, %v2269
      %v2404 = vadd.f32 %v2136, %v2274
      %v2405 = vadd.f32 %v2137, %v2279
      %v2406 = vadd.f32 %v2138, %v2284
      %v2407 = vadd.f32 %v2139, %v2289
      %v2408 = vadd.f32 %v2140, %v2294
      %v2409 = vadd.f32 %v2141, %v2299
      %v2410 = vadd.f32 %v2142, %v2304
      %v2411 = vadd.f32 %v2143, %v2309
      %v2412 = vadd.f32 %v2144, %v2314
      %v2413 = vadd.f32 %v2145, %v2319
      %v2414 = vadd.f32 %v2146, %v2324
      %v2415 = vadd.f32 %v2147, %v2329
      %v2416 = vadd.f32 %v2148, %v2334
      %v2417 = vadd.f32 %v2149, %v2339
      %v2418 = vadd.f32 %v2150, %v2344
      %v2419 = vadd.f32 %v2151, %v2349
      %v2420 = vadd.f32 %v2152, %v2354
      %v2421 = vadd.f32 %v2153, %v2359
      %v2422 = vadd.f32 %v2154, %v2364
      %v2423 = vadd.f32 %v2155, %v2369
      %v2424 = vadd.f32 %v2156, %v2374
      %v2425 = vadd.f32 %v2157, %v2379
      %v2426 = vadd.f32 %v2158, %v2384
      %v2427 = vadd.f32 %v2159, %v2389
      %v2428 = vadd.f32 %v2160, %v2394
      %v2430 = vrot.slane %v222, 1
      %v2431 = vrot.slane %v223, 1
      %v2432 = vsel %vm274, %v2430, %v2431
      %v2433 = vrot.slane %v224, 1
      %v2434 = vsel %vm274, %v2431, %v2433
      %s2435 = scalar_lea.vmem %s1, 28
      %v2436 = vld [vmem:[%s2435] sm:$0xf]
      %v2437 = vsel %vm357, %v2432, 0
      %v2439 = vsel %vm357, %v2434, 0
      %v2442 = vsel %vm422, %v2436, 0
      %2444 = vmatprep.subr.mxu0 0.0
      %2445 = vmatpush1.msra.mxu0 %v2442
      %2446 = vmatprep.subr.mxu0 0.0
      %2447 = vmatpush1.msra.mxu0 0.0
      %2448 = vmatprep.subr.mxu0 0.0
      %2449 = vmatpush1.msra.mxu0 0.0
      %2450 = vmatprep.subr.mxu0 0.0
      %2451 = vmatpush1.msra.mxu0 0.0
      %2452 = vmatprep.subr.mxu0 0.0
      %2453 = vmatpush1.msra.mxu0 0.0
      %2454 = vmatprep.subr.mxu0 0.0
      %2455 = vmatpush1.msra.mxu0 0.0
      %2456 = vmatprep.subr.mxu0 0.0
      %2457 = vmatpush1.msra.mxu0 0.0
      %2458 = vmatprep.subr.mxu0 0.0
      %2459 = vmatpush1.msra.mxu0 0.0
      %2460 = vmatprep.subr.mxu0 0.0
      %2461 = vmatpush1.msra.mxu0 0.0
      %2462 = vmatprep.subr.mxu0 0.0
      %2463 = vmatpush1.msra.mxu0 0.0
      %2464 = vmatprep.subr.mxu0 0.0
      %2465 = vmatpush1.msra.mxu0 0.0
      %2466 = vmatprep.subr.mxu0 0.0
      %2467 = vmatpush1.msra.mxu0 0.0
      %2468 = vmatprep.subr.mxu0 0.0
      %2469 = vmatpush1.msra.mxu0 0.0
      %2470 = vmatprep.subr.mxu0 0.0
      %2471 = vmatpush1.msra.mxu0 0.0
      %2472 = vmatprep.subr.mxu0 0.0
      %2473 = vmatpush1.msra.mxu0 0.0
      %2474 = vmatprep.subr.mxu0 0.0
      %2475 = vmatpush1.msra.mxu0 0.0
      %2476 = vmatprep.subr.mxu0 0.0
      %2477 = vmatpush1.msra.mxu0 0.0
      %2478 = vmatprep.subr.mxu0 0.0
      %2479 = vmatpush1.msra.mxu0 0.0
      %2480 = vmatprep.subr.mxu0 0.0
      %2481 = vmatpush1.msra.mxu0 0.0
      %2482 = vmatprep.subr.mxu0 0.0
      %2483 = vmatpush1.msra.mxu0 0.0
      %2484 = vmatprep.subr.mxu0 0.0
      %2485 = vmatpush1.msra.mxu0 0.0
      %2486 = vmatprep.subr.mxu0 0.0
      %2487 = vmatpush1.msra.mxu0 0.0
      %2488 = vmatprep.subr.mxu0 0.0
      %2489 = vmatpush1.msra.mxu0 0.0
      %2490 = vmatprep.subr.mxu0 0.0
      %2491 = vmatpush1.msra.mxu0 0.0
      %2492 = vmatprep.subr.mxu0 0.0
      %2493 = vmatpush1.msra.mxu0 0.0
      %2494 = vmatprep.subr.mxu0 0.0
      %2495 = vmatpush1.msra.mxu0 0.0
      %2496 = vmatprep.subr.mxu0 0.0
      %2497 = vmatpush1.msra.mxu0 0.0
      %2498 = vmatprep.subr.mxu0 0.0
      %2499 = vmatpush1.msra.mxu0 0.0
      %2500 = vmatprep.subr.mxu0 0.0
      %2501 = vmatpush1.msra.mxu0 0.0
      %2502 = vmatprep.subr.mxu0 0.0
      %2503 = vmatpush1.msra.mxu0 0.0
      %2504 = vmatprep.subr.mxu0 0.0
      %2505 = vmatpush1.msra.mxu0 0.0
      %2506 = vmatprep.subr.mxu0 0.0
      %2507 = vmatpush1.msra.mxu0 0.0
      %2508 = vmatprep.mubr.f32.mxu0 0.0
      %2509 = vmatmul.mubr.f32.gmra.mrb[0].mxu0 %v366
      %v2510 = vpop.f32.mrb[0].mxu0
      %v2511 = vadd.f32 0.0, %v2510
      %v2512 = vpop.f32.mrb[0].mxu0
      %2513 = vmatprep.mubr.f32.mxu0 0.0
      %2514 = vmatmul.mubr.f32.gmra.mrb[0].mxu0 %v368
      %v2515 = vpop.f32.mrb[0].mxu0
      %v2516 = vadd.f32 0.0, %v2515
      %v2517 = vpop.f32.mrb[0].mxu0
      %2518 = vmatprep.mubr.f32.mxu0 0.0
      %2519 = vmatmul.mubr.f32.gmra.mrb[0].mxu0 %v370
      %v2520 = vpop.f32.mrb[0].mxu0
      %v2521 = vadd.f32 0.0, %v2520
      %v2522 = vpop.f32.mrb[0].mxu0
      %2523 = vmatprep.mubr.f32.mxu0 0.0
      %2524 = vmatmul.mubr.f32.gmra.mrb[0].mxu0 %v372
      %v2525 = vpop.f32.mrb[0].mxu0
      %v2526 = vadd.f32 0.0, %v2525
      %v2527 = vpop.f32.mrb[0].mxu0
      %2528 = vmatprep.mubr.f32.mxu0 0.0
      %2529 = vmatmul.mubr.f32.gmra.mrb[0].mxu0 %v374
      %v2530 = vpop.f32.mrb[0].mxu0
      %v2531 = vadd.f32 0.0, %v2530
      %v2532 = vpop.f32.mrb[0].mxu0
      %2533 = vmatprep.mubr.f32.mxu0 0.0
      %2534 = vmatmul.mubr.f32.gmra.mrb[0].mxu0 %v376
      %v2535 = vpop.f32.mrb[0].mxu0
      %v2536 = vadd.f32 0.0, %v2535
      %v2537 = vpop.f32.mrb[0].mxu0
      %2538 = vmatprep.mubr.f32.mxu0 0.0
      %2539 = vmatmul.mubr.f32.gmra.mrb[0].mxu0 %v378
      %v2540 = vpop.f32.mrb[0].mxu0
      %v2541 = vadd.f32 0.0, %v2540
      %v2542 = vpop.f32.mrb[0].mxu0
      %2543 = vmatprep.mubr.f32.mxu0 0.0
      %2544 = vmatmul.mubr.f32.gmra.mrb[0].mxu0 %v380
      %v2545 = vpop.f32.mrb[0].mxu0
      %v2546 = vadd.f32 0.0, %v2545
      %v2547 = vpop.f32.mrb[0].mxu0
      %2548 = vmatprep.mubr.f32.mxu0 0.0
      %2549 = vmatmul.mubr.f32.gmra.mrb[0].mxu0 %v382
      %v2550 = vpop.f32.mrb[0].mxu0
      %v2551 = vadd.f32 0.0, %v2550
      %v2552 = vpop.f32.mrb[0].mxu0
      %2553 = vmatprep.mubr.f32.mxu0 0.0
      %2554 = vmatmul.mubr.f32.gmra.mrb[0].mxu0 %v384
      %v2555 = vpop.f32.mrb[0].mxu0
      %v2556 = vadd.f32 0.0, %v2555
      %v2557 = vpop.f32.mrb[0].mxu0
      %2558 = vmatprep.mubr.f32.mxu0 0.0
      %2559 = vmatmul.mubr.f32.gmra.mrb[0].mxu0 %v386
      %v2560 = vpop.f32.mrb[0].mxu0
      %v2561 = vadd.f32 0.0, %v2560
      %v2562 = vpop.f32.mrb[0].mxu0
      %2563 = vmatprep.mubr.f32.mxu0 0.0
      %2564 = vmatmul.mubr.f32.gmra.mrb[0].mxu0 %v388
      %v2565 = vpop.f32.mrb[0].mxu0
      %v2566 = vadd.f32 0.0, %v2565
      %v2567 = vpop.f32.mrb[0].mxu0
      %2568 = vmatprep.mubr.f32.mxu0 0.0
      %2569 = vmatmul.mubr.f32.gmra.mrb[0].mxu0 %v390
      %v2570 = vpop.f32.mrb[0].mxu0
      %v2571 = vadd.f32 0.0, %v2570
      %v2572 = vpop.f32.mrb[0].mxu0
      %2573 = vmatprep.mubr.f32.mxu0 0.0
      %2574 = vmatmul.mubr.f32.gmra.mrb[0].mxu0 %v392
      %v2575 = vpop.f32.mrb[0].mxu0
      %v2576 = vadd.f32 0.0, %v2575
      %v2577 = vpop.f32.mrb[0].mxu0
      %2578 = vmatprep.mubr.f32.mxu0 0.0
      %2579 = vmatmul.mubr.f32.gmra.mrb[0].mxu0 %v394
      %v2580 = vpop.f32.mrb[0].mxu0
      %v2581 = vadd.f32 0.0, %v2580
      %v2582 = vpop.f32.mrb[0].mxu0
      %2583 = vmatprep.mubr.f32.mxu0 0.0
      %2584 = vmatmul.mubr.f32.gmra.mrb[0].mxu0 %v396
      %v2585 = vpop.f32.mrb[0].mxu0
      %v2586 = vadd.f32 0.0, %v2585
      %v2587 = vpop.f32.mrb[0].mxu0
      %2588 = vmatprep.mubr.f32.mxu0 0.0
      %2589 = vmatmul.mubr.f32.gmra.mrb[0].mxu0 %v398
      %v2590 = vpop.f32.mrb[0].mxu0
      %v2591 = vadd.f32 0.0, %v2590
      %v2592 = vpop.f32.mrb[0].mxu0
      %2593 = vmatprep.mubr.f32.mxu0 0.0
      %2594 = vmatmul.mubr.f32.gmra.mrb[0].mxu0 %v400
      %v2595 = vpop.f32.mrb[0].mxu0
      %v2596 = vadd.f32 0.0, %v2595
      %v2597 = vpop.f32.mrb[0].mxu0
      %2598 = vmatprep.mubr.f32.mxu0 0.0
      %2599 = vmatmul.mubr.f32.gmra.mrb[0].mxu0 %v402
      %v2600 = vpop.f32.mrb[0].mxu0
      %v2601 = vadd.f32 0.0, %v2600
      %v2602 = vpop.f32.mrb[0].mxu0
      %2603 = vmatprep.mubr.f32.mxu0 0.0
      %2604 = vmatmul.mubr.f32.gmra.mrb[0].mxu0 %v404
      %v2605 = vpop.f32.mrb[0].mxu0
      %v2606 = vadd.f32 0.0, %v2605
      %v2607 = vpop.f32.mrb[0].mxu0
      %2608 = vmatprep.mubr.f32.mxu0 0.0
      %2609 = vmatmul.mubr.f32.gmra.mrb[0].mxu0 %v406
      %v2610 = vpop.f32.mrb[0].mxu0
      %v2611 = vadd.f32 0.0, %v2610
      %v2612 = vpop.f32.mrb[0].mxu0
      %2613 = vmatprep.mubr.f32.mxu0 0.0
      %2614 = vmatmul.mubr.f32.gmra.mrb[0].mxu0 %v408
      %v2615 = vpop.f32.mrb[0].mxu0
      %v2616 = vadd.f32 0.0, %v2615
      %v2617 = vpop.f32.mrb[0].mxu0
      %2618 = vmatprep.mubr.f32.mxu0 0.0
      %2619 = vmatmul.mubr.f32.gmra.mrb[0].mxu0 %v410
      %v2620 = vpop.f32.mrb[0].mxu0
      %v2621 = vadd.f32 0.0, %v2620
      %v2622 = vpop.f32.mrb[0].mxu0
      %2623 = vmatprep.mubr.f32.mxu0 0.0
      %2624 = vmatmul.mubr.f32.gmra.mrb[0].mxu0 %v412
      %v2625 = vpop.f32.mrb[0].mxu0
      %v2626 = vadd.f32 0.0, %v2625
      %v2627 = vpop.f32.mrb[0].mxu0
      %2628 = vmatprep.mubr.f32.mxu0 0.0
      %2629 = vmatmul.mubr.f32.gmra.mrb[0].mxu0 %v414
      %v2630 = vpop.f32.mrb[0].mxu0
      %v2631 = vadd.f32 0.0, %v2630
      %v2632 = vpop.f32.mrb[0].mxu0
      %2633 = vmatprep.mubr.f32.mxu0 0.0
      %2634 = vmatmul.mubr.f32.gmra.mrb[0].mxu0 %v416
      %v2635 = vpop.f32.mrb[0].mxu0
      %v2636 = vadd.f32 0.0, %v2635
      %v2637 = vpop.f32.mrb[0].mxu0
      %2638 = vmatprep.mubr.f32.mxu0 0.0
      %2639 = vmatmul.mubr.f32.gmra.mrb[0].mxu0 %v418
      %v2640 = vpop.f32.mrb[0].mxu0
      %v2641 = vadd.f32 0.0, %v2640
      %v2642 = vpop.f32.mrb[0].mxu0
      %2643 = vmatprep.mubr.f32.mxu0 0.0
      %2644 = vmatmul.mubr.f32.gmra.mrb[0].mxu0 %v420
      %v2645 = vpop.f32.mrb[0].mxu0
      %v2646 = vadd.f32 0.0, %v2645
      %v2647 = vpop.f32.mrb[0].mxu0
      %2648 = vmatprep.mubr.f32.mxu0 0.0
      %2649 = vmatmul.mubr.f32.gmra.mrb[0].mxu0 %v1626
      %v2650 = vpop.f32.mrb[0].mxu0
      %v2651 = vadd.f32 0.0, %v2650
      %v2652 = vpop.f32.mrb[0].mxu0
      %2653 = vmatprep.mubr.f32.mxu0 0.0
      %2654 = vmatmul.mubr.f32.gmra.mrb[0].mxu0 %v1628
      %v2655 = vpop.f32.mrb[0].mxu0
      %v2656 = vadd.f32 0.0, %v2655
      %v2657 = vpop.f32.mrb[0].mxu0
      %2658 = vmatprep.mubr.f32.mxu0 0.0
      %2659 = vmatmul.mubr.f32.gmra.mrb[0].mxu0 %v2437
      %v2660 = vpop.f32.mrb[0].mxu0
      %v2661 = vadd.f32 0.0, %v2660
      %v2662 = vpop.f32.mrb[0].mxu0
      %2663 = vmatprep.mubr.f32.mxu0 0.0
      %2664 = vmatmul.mubr.f32.gmra.mrb[0].mxu0 %v2439
      %v2665 = vpop.f32.mrb[0].mxu0
      %v2666 = vadd.f32 0.0, %v2665
      %v2667 = vpop.f32.mrb[0].mxu0
      %2668 = vdwg.mxu0
      %v2669 = vadd.f32 %v2397, %v2511
      %v2670 = vadd.f32 %v2398, %v2516
      %v2671 = vadd.f32 %v2399, %v2521
      %v2672 = vadd.f32 %v2400, %v2526
      %v2673 = vadd.f32 %v2401, %v2531
      %v2674 = vadd.f32 %v2402, %v2536
      %v2675 = vadd.f32 %v2403, %v2541
      %v2676 = vadd.f32 %v2404, %v2546
      %v2677 = vadd.f32 %v2405, %v2551
      %v2678 = vadd.f32 %v2406, %v2556
      %v2679 = vadd.f32 %v2407, %v2561
      %v2680 = vadd.f32 %v2408, %v2566
      %v2681 = vadd.f32 %v2409, %v2571
      %v2682 = vadd.f32 %v2410, %v2576
      %v2683 = vadd.f32 %v2411, %v2581
      %v2684 = vadd.f32 %v2412, %v2586
      %v2685 = vadd.f32 %v2413, %v2591
      %v2686 = vadd.f32 %v2414, %v2596
      %v2687 = vadd.f32 %v2415, %v2601
      %v2688 = vadd.f32 %v2416, %v2606
      %v2689 = vadd.f32 %v2417, %v2611
      %v2690 = vadd.f32 %v2418, %v2616
      %v2691 = vadd.f32 %v2419, %v2621
      %v2692 = vadd.f32 %v2420, %v2626
      %v2693 = vadd.f32 %v2421, %v2631
      %v2694 = vadd.f32 %v2422, %v2636
      %v2695 = vadd.f32 %v2423, %v2641
      %v2696 = vadd.f32 %v2424, %v2646
      %v2697 = vadd.f32 %v2425, %v2651
      %v2698 = vadd.f32 %v2426, %v2656
      %v2699 = vadd.f32 %v2427, %v2661
      %v2700 = vadd.f32 %v2428, %v2666
      %v2701 = vrot.slane %v222, 2
      %v2702 = vrot.slane %v223, 2
      %v2703 = vsel %vm943, %v2701, %v2702
      %v2704 = vrot.slane %v224, 2
      %v2705 = vsel %vm943, %v2702, %v2704
      %s2706 = scalar_lea.vmem %s1, 32
      %v2707 = vld [vmem:[%s2706] sm:$0xf]
      %v2708 = vsel %vm357, %v2703, 0
      %v2710 = vsel %vm357, %v2705, 0
      %v2713 = vsel %vm422, %v2707, 0
      %2715 = vmatprep.subr.mxu0 0.0
      %2716 = vmatpush1.msra.mxu0 %v2713
      %2717 = vmatprep.subr.mxu0 0.0
      %2718 = vmatpush1.msra.mxu0 0.0
      %2719 = vmatprep.subr.mxu0 0.0
      %2720 = vmatpush1.msra.mxu0 0.0
      %2721 = vmatprep.subr.mxu0 0.0
      %2722 = vmatpush1.msra.mxu0 0.0
      %2723 = vmatprep.subr.mxu0 0.0
      %2724 = vmatpush1.msra.mxu0 0.0
      %2725 = vmatprep.subr.mxu0 0.0
      %2726 = vmatpush1.msra.mxu0 0.0
      %2727 = vmatprep.subr.mxu0 0.0
      %2728 = vmatpush1.msra.mxu0 0.0
      %2729 = vmatprep.subr.mxu0 0.0
      %2730 = vmatpush1.msra.mxu0 0.0
      %2731 = vmatprep.subr.mxu0 0.0
      %2732 = vmatpush1.msra.mxu0 0.0
      %2733 = vmatprep.subr.mxu0 0.0
      %2734 = vmatpush1.msra.mxu0 0.0
      %2735 = vmatprep.subr.mxu0 0.0
      %2736 = vmatpush1.msra.mxu0 0.0
      %2737 = vmatprep.subr.mxu0 0.0
      %2738 = vmatpush1.msra.mxu0 0.0
      %2739 = vmatprep.subr.mxu0 0.0
      %2740 = vmatpush1.msra.mxu0 0.0
      %2741 = vmatprep.subr.mxu0 0.0
      %2742 = vmatpush1.msra.mxu0 0.0
      %2743 = vmatprep.subr.mxu0 0.0
      %2744 = vmatpush1.msra.mxu0 0.0
      %2745 = vmatprep.subr.mxu0 0.0
      %2746 = vmatpush1.msra.mxu0 0.0
      %2747 = vmatprep.subr.mxu0 0.0
      %2748 = vmatpush1.msra.mxu0 0.0
      %2749 = vmatprep.subr.mxu0 0.0
      %2750 = vmatpush1.msra.mxu0 0.0
      %2751 = vmatprep.subr.mxu0 0.0
      %2752 = vmatpush1.msra.mxu0 0.0
      %2753 = vmatprep.subr.mxu0 0.0
      %2754 = vmatpush1.msra.mxu0 0.0
      %2755 = vmatprep.subr.mxu0 0.0
      %2756 = vmatpush1.msra.mxu0 0.0
      %2757 = vmatprep.subr.mxu0 0.0
      %2758 = vmatpush1.msra.mxu0 0.0
      %2759 = vmatprep.subr.mxu0 0.0
      %2760 = vmatpush1.msra.mxu0 0.0
      %2761 = vmatprep.subr.mxu0 0.0
      %2762 = vmatpush1.msra.mxu0 0.0
      %2763 = vmatprep.subr.mxu0 0.0
      %2764 = vmatpush1.msra.mxu0 0.0
      %2765 = vmatprep.subr.mxu0 0.0
      %2766 = vmatpush1.msra.mxu0 0.0
      %2767 = vmatprep.subr.mxu0 0.0
      %2768 = vmatpush1.msra.mxu0 0.0
      %2769 = vmatprep.subr.mxu0 0.0
      %2770 = vmatpush1.msra.mxu0 0.0
      %2771 = vmatprep.subr.mxu0 0.0
      %2772 = vmatpush1.msra.mxu0 0.0
      %2773 = vmatprep.subr.mxu0 0.0
      %2774 = vmatpush1.msra.mxu0 0.0
      %2775 = vmatprep.subr.mxu0 0.0
      %2776 = vmatpush1.msra.mxu0 0.0
      %2777 = vmatprep.subr.mxu0 0.0
      %2778 = vmatpush1.msra.mxu0 0.0
      %2779 = vmatprep.mubr.f32.mxu0 0.0
      %2780 = vmatmul.mubr.f32.gmra.mrb[0].mxu0 %v1034
      %v2781 = vpop.f32.mrb[0].mxu0
      %v2782 = vadd.f32 0.0, %v2781
      %v2783 = vpop.f32.mrb[0].mxu0
      %2784 = vmatprep.mubr.f32.mxu0 0.0
      %2785 = vmatmul.mubr.f32.gmra.mrb[0].mxu0 %v1036
      %v2786 = vpop.f32.mrb[0].mxu0
      %v2787 = vadd.f32 0.0, %v2786
      %v2788 = vpop.f32.mrb[0].mxu0
      %2789 = vmatprep.mubr.f32.mxu0 0.0
      %2790 = vmatmul.mubr.f32.gmra.mrb[0].mxu0 %v1038
      %v2791 = vpop.f32.mrb[0].mxu0
      %v2792 = vadd.f32 0.0, %v2791
      %v2793 = vpop.f32.mrb[0].mxu0
      %2794 = vmatprep.mubr.f32.mxu0 0.0
      %2795 = vmatmul.mubr.f32.gmra.mrb[0].mxu0 %v1040
      %v2796 = vpop.f32.mrb[0].mxu0
      %v2797 = vadd.f32 0.0, %v2796
      %v2798 = vpop.f32.mrb[0].mxu0
      %2799 = vmatprep.mubr.f32.mxu0 0.0
      %2800 = vmatmul.mubr.f32.gmra.mrb[0].mxu0 %v1042
      %v2801 = vpop.f32.mrb[0].mxu0
      %v2802 = vadd.f32 0.0, %v2801
      %v2803 = vpop.f32.mrb[0].mxu0
      %2804 = vmatprep.mubr.f32.mxu0 0.0
      %2805 = vmatmul.mubr.f32.gmra.mrb[0].mxu0 %v1044
      %v2806 = vpop.f32.mrb[0].mxu0
      %v2807 = vadd.f32 0.0, %v2806
      %v2808 = vpop.f32.mrb[0].mxu0
      %2809 = vmatprep.mubr.f32.mxu0 0.0
      %2810 = vmatmul.mubr.f32.gmra.mrb[0].mxu0 %v1046
      %v2811 = vpop.f32.mrb[0].mxu0
      %v2812 = vadd.f32 0.0, %v2811
      %v2813 = vpop.f32.mrb[0].mxu0
      %2814 = vmatprep.mubr.f32.mxu0 0.0
      %2815 = vmatmul.mubr.f32.gmra.mrb[0].mxu0 %v1048
      %v2816 = vpop.f32.mrb[0].mxu0
      %v2817 = vadd.f32 0.0, %v2816
      %v2818 = vpop.f32.mrb[0].mxu0
      %2819 = vmatprep.mubr.f32.mxu0 0.0
      %2820 = vmatmul.mubr.f32.gmra.mrb[0].mxu0 %v1050
      %v2821 = vpop.f32.mrb[0].mxu0
      %v2822 = vadd.f32 0.0, %v2821
      %v2823 = vpop.f32.mrb[0].mxu0
      %2824 = vmatprep.mubr.f32.mxu0 0.0
      %2825 = vmatmul.mubr.f32.gmra.mrb[0].mxu0 %v1052
      %v2826 = vpop.f32.mrb[0].mxu0
      %v2827 = vadd.f32 0.0, %v2826
      %v2828 = vpop.f32.mrb[0].mxu0
      %2829 = vmatprep.mubr.f32.mxu0 0.0
      %2830 = vmatmul.mubr.f32.gmra.mrb[0].mxu0 %v1054
      %v2831 = vpop.f32.mrb[0].mxu0
      %v2832 = vadd.f32 0.0, %v2831
      %v2833 = vpop.f32.mrb[0].mxu0
      %2834 = vmatprep.mubr.f32.mxu0 0.0
      %2835 = vmatmul.mubr.f32.gmra.mrb[0].mxu0 %v1056
      %v2836 = vpop.f32.mrb[0].mxu0
      %v2837 = vadd.f32 0.0, %v2836
      %v2838 = vpop.f32.mrb[0].mxu0
      %2839 = vmatprep.mubr.f32.mxu0 0.0
      %2840 = vmatmul.mubr.f32.gmra.mrb[0].mxu0 %v1058
      %v2841 = vpop.f32.mrb[0].mxu0
      %v2842 = vadd.f32 0.0, %v2841
      %v2843 = vpop.f32.mrb[0].mxu0
      %2844 = vmatprep.mubr.f32.mxu0 0.0
      %2845 = vmatmul.mubr.f32.gmra.mrb[0].mxu0 %v1060
      %v2846 = vpop.f32.mrb[0].mxu0
      %v2847 = vadd.f32 0.0, %v2846
      %v2848 = vpop.f32.mrb[0].mxu0
      %2849 = vmatprep.mubr.f32.mxu0 0.0
      %2850 = vmatmul.mubr.f32.gmra.mrb[0].mxu0 %v1062
      %v2851 = vpop.f32.mrb[0].mxu0
      %v2852 = vadd.f32 0.0, %v2851
      %v2853 = vpop.f32.mrb[0].mxu0
      %2854 = vmatprep.mubr.f32.mxu0 0.0
      %2855 = vmatmul.mubr.f32.gmra.mrb[0].mxu0 %v1064
      %v2856 = vpop.f32.mrb[0].mxu0
      %v2857 = vadd.f32 0.0, %v2856
      %v2858 = vpop.f32.mrb[0].mxu0
      %2859 = vmatprep.mubr.f32.mxu0 0.0
      %2860 = vmatmul.mubr.f32.gmra.mrb[0].mxu0 %v1066
      %v2861 = vpop.f32.mrb[0].mxu0
      %v2862 = vadd.f32 0.0, %v2861
      %v2863 = vpop.f32.mrb[0].mxu0
      %2864 = vmatprep.mubr.f32.mxu0 0.0
      %2865 = vmatmul.mubr.f32.gmra.mrb[0].mxu0 %v1068
      %v2866 = vpop.f32.mrb[0].mxu0
      %v2867 = vadd.f32 0.0, %v2866
      %v2868 = vpop.f32.mrb[0].mxu0
      %2869 = vmatprep.mubr.f32.mxu0 0.0
      %2870 = vmatmul.mubr.f32.gmra.mrb[0].mxu0 %v1070
      %v2871 = vpop.f32.mrb[0].mxu0
      %v2872 = vadd.f32 0.0, %v2871
      %v2873 = vpop.f32.mrb[0].mxu0
      %2874 = vmatprep.mubr.f32.mxu0 0.0
      %2875 = vmatmul.mubr.f32.gmra.mrb[0].mxu0 %v1072
      %v2876 = vpop.f32.mrb[0].mxu0
      %v2877 = vadd.f32 0.0, %v2876
      %v2878 = vpop.f32.mrb[0].mxu0
      %2879 = vmatprep.mubr.f32.mxu0 0.0
      %2880 = vmatmul.mubr.f32.gmra.mrb[0].mxu0 %v1074
      %v2881 = vpop.f32.mrb[0].mxu0
      %v2882 = vadd.f32 0.0, %v2881
      %v2883 = vpop.f32.mrb[0].mxu0
      %2884 = vmatprep.mubr.f32.mxu0 0.0
      %2885 = vmatmul.mubr.f32.gmra.mrb[0].mxu0 %v1076
      %v2886 = vpop.f32.mrb[0].mxu0
      %v2887 = vadd.f32 0.0, %v2886
      %v2888 = vpop.f32.mrb[0].mxu0
      %2889 = vmatprep.mubr.f32.mxu0 0.0
      %2890 = vmatmul.mubr.f32.gmra.mrb[0].mxu0 %v1078
      %v2891 = vpop.f32.mrb[0].mxu0
      %v2892 = vadd.f32 0.0, %v2891
      %v2893 = vpop.f32.mrb[0].mxu0
      %2894 = vmatprep.mubr.f32.mxu0 0.0
      %2895 = vmatmul.mubr.f32.gmra.mrb[0].mxu0 %v1080
      %v2896 = vpop.f32.mrb[0].mxu0
      %v2897 = vadd.f32 0.0, %v2896
      %v2898 = vpop.f32.mrb[0].mxu0
      %2899 = vmatprep.mubr.f32.mxu0 0.0
      %2900 = vmatmul.mubr.f32.gmra.mrb[0].mxu0 %v1082
      %v2901 = vpop.f32.mrb[0].mxu0
      %v2902 = vadd.f32 0.0, %v2901
      %v2903 = vpop.f32.mrb[0].mxu0
      %2904 = vmatprep.mubr.f32.mxu0 0.0
      %2905 = vmatmul.mubr.f32.gmra.mrb[0].mxu0 %v1084
      %v2906 = vpop.f32.mrb[0].mxu0
      %v2907 = vadd.f32 0.0, %v2906
      %v2908 = vpop.f32.mrb[0].mxu0
      %2909 = vmatprep.mubr.f32.mxu0 0.0
      %2910 = vmatmul.mubr.f32.gmra.mrb[0].mxu0 %v1086
      %v2911 = vpop.f32.mrb[0].mxu0
      %v2912 = vadd.f32 0.0, %v2911
      %v2913 = vpop.f32.mrb[0].mxu0
      %2914 = vmatprep.mubr.f32.mxu0 0.0
      %2915 = vmatmul.mubr.f32.gmra.mrb[0].mxu0 %v1088
      %v2916 = vpop.f32.mrb[0].mxu0
      %v2917 = vadd.f32 0.0, %v2916
      %v2918 = vpop.f32.mrb[0].mxu0
      %2919 = vmatprep.mubr.f32.mxu0 0.0
      %2920 = vmatmul.mubr.f32.gmra.mrb[0].mxu0 %v1897
      %v2921 = vpop.f32.mrb[0].mxu0
      %v2922 = vadd.f32 0.0, %v2921
      %v2923 = vpop.f32.mrb[0].mxu0
      %2924 = vmatprep.mubr.f32.mxu0 0.0
      %2925 = vmatmul.mubr.f32.gmra.mrb[0].mxu0 %v1899
      %v2926 = vpop.f32.mrb[0].mxu0
      %v2927 = vadd.f32 0.0, %v2926
      %v2928 = vpop.f32.mrb[0].mxu0
      %2929 = vmatprep.mubr.f32.mxu0 0.0
      %2930 = vmatmul.mubr.f32.gmra.mrb[0].mxu0 %v2708
      %v2931 = vpop.f32.mrb[0].mxu0
      %v2932 = vadd.f32 0.0, %v2931
      %v2933 = vpop.f32.mrb[0].mxu0
      %2934 = vmatprep.mubr.f32.mxu0 0.0
      %2935 = vmatmul.mubr.f32.gmra.mrb[0].mxu0 %v2710
      %v2936 = vpop.f32.mrb[0].mxu0
      %v2937 = vadd.f32 0.0, %v2936
      %v2938 = vpop.f32.mrb[0].mxu0
      %2939 = vdwg.mxu0
      %v2940 = vadd.f32 %v2669, %v2782
      %v2941 = vadd.f32 %v2670, %v2787
      %v2942 = vadd.f32 %v2671, %v2792
      %v2943 = vadd.f32 %v2672, %v2797
      %v2944 = vadd.f32 %v2673, %v2802
      %v2945 = vadd.f32 %v2674, %v2807
      %v2946 = vadd.f32 %v2675, %v2812
      %v2947 = vadd.f32 %v2676, %v2817
      %v2948 = vadd.f32 %v2677, %v2822
      %v2949 = vadd.f32 %v2678, %v2827
      %v2950 = vadd.f32 %v2679, %v2832
      %v2951 = vadd.f32 %v2680, %v2837
      %v2952 = vadd.f32 %v2681, %v2842
      %v2953 = vadd.f32 %v2682, %v2847
      %v2954 = vadd.f32 %v2683, %v2852
      %v2955 = vadd.f32 %v2684, %v2857
      %v2956 = vadd.f32 %v2685, %v2862
      %v2957 = vadd.f32 %v2686, %v2867
      %v2958 = vadd.f32 %v2687, %v2872
      %v2959 = vadd.f32 %v2688, %v2877
      %v2960 = vadd.f32 %v2689, %v2882
      %v2961 = vadd.f32 %v2690, %v2887
      %v2962 = vadd.f32 %v2691, %v2892
      %v2963 = vadd.f32 %v2692, %v2897
      %v2964 = vadd.f32 %v2693, %v2902
      %v2965 = vadd.f32 %v2694, %v2907
      %v2966 = vadd.f32 %v2695, %v2912
      %v2967 = vadd.f32 %v2696, %v2917
      %v2968 = vadd.f32 %v2697, %v2922
      %v2969 = vadd.f32 %v2698, %v2927
      %v2970 = vadd.f32 %v2699, %v2932
      %v2971 = vadd.f32 %v2700, %v2937
      %v2972 = vmul.f32 %v2940, 4.2426405
      %v2973 = vmul.f32 %v2941, 4.2426405
      %v2974 = vmul.f32 %v2942, 4.2426405
      %v2975 = vmul.f32 %v2943, 4.2426405
      %v2976 = vmul.f32 %v2944, 4.2426405
      %v2977 = vmul.f32 %v2945, 4.2426405
      %v2978 = vmul.f32 %v2946, 4.2426405
      %v2979 = vmul.f32 %v2947, 4.2426405
      %v2980 = vmul.f32 %v2948, 4.2426405
      %v2981 = vmul.f32 %v2949, 4.2426405
      %v2982 = vmul.f32 %v2950, 4.2426405
      %v2983 = vmul.f32 %v2951, 4.2426405
      %v2984 = vmul.f32 %v2952, 4.2426405
      %v2985 = vmul.f32 %v2953, 4.2426405
      %v2986 = vmul.f32 %v2954, 4.2426405
      %v2987 = vmul.f32 %v2955, 4.2426405
      %v2988 = vmul.f32 %v2956, 4.2426405
      %v2989 = vmul.f32 %v2957, 4.2426405
      %v2990 = vmul.f32 %v2958, 4.2426405
      %v2991 = vmul.f32 %v2959, 4.2426405
      %v2992 = vmul.f32 %v2960, 4.2426405
      %v2993 = vmul.f32 %v2961, 4.2426405
      %v2994 = vmul.f32 %v2962, 4.2426405
      %v2995 = vmul.f32 %v2963, 4.2426405
      %v2996 = vmul.f32 %v2964, 4.2426405
      %v2997 = vmul.f32 %v2965, 4.2426405
      %v2998 = vmul.f32 %v2966, 4.2426405
      %v2999 = vmul.f32 %v2967, 4.2426405
      %v3000 = vmul.f32 %v2968, 4.2426405
      %v3001 = vmul.f32 %v2969, 4.2426405
      %v3002 = vmul.f32 %v2970, 4.2426405
      %v3003 = vmul.f32 %v2971, 4.2426405
      %v3004 = vld [vmem:[%s2] sm:$0x1]
      %v3006 = vlaneseq
      %v3007 = vshrl.u32 %v3006, 7
      %v3008 = vsub.s32 0, %v3007
      %v3009 = vrot.slane %v3004, %v3008
      %v3011 = vadd.f32 %v2972, %v3009
      %v3012 = vadd.f32 %v2973, %v3009
      %v3013 = vadd.f32 %v2974, %v3009
      %v3014 = vadd.f32 %v2975, %v3009
      %v3015 = vadd.f32 %v2976, %v3009
      %v3016 = vadd.f32 %v2977, %v3009
      %v3017 = vadd.f32 %v2978, %v3009
      %v3018 = vadd.f32 %v2979, %v3009
      %v3019 = vadd.f32 %v2980, %v3009
      %v3020 = vadd.f32 %v2981, %v3009
      %v3021 = vadd.f32 %v2982, %v3009
      %v3022 = vadd.f32 %v2983, %v3009
      %v3023 = vadd.f32 %v2984, %v3009
      %v3024 = vadd.f32 %v2985, %v3009
      %v3025 = vadd.f32 %v2986, %v3009
      %v3026 = vadd.f32 %v2987, %v3009
      %v3027 = vadd.f32 %v2988, %v3009
      %v3028 = vadd.f32 %v2989, %v3009
      %v3029 = vadd.f32 %v2990, %v3009
      %v3030 = vadd.f32 %v2991, %v3009
      %v3031 = vadd.f32 %v2992, %v3009
      %v3032 = vadd.f32 %v2993, %v3009
      %v3033 = vadd.f32 %v2994, %v3009
      %v3034 = vadd.f32 %v2995, %v3009
      %v3035 = vadd.f32 %v2996, %v3009
      %v3036 = vadd.f32 %v2997, %v3009
      %v3037 = vadd.f32 %v2998, %v3009
      %v3038 = vadd.f32 %v2999, %v3009
      %v3039 = vadd.f32 %v3000, %v3009
      %v3040 = vadd.f32 %v3001, %v3009
      %v3041 = vadd.f32 %v3002, %v3009
      %v3042 = vadd.f32 %v3003, %v3009
      %3043 = vst.msk [vmem:[%s170] sm:$0xff] %vm357, %v3011
      %3044 = vst.msk [vmem:[%s170 + $0x8] sm:$0xff] %vm357, %v3012
      %3045 = vst.msk [vmem:[%s170 + $0x10] sm:$0xff] %vm357, %v3013
      %3046 = vst.msk [vmem:[%s170 + $0x18] sm:$0xff] %vm357, %v3014
      %3047 = vst.msk [vmem:[%s170 + $0x20] sm:$0xff] %vm357, %v3015
      %3048 = vst.msk [vmem:[%s170 + $0x28] sm:$0xff] %vm357, %v3016
      %3049 = vst.msk [vmem:[%s170 + $0x30] sm:$0xff] %vm357, %v3017
      %3050 = vst.msk [vmem:[%s170 + $0x38] sm:$0xff] %vm357, %v3018
      %3051 = vst.msk [vmem:[%s170 + $0x40] sm:$0xff] %vm357, %v3019
      %3052 = vst.msk [vmem:[%s170 + $0x48] sm:$0xff] %vm357, %v3020
      %3053 = vst.msk [vmem:[%s170 + $0x50] sm:$0xff] %vm357, %v3021
      %3054 = vst.msk [vmem:[%s170 + $0x58] sm:$0xff] %vm357, %v3022
      %3055 = vst.msk [vmem:[%s170 + $0x60] sm:$0xff] %vm357, %v3023
      %3056 = vst.msk [vmem:[%s170 + $0x68] sm:$0xff] %vm357, %v3024
      %3057 = vst.msk [vmem:[%s170 + $0x70] sm:$0xff] %vm357, %v3025
      %3058 = vst.msk [vmem:[%s170 + $0x78] sm:$0xff] %vm357, %v3026
      %3059 = vst.msk [vmem:[%s170 + $0x80] sm:$0xff] %vm357, %v3027
      %3060 = vst.msk [vmem:[%s170 + $0x88] sm:$0xff] %vm357, %v3028
      %3061 = vst.msk [vmem:[%s170 + $0x90] sm:$0xff] %vm357, %v3029
      %3062 = vst.msk [vmem:[%s170 + $0x98] sm:$0xff] %vm357, %v3030
      %3063 = vst.msk [vmem:[%s170 + $0xa0] sm:$0xff] %vm357, %v3031
      %3064 = vst.msk [vmem:[%s170 + $0xa8] sm:$0xff] %vm357, %v3032
      %3065 = vst.msk [vmem:[%s170 + $0xb0] sm:$0xff] %vm357, %v3033
      %3066 = vst.msk [vmem:[%s170 + $0xb8] sm:$0xff] %vm357, %v3034
      %3067 = vst.msk [vmem:[%s170 + $0xc0] sm:$0xff] %vm357, %v3035
      %3068 = vst.msk [vmem:[%s170 + $0xc8] sm:$0xff] %vm357, %v3036
      %3069 = vst.msk [vmem:[%s170 + $0xd0] sm:$0xff] %vm357, %v3037
      %3070 = vst.msk [vmem:[%s170 + $0xd8] sm:$0xff] %vm357, %v3038
      %3071 = vst.msk [vmem:[%s170 + $0xe0] sm:$0xff] %vm357, %v3039
      %3072 = vst.msk [vmem:[%s170 + $0xe8] sm:$0xff] %vm357, %v3040
      %3073 = vst.msk [vmem:[%s170 + $0xf0] sm:$0xff] %vm357, %v3041
      %3074 = vst.msk [vmem:[%s170 + $0xf8] sm:$0xff] %vm357, %v3042
      %p3075 = scmp.lt.s32.totalorder %s14, 1
      %s3076 = scalar_select %p3075, %s14, 1
      %s3077 = smul.addr %s3076, 32
      %s3078 = smul.addr %s3077, 8
      %s3079 = scalar_lea.vmem %s3, %s3078
      // Predicated region
      $region33: #{tpu_custom_call.1} parent=31 // pred_check
        %p3080 = pneg %p100
      $region34: #{tpu_custom_call.1} parent=31 // pred_check_branch
        %3082 = sbr.rel (%p3080) target = $region36
      $region35: #{tpu_custom_call.1} parent=31 // pred_region
        _
      $region36: #{tpu_custom_call.1} parent=31 // pred_fallthru
        _
    $region32: #{tpu_custom_call.1} parent=5 // pred_fallthru
      _
    %p3083 = scmp.le.s32.totalorder 2, %s9
    // Predicated region
    $region37: #{tpu_custom_call.1} parent=5 // pred_check
      %p3084 = pneg %p3083
    $region38: #{tpu_custom_call.1} parent=5 // pred_check_branch
      %3086 = sbr.rel (%p3084) target = $region40
    $region39: #{tpu_custom_call.1} parent=5 // pred_region
      %s3087 = ssub.s32 %s9, 2
      // Predicated region
      $region41: #{tpu_custom_call.1} parent=39 // pred_check
        %p3088 = pneg %p106
      $region42: #{tpu_custom_call.1} parent=39 // pred_check_branch
        %3090 = sbr.rel (%p3088) target = $region44
      $region43: #{tpu_custom_call.1} parent=39 // pred_region
        %p3091 = scmp.lt.s32.totalorder %s15, 1
        %s3092 = scalar_select %p3091, %s15, 1
        %s3093 = smul.addr %s3092, 32
        %s3094 = smul.addr %s3093, 8
        %s3095 = scalar_lea.vmem %s3, %s3094
      $region44: #{tpu_custom_call.1} parent=39 // pred_fallthru
        _
    $region40: #{tpu_custom_call.1} parent=5 // pred_fallthru
      _
  $region6: #{tpu_custom_call.1} parent=0 // loop_footer
    %s13 = sadd.s32 1, %s9
  $region7: #{tpu_custom_call.1} parent=0 // loop_footer_branch
    %8 = sbr.rel target = $region3
  $region8: #{tpu_custom_call.1} parent=0 // loop_exit
    _

</llo_original>
